<compile_context>
chip_gen: v7x
topology: tpu7x:2x2x1
jax: 0.10.0
libtpu: 0.0.40
codegen_flags: <defaults>
</compile_context>

<pallas_src>
import functools

import numpy as np
import jax
import jax.numpy as jnp
from jax import lax
from jax.experimental import pallas as pl
from jax.experimental.pallas import tpu as pltpu

_LN_EPS = 1e-5
_SQRT_HALF = 0.7071067811865476


# ----------------------------------------------------------------------------
# In-kernel helpers (only exp / mul / add / where / rsqrt — all lower cleanly).
# ----------------------------------------------------------------------------
def _erf_approx(x):
    # Abramowitz & Stegun 7.1.26, max abs err ~1.5e-7 (float32-level accuracy);
    # matches torch.nn.GELU's exact-erf formulation to well below test tol.
    a1, a2, a3, a4, a5 = (0.254829592, -0.284496736, 1.421413741,
                          -1.453152027, 1.061405429)
    p = 0.3275911
    ax = jnp.abs(x)
    t = 1.0 / (1.0 + p * ax)
    poly = ((((a5 * t + a4) * t + a3) * t + a2) * t + a1) * t
    y = 1.0 - poly * jnp.exp(-ax * ax)
    return jnp.where(x < 0, -y, y)


def _gelu(x):
    return 0.5 * x * (1.0 + _erf_approx(x * _SQRT_HALF))


def _layer_norm(x, g, b, ln_over_all):
    # x: (GB, M, C); g, b: (M, C) when ln_over_all else (1, C)
    if ln_over_all:
        # normalize over the flattened (M*C) group (inner_norm semantics);
        # mean-of-means is exact since every row has the same count C.
        mu = jnp.mean(jnp.mean(x, axis=2, keepdims=True), axis=1, keepdims=True)
        sq = jnp.square(x - mu)
        var = jnp.mean(jnp.mean(sq, axis=2, keepdims=True), axis=1, keepdims=True)
    else:
        mu = jnp.mean(x, axis=-1, keepdims=True)
        var = jnp.mean(jnp.square(x - mu), axis=-1, keepdims=True)
    xn = (x - mu) * lax.rsqrt(var + _LN_EPS)
    return xn * g[None] + b[None]


# ----------------------------------------------------------------------------
# Fused kernel 1: out = x + Proj( MHSA( LayerNorm(x) ) )
# ----------------------------------------------------------------------------
def attn_residual_kernel(x_ref, lng_ref, lnb_ref, wq_ref, wkv_ref, wp_ref,
                         bp_ref, rel_ref, o_ref, *, num_heads, scale,
                         ln_over_all):
    x = x_ref[...]                                   # (GB, M, C)
    GB, M, C = x.shape
    d = C // num_heads

    xn = _layer_norm(x, lng_ref[...], lnb_ref[...], ln_over_all)
    x2 = xn.reshape(GB * M, C)

    q = jnp.dot(x2, wq_ref[...], preferred_element_type=jnp.float32)
    kv = jnp.dot(x2, wkv_ref[...], preferred_element_type=jnp.float32)
    q = q.reshape(GB, M, C)
    k = kv[:, :C].reshape(GB, M, C)
    v = kv[:, C:].reshape(GB, M, C)

    heads = []
    for h in range(num_heads):                       # static small loop
        sl = slice(h * d, (h + 1) * d)
        logits = jnp.einsum("gmd,gnd->gmn", q[..., sl], k[..., sl],
                            preferred_element_type=jnp.float32) * scale
        logits = logits + rel_ref[h][None]           # broadcast over groups
        logits = logits - jnp.max(logits, axis=-1, keepdims=True)
        p = jnp.exp(logits)
        p = p / jnp.sum(p, axis=-1, keepdims=True)
        heads.append(jnp.einsum("gmn,gnd->gmd", p, v[..., sl],
                                preferred_element_type=jnp.float32))
    ctx = jnp.concatenate(heads, axis=-1).reshape(GB * M, C)

    out = jnp.dot(ctx, wp_ref[...], preferred_element_type=jnp.float32)
    out = out + bp_ref[0]
    o_ref[...] = x + out.reshape(GB, M, C)


# ----------------------------------------------------------------------------
# Fused kernel 2: out = x + fc2( GELU( fc1( LayerNorm(x) ) ) )
# ----------------------------------------------------------------------------
def mlp_residual_kernel(x_ref, lng_ref, lnb_ref, w1_ref, b1_ref, w2_ref,
                        b2_ref, o_ref, *, ln_over_all):
    x = x_ref[...]                                   # (GB, M, C)
    GB, M, C = x.shape
    xn = _layer_norm(x, lng_ref[...], lnb_ref[...], ln_over_all)
    h = jnp.dot(xn.reshape(GB * M, C), w1_ref[...],
                preferred_element_type=jnp.float32) + b1_ref[0]
    h = _gelu(h)
    y = jnp.dot(h, w2_ref[...], preferred_element_type=jnp.float32) + b2_ref[0]
    o_ref[...] = x + y.reshape(GB, M, C)


# ----------------------------------------------------------------------------
# pallas_call wrappers
# ----------------------------------------------------------------------------
def _group_block(G, max_gb=8):
    gb = min(G, max_gb)
    while G % gb:
        gb -= 1
    return gb


def _rep2(shape):
    return pl.BlockSpec(shape, lambda g: (0, 0))


def _rep3(shape):
    return pl.BlockSpec(shape, lambda g: (0, 0, 0))


def attention_residual(x, ln_g, ln_b, wq, wkv, wp, bp, rel, *, num_heads,
                       ln_over_all):
    G, M, C = x.shape
    GB = _group_block(G)
    scale = float(C // num_heads) ** -0.5
    Mg = ln_g.shape[0]
    H = num_heads

    kern = functools.partial(attn_residual_kernel, num_heads=num_heads,
                             scale=scale, ln_over_all=ln_over_all)
    return pl.pallas_call(
        kern,
        out_shape=jax.ShapeDtypeStruct((G, M, C), jnp.float32),
        grid=(G // GB,),
        in_specs=[
            pl.BlockSpec((GB, M, C), lambda g: (g, 0, 0)),
            _rep2((Mg, C)), _rep2((Mg, C)),
            _rep2((C, C)), _rep2((C, 2 * C)),
            _rep2((C, C)), _rep2((1, C)),
            _rep3((H, M, M)),
        ],
        out_specs=pl.BlockSpec((GB, M, C), lambda g: (g, 0, 0)),
        compiler_params=pltpu.CompilerParams(
            dimension_semantics=("parallel",)),
    )(x, ln_g, ln_b, wq, wkv, wp, bp.reshape(1, C), rel)


def mlp_residual(x, ln_g, ln_b, w1, b1, w2, b2, *, ln_over_all):
    G, M, C = x.shape
    GB = _group_block(G)
    Mg = ln_g.shape[0]
    Hd = w1.shape[1]

    kern = functools.partial(mlp_residual_kernel, ln_over_all=ln_over_all)
    return pl.pallas_call(
        kern,
        out_shape=jax.ShapeDtypeStruct((G, M, C), jnp.float32),
        grid=(G // GB,),
        in_specs=[
            pl.BlockSpec((GB, M, C), lambda g: (g, 0, 0)),
            _rep2((Mg, C)), _rep2((Mg, C)),
            _rep2((C, Hd)), _rep2((1, Hd)),
            _rep2((Hd, C)), _rep2((1, C)),
        ],
        out_specs=pl.BlockSpec((GB, M, C), lambda g: (g, 0, 0)),
        compiler_params=pltpu.CompilerParams(
            dimension_semantics=("parallel",)),
    )(x, ln_g, ln_b, w1, b1.reshape(1, Hd), w2, b2.reshape(1, C))


# ----------------------------------------------------------------------------
# Block.forward (inner branch + outer branch, se=0, sr_ratio=1)
# ----------------------------------------------------------------------------
def block_forward(x, outer_tokens, H_out, W_out, H_in, W_in, relative_pos,
                  params, cfg):
    B, N, C_out = outer_tokens.shape
    M = H_in * W_in
    x = x.astype(jnp.float32)
    outer_tokens = outer_tokens.astype(jnp.float32)

    if cfg["inner_dim"] > 0:
        Ci = cfg["inner_dim"]
        zero_rel = jnp.zeros((cfg["inner_head"], M, M), jnp.float32)
        x = attention_residual(
            x,
            params["inner_norm1_g"].reshape(M, Ci),
            params["inner_norm1_b"].reshape(M, Ci),
            params["inner_q_w"], params["inner_kv_w"],
            params["inner_proj_w"], params["inner_proj_b"],
            zero_rel, num_heads=cfg["inner_head"], ln_over_all=True)
        x = mlp_residual(
            x,
            params["inner_norm2_g"].reshape(M, Ci),
            params["inner_norm2_b"].reshape(M, Ci),
            params["inner_fc1_w"], params["inner_fc1_b"],
            params["inner_fc2_w"], params["inner_fc2_b"],
            ln_over_all=True)

    if relative_pos is None:
        rel = jnp.zeros((cfg["outer_head"], N, N), jnp.float32)
    else:
        rel = jnp.broadcast_to(relative_pos, (1, cfg["outer_head"], N, N))
        rel = rel.reshape(cfg["outer_head"], N, N).astype(jnp.float32)

    outer_tokens = attention_residual(
        outer_tokens,
        params["outer_norm1_g"].reshape(1, C_out),
        params["outer_norm1_b"].reshape(1, C_out),
        params["outer_q_w"], params["outer_kv_w"],
        params["outer_proj_w"], params["outer_proj_b"],
        rel, num_heads=cfg["outer_head"], ln_over_all=False)
    outer_tokens = mlp_residual(
        outer_tokens,
        params["outer_norm2_g"].reshape(1, C_out),
        params["outer_norm2_b"].reshape(1, C_out),
        params["outer_fc1_w"], params["outer_fc1_b"],
        params["outer_fc2_w"], params["outer_fc2_b"],
        ln_over_all=False)

    return x, outer_tokens


# ----------------------------------------------------------------------------
# Pure-JAX reference (mirrors the PyTorch forward) for a correctness check.
# ----------------------------------------------------------------------------
def _ref_layernorm(v, g, b):
    mu = jnp.mean(v, axis=-1, keepdims=True)
    var = jnp.mean(jnp.square(v - mu), axis=-1, keepdims=True)
    return (v - mu) / jnp.sqrt(var + _LN_EPS) * g + b


def _ref_attention(v, wq, wkv, wp, bp, heads, rel=None):
    Bv, Nv, Cv = v.shape
    d = Cv // heads
    scale = float(d) ** -0.5
    q = (v @ wq).reshape(Bv, Nv, heads, d).transpose(0, 2, 1, 3)
    kv = v @ wkv
    k = kv[..., :Cv].reshape(Bv, Nv, heads, d).transpose(0, 2, 1, 3)
    vv = kv[..., Cv:].reshape(Bv, Nv, heads, d).transpose(0, 2, 1, 3)
    attn = (q @ jnp.swapaxes(k, -2, -1)) * scale
    if rel is not None:
        attn = attn + rel
    attn = jax.nn.softmax(attn, axis=-1)
    out = (attn @ vv).transpose(0, 2, 1, 3).reshape(Bv, Nv, Cv)
    return out @ wp + bp


def _ref_mlp(v, w1, b1, w2, b2):
    h = v @ w1 + b1
    h = 0.5 * h * (1.0 + jax.scipy.special.erf(h * _SQRT_HALF))  # exact GELU
    return h @ w2 + b2


def block_reference(x, outer_tokens, H_out, W_out, H_in, W_in, relative_pos,
                    params, cfg):
    B, N, C = outer_tokens.shape
    M = H_in * W_in
    if cfg["inner_dim"] > 0:
        Ci = cfg["inner_dim"]
        xi = _ref_layernorm(x.reshape(B, N, M * Ci),
                            params["inner_norm1_g"],
                            params["inner_norm1_b"]).reshape(B * N, M, Ci)
        x = x + _ref_attention(xi, params["inner_q_w"], params["inner_kv_w"],
                               params["inner_proj_w"], params["inner_proj_b"],
                               cfg["inner_head"])
        xi = _ref_layernorm(x.reshape(B, N, M * Ci),
                            params["inner_norm2_g"],
                            params["inner_norm2_b"]).reshape(B * N, M, Ci)
        x = x + _ref_mlp(xi, params["inner_fc1_w"], params["inner_fc1_b"],
                         params["inner_fc2_w"], params["inner_fc2_b"])
    o = _ref_layernorm(outer_tokens, params["outer_norm1_g"],
                       params["outer_norm1_b"])
    outer_tokens = outer_tokens + _ref_attention(
        o, params["outer_q_w"], params["outer_kv_w"],
        params["outer_proj_w"], params["outer_proj_b"],
        cfg["outer_head"], rel=relative_pos)
    o = _ref_layernorm(outer_tokens, params["outer_norm2_g"],
                       params["outer_norm2_b"])
    outer_tokens = outer_tokens + _ref_mlp(
        o, params["outer_fc1_w"], params["outer_fc1_b"],
        params["outer_fc2_w"], params["outer_fc2_b"])
    return x, outer_tokens


if __name__ == "__main__":
    key = jax.random.PRNGKey(0)
    keys = iter(jax.random.split(key, 40))

    B = 2
    H_out = W_out = 4          # N = 16 outer tokens
    H_in = W_in = 2            # num_words = 4 inner words
    N, M = H_out * W_out, H_in * W_in
    outer_dim, inner_dim = 32, 16
    outer_head, inner_head = 4, 2
    mlp_ratio = 4

    cfg = dict(inner_dim=inner_dim, outer_dim=outer_dim,
               inner_head=inner_head, outer_head=outer_head)

    def rnd(shape, scale=0.1):
        return scale * jax.random.normal(next(keys), shape, jnp.float32)

    x = jax.random.normal(next(keys), (B * N, M, inner_dim), jnp.float32)
    outer_tokens = jax.random.normal(next(keys), (B, N, outer_dim), jnp.float32)
    relative_pos = rnd((1, outer_head, N, N), 0.5)

    Ci, Co = inner_dim, outer_dim
    Hi, Ho = int(Ci * mlp_ratio), int(Co * mlp_ratio)

    params = {
        "inner_norm1_g": 1.0 + rnd((M * Ci,)), "inner_norm1_b": rnd((M * Ci,)),
        "inner_q_w": rnd((Ci, Ci)), "inner_kv_w": rnd((Ci, 2 * Ci)),
        "inner_proj_w": rnd((Ci, Ci)), "inner_proj_b": rnd((Ci,)),
        "inner_norm2_g": 1.0 + rnd((M * Ci,)), "inner_norm2_b": rnd((M * Ci,)),
        "inner_fc1_w": rnd((Ci, Hi)), "inner_fc1_b": rnd((Hi,)),
        "inner_fc2_w": rnd((Hi, Ci)), "inner_fc2_b": rnd((Ci,)),
        "outer_norm1_g": 1.0 + rnd((Co,)), "outer_norm1_b": rnd((Co,)),
        "outer_q_w": rnd((Co, Co)), "outer_kv_w": rnd((Co, 2 * Co)),
        "outer_proj_w": rnd((Co, Co)), "outer_proj_b": rnd((Co,)),
        "outer_norm2_g": 1.0 + rnd((Co,)), "outer_norm2_b": rnd((Co,)),
        "outer_fc1_w": rnd((Co, Ho)), "outer_fc1_b": rnd((Ho,)),
        "outer_fc2_w": rnd((Ho, Co)), "outer_fc2_b": rnd((Co,)),
    }

    out_x, out_tokens = block_forward(x, outer_tokens, H_out, W_out,
                                      H_in, W_in, relative_pos, params, cfg)
    out_x = jax.block_until_ready(out_x)
    out_tokens = jax.block_until_ready(out_tokens)

    ref_x, ref_tokens = block_reference(x, outer_tokens, H_out, W_out,
                                        H_in, W_in, relative_pos, params, cfg)
    ref_x = jax.block_until_ready(ref_x)
    ref_tokens = jax.block_until_ready(ref_tokens)

    assert out_x.shape == (B * N, M, inner_dim), out_x.shape
    assert out_tokens.shape == (B, N, outer_dim), out_tokens.shape
    np.testing.assert_allclose(np.asarray(out_x), np.asarray(ref_x),
                               rtol=2e-4, atol=2e-4)
    np.testing.assert_allclose(np.asarray(out_tokens), np.asarray(ref_tokens),
                               rtol=2e-4, atol=2e-4)
    print("KERNEL_OK")
</pallas_src>

<mosaic_0001>
module attributes {stable_mosaic.version = 11 : i64} {
  func.func @attn_residual_kernel(%arg0: i32, %arg1: memref<8x4x16xf32, #tpu.memory_space<vmem>>, %arg2: memref<4x16xf32, #tpu.memory_space<vmem>>, %arg3: memref<4x16xf32, #tpu.memory_space<vmem>>, %arg4: memref<16x16xf32, #tpu.memory_space<vmem>>, %arg5: memref<16x32xf32, #tpu.memory_space<vmem>>, %arg6: memref<16x16xf32, #tpu.memory_space<vmem>>, %arg7: memref<1x16xf32, #tpu.memory_space<vmem>>, %arg8: memref<2x4x4xf32, #tpu.memory_space<vmem>>, %arg9: memref<8x4x16xf32, #tpu.memory_space<vmem>>) attributes {dimension_semantics = [#tpu.dimension_semantics<parallel>], iteration_bounds = array<i64: 4>, scalar_prefetch = 0 : i64, scratch_operands = 0 : i64, tpu.core_type = #tpu.core_type<tc>, window_params = [{transform_indices = @transform_0, window_bounds = array<i64: 8, 4, 16>}, {pipeline_mode = #tpu.pipeline_mode<synchronous>, transform_indices = @transform_1, window_bounds = array<i64: 4, 16>}, {pipeline_mode = #tpu.pipeline_mode<synchronous>, transform_indices = @transform_2, window_bounds = array<i64: 4, 16>}, {pipeline_mode = #tpu.pipeline_mode<synchronous>, transform_indices = @transform_3, window_bounds = array<i64: 16, 16>}, {pipeline_mode = #tpu.pipeline_mode<synchronous>, transform_indices = @transform_4, window_bounds = array<i64: 16, 32>}, {pipeline_mode = #tpu.pipeline_mode<synchronous>, transform_indices = @transform_5, window_bounds = array<i64: 16, 16>}, {pipeline_mode = #tpu.pipeline_mode<synchronous>, transform_indices = @transform_6, window_bounds = array<i64: 1, 16>}, {pipeline_mode = #tpu.pipeline_mode<synchronous>, transform_indices = @transform_7, window_bounds = array<i64: 2, 4, 4>}, {transform_indices = @transform_8, window_bounds = array<i64: 8, 4, 16>}]} {
    %c0 = arith.constant 0 : index
    %c0_0 = arith.constant 0 : index
    %c0_1 = arith.constant 0 : index
    %0 = vector.load %arg1[%c0, %c0_0, %c0_1] : memref<8x4x16xf32, #tpu.memory_space<vmem>>, vector<8x4x16xf32>
    %c0_2 = arith.constant 0 : index
    %c0_3 = arith.constant 0 : index
    %1 = vector.load %arg2[%c0_2, %c0_3] : memref<4x16xf32, #tpu.memory_space<vmem>>, vector<4x16xf32>
    %c0_4 = arith.constant 0 : index
    %c0_5 = arith.constant 0 : index
    %2 = vector.load %arg3[%c0_4, %c0_5] : memref<4x16xf32, #tpu.memory_space<vmem>>, vector<4x16xf32>
    %cst = arith.constant dense<0.000000e+00> : vector<8x4xf32>
    %3 = vector.multi_reduction <add>, %0, %cst [2] : vector<8x4x16xf32> to vector<8x4xf32>
    %4 = vector.shape_cast %3 : vector<8x4xf32> to vector<8x4x1xf32>
    %cst_6 = arith.constant 1.600000e+01 : f32
    %5 = vector.broadcast %cst_6 : f32 to vector<8x4x1xf32>
    %6 = arith.divf %4, %5 : vector<8x4x1xf32>
    %cst_7 = arith.constant dense<0.000000e+00> : vector<8x1xf32>
    %7 = vector.multi_reduction <add>, %6, %cst_7 [1] : vector<8x4x1xf32> to vector<8x1xf32>
    %8 = vector.shape_cast %7 : vector<8x1xf32> to vector<8x1x1xf32>
    %cst_8 = arith.constant 4.000000e+00 : f32
    %9 = vector.broadcast %cst_8 : f32 to vector<8x1x1xf32>
    %10 = arith.divf %8, %9 : vector<8x1x1xf32>
    %11 = vector.broadcast %10 : vector<8x1x1xf32> to vector<8x4x16xf32>
    %12 = arith.subf %0, %11 : vector<8x4x16xf32>
    %13 = arith.mulf %12, %12 : vector<8x4x16xf32>
    %cst_9 = arith.constant dense<0.000000e+00> : vector<8x4xf32>
    %14 = vector.multi_reduction <add>, %13, %cst_9 [2] : vector<8x4x16xf32> to vector<8x4xf32>
    %15 = vector.shape_cast %14 : vector<8x4xf32> to vector<8x4x1xf32>
    %cst_10 = arith.constant 1.600000e+01 : f32
    %16 = vector.broadcast %cst_10 : f32 to vector<8x4x1xf32>
    %17 = arith.divf %15, %16 : vector<8x4x1xf32>
    %cst_11 = arith.constant dense<0.000000e+00> : vector<8x1xf32>
    %18 = vector.multi_reduction <add>, %17, %cst_11 [1] : vector<8x4x1xf32> to vector<8x1xf32>
    %19 = vector.shape_cast %18 : vector<8x1xf32> to vector<8x1x1xf32>
    %cst_12 = arith.constant 4.000000e+00 : f32
    %20 = vector.broadcast %cst_12 : f32 to vector<8x1x1xf32>
    %21 = arith.divf %19, %20 : vector<8x1x1xf32>
    %22 = vector.broadcast %10 : vector<8x1x1xf32> to vector<8x4x16xf32>
    %23 = arith.subf %0, %22 : vector<8x4x16xf32>
    %cst_13 = arith.constant 9.99999974E-6 : f32
    %24 = vector.broadcast %cst_13 : f32 to vector<8x1x1xf32>
    %25 = arith.addf %21, %24 : vector<8x1x1xf32>
    %26 = math.rsqrt %25 : vector<8x1x1xf32>
    %27 = vector.broadcast %26 : vector<8x1x1xf32> to vector<8x4x16xf32>
    %28 = arith.mulf %23, %27 : vector<8x4x16xf32>
    %29 = vector.shape_cast %1 : vector<4x16xf32> to vector<1x4x16xf32>
    %30 = vector.broadcast %29 : vector<1x4x16xf32> to vector<8x4x16xf32>
    %31 = arith.mulf %28, %30 : vector<8x4x16xf32>
    %32 = vector.shape_cast %2 : vector<4x16xf32> to vector<1x4x16xf32>
    %33 = vector.broadcast %32 : vector<1x4x16xf32> to vector<8x4x16xf32>
    %34 = arith.addf %31, %33 : vector<8x4x16xf32>
    %35 = vector.shape_cast %34 : vector<8x4x16xf32> to vector<32x16xf32>
    %c0_14 = arith.constant 0 : index
    %c0_15 = arith.constant 0 : index
    %36 = vector.load %arg4[%c0_14, %c0_15] : memref<16x16xf32, #tpu.memory_space<vmem>>, vector<16x16xf32>
    %cst_16 = arith.constant dense<0.000000e+00> : vector<32x16xf32>
    %37 = tpu.matmul %35, %36, %cst_16 {dimension_numbers = #tpu.dot_dimension_numbers<[1], [0], [0], [1], [0, 0, 1, 1], [], []>} : vector<32x16xf32>, vector<16x16xf32>, vector<32x16xf32> -> vector<32x16xf32>
    %c0_17 = arith.constant 0 : index
    %c0_18 = arith.constant 0 : index
    %38 = vector.load %arg5[%c0_17, %c0_18] : memref<16x32xf32, #tpu.memory_space<vmem>>, vector<16x32xf32>
    %cst_19 = arith.constant dense<0.000000e+00> : vector<32x32xf32>
    %39 = tpu.matmul %35, %38, %cst_19 {dimension_numbers = #tpu.dot_dimension_numbers<[1], [0], [0], [1], [0, 0, 1, 1], [], []>} : vector<32x16xf32>, vector<16x32xf32>, vector<32x32xf32> -> vector<32x32xf32>
    %40 = vector.shape_cast %37 : vector<32x16xf32> to vector<8x4x16xf32>
    %41 = vector.extract_strided_slice %39 {offsets = [0, 0], sizes = [32, 16], strides = [1, 1]} : vector<32x32xf32> to vector<32x16xf32>
    %42 = vector.shape_cast %41 : vector<32x16xf32> to vector<8x4x16xf32>
    %43 = vector.extract_strided_slice %39 {offsets = [0, 16], sizes = [32, 16], strides = [1, 1]} : vector<32x32xf32> to vector<32x16xf32>
    %44 = vector.shape_cast %43 : vector<32x16xf32> to vector<8x4x16xf32>
    %45 = vector.extract_strided_slice %40 {offsets = [0, 0, 0], sizes = [8, 4, 8], strides = [1, 1, 1]} : vector<8x4x16xf32> to vector<8x4x8xf32>
    %46 = vector.extract_strided_slice %42 {offsets = [0, 0, 0], sizes = [8, 4, 8], strides = [1, 1, 1]} : vector<8x4x16xf32> to vector<8x4x8xf32>
    "tpu.trace_start"() <{level = 10 : i32, message = "gmd,gnd->gmn"}> : () -> ()
    %cst_20 = arith.constant dense<0.000000e+00> : vector<8x4x4xf32>
    %47 = tpu.matmul %45, %46, %cst_20 {dimension_numbers = #tpu.dot_dimension_numbers<[2], [2], [1], [1], [0, 0, 0, 1, 1, 1], [0], [0]>} : vector<8x4x8xf32>, vector<8x4x8xf32>, vector<8x4x4xf32> -> vector<8x4x4xf32>
    "tpu.trace_stop"() : () -> ()
    %cst_21 = arith.constant 0.353553385 : f32
    %48 = vector.broadcast %cst_21 : f32 to vector<8x4x4xf32>
    %49 = arith.mulf %47, %48 : vector<8x4x4xf32>
    %c0_22 = arith.constant 0 : index
    %c0_23 = arith.constant 0 : index
    %c0_24 = arith.constant 0 : index
    %50 = vector.load %arg8[%c0_22, %c0_23, %c0_24] : memref<2x4x4xf32, #tpu.memory_space<vmem>>, vector<1x4x4xf32>
    %51 = vector.shape_cast %50 : vector<1x4x4xf32> to vector<4x4xf32>
    %52 = vector.shape_cast %51 : vector<4x4xf32> to vector<1x4x4xf32>
    %53 = vector.broadcast %52 : vector<1x4x4xf32> to vector<8x4x4xf32>
    %54 = arith.addf %49, %53 : vector<8x4x4xf32>
    %cst_25 = arith.constant dense<0xFF800000> : vector<8x4xf32>
    %55 = vector.multi_reduction <maximumf>, %54, %cst_25 [2] : vector<8x4x4xf32> to vector<8x4xf32>
    %56 = vector.shape_cast %55 : vector<8x4xf32> to vector<8x4x1xf32>
    %57 = vector.broadcast %56 : vector<8x4x1xf32> to vector<8x4x4xf32>
    %58 = arith.subf %54, %57 : vector<8x4x4xf32>
    %59 = math.exp %58 : vector<8x4x4xf32>
    %cst_26 = arith.constant dense<0.000000e+00> : vector<8x4xf32>
    %60 = vector.multi_reduction <add>, %59, %cst_26 [2] : vector<8x4x4xf32> to vector<8x4xf32>
    %61 = vector.shape_cast %60 : vector<8x4xf32> to vector<8x4x1xf32>
    %62 = vector.broadcast %61 : vector<8x4x1xf32> to vector<8x4x4xf32>
    %63 = arith.divf %59, %62 : vector<8x4x4xf32>
    %64 = vector.extract_strided_slice %44 {offsets = [0, 0, 0], sizes = [8, 4, 8], strides = [1, 1, 1]} : vector<8x4x16xf32> to vector<8x4x8xf32>
    "tpu.trace_start"() <{level = 10 : i32, message = "gmn,gnd->gmd"}> : () -> ()
    %cst_27 = arith.constant dense<0.000000e+00> : vector<8x4x8xf32>
    %65 = tpu.matmul %63, %64, %cst_27 {dimension_numbers = #tpu.dot_dimension_numbers<[2], [1], [1], [2], [0, 0, 0, 1, 1, 2], [0], [0]>} : vector<8x4x4xf32>, vector<8x4x8xf32>, vector<8x4x8xf32> -> vector<8x4x8xf32>
    "tpu.trace_stop"() : () -> ()
    %66 = vector.extract_strided_slice %40 {offsets = [0, 0, 8], sizes = [8, 4, 8], strides = [1, 1, 1]} : vector<8x4x16xf32> to vector<8x4x8xf32>
    %67 = vector.extract_strided_slice %42 {offsets = [0, 0, 8], sizes = [8, 4, 8], strides = [1, 1, 1]} : vector<8x4x16xf32> to vector<8x4x8xf32>
    "tpu.trace_start"() <{level = 10 : i32, message = "gmd,gnd->gmn"}> : () -> ()
    %cst_28 = arith.constant dense<0.000000e+00> : vector<8x4x4xf32>
    %68 = tpu.matmul %66, %67, %cst_28 {dimension_numbers = #tpu.dot_dimension_numbers<[2], [2], [1], [1], [0, 0, 0, 1, 1, 1], [0], [0]>} : vector<8x4x8xf32>, vector<8x4x8xf32>, vector<8x4x4xf32> -> vector<8x4x4xf32>
    "tpu.trace_stop"() : () -> ()
    %cst_29 = arith.constant 0.353553385 : f32
    %69 = vector.broadcast %cst_29 : f32 to vector<8x4x4xf32>
    %70 = arith.mulf %68, %69 : vector<8x4x4xf32>
    %c1 = arith.constant 1 : index
    %c0_30 = arith.constant 0 : index
    %c0_31 = arith.constant 0 : index
    %71 = vector.load %arg8[%c1, %c0_30, %c0_31] : memref<2x4x4xf32, #tpu.memory_space<vmem>>, vector<1x4x4xf32>
    %72 = vector.shape_cast %71 : vector<1x4x4xf32> to vector<4x4xf32>
    %73 = vector.shape_cast %72 : vector<4x4xf32> to vector<1x4x4xf32>
    %74 = vector.broadcast %73 : vector<1x4x4xf32> to vector<8x4x4xf32>
    %75 = arith.addf %70, %74 : vector<8x4x4xf32>
    %cst_32 = arith.constant dense<0xFF800000> : vector<8x4xf32>
    %76 = vector.multi_reduction <maximumf>, %75, %cst_32 [2] : vector<8x4x4xf32> to vector<8x4xf32>
    %77 = vector.shape_cast %76 : vector<8x4xf32> to vector<8x4x1xf32>
    %78 = vector.broadcast %77 : vector<8x4x1xf32> to vector<8x4x4xf32>
    %79 = arith.subf %75, %78 : vector<8x4x4xf32>
    %80 = math.exp %79 : vector<8x4x4xf32>
    %cst_33 = arith.constant dense<0.000000e+00> : vector<8x4xf32>
    %81 = vector.multi_reduction <add>, %80, %cst_33 [2] : vector<8x4x4xf32> to vector<8x4xf32>
    %82 = vector.shape_cast %81 : vector<8x4xf32> to vector<8x4x1xf32>
    %83 = vector.broadcast %82 : vector<8x4x1xf32> to vector<8x4x4xf32>
    %84 = arith.divf %80, %83 : vector<8x4x4xf32>
    %85 = vector.extract_strided_slice %44 {offsets = [0, 0, 8], sizes = [8, 4, 8], strides = [1, 1, 1]} : vector<8x4x16xf32> to vector<8x4x8xf32>
    "tpu.trace_start"() <{level = 10 : i32, message = "gmn,gnd->gmd"}> : () -> ()
    %cst_34 = arith.constant dense<0.000000e+00> : vector<8x4x8xf32>
    %86 = tpu.matmul %84, %85, %cst_34 {dimension_numbers = #tpu.dot_dimension_numbers<[2], [1], [1], [2], [0, 0, 0, 1, 1, 2], [0], [0]>} : vector<8x4x4xf32>, vector<8x4x8xf32>, vector<8x4x8xf32> -> vector<8x4x8xf32>
    "tpu.trace_stop"() : () -> ()
    %87 = tpu.concatenate %65, %86 in 2 : vector<8x4x8xf32>, vector<8x4x8xf32> -> vector<8x4x16xf32>
    %88 = vector.shape_cast %87 : vector<8x4x16xf32> to vector<32x16xf32>
    %c0_35 = arith.constant 0 : index
    %c0_36 = arith.constant 0 : index
    %89 = vector.load %arg6[%c0_35, %c0_36] : memref<16x16xf32, #tpu.memory_space<vmem>>, vector<16x16xf32>
    %cst_37 = arith.constant dense<0.000000e+00> : vector<32x16xf32>
    %90 = tpu.matmul %88, %89, %cst_37 {dimension_numbers = #tpu.dot_dimension_numbers<[1], [0], [0], [1], [0, 0, 1, 1], [], []>} : vector<32x16xf32>, vector<16x16xf32>, vector<32x16xf32> -> vector<32x16xf32>
    %c0_38 = arith.constant 0 : index
    %c0_39 = arith.constant 0 : index
    %91 = vector.load %arg7[%c0_38, %c0_39] : memref<1x16xf32, #tpu.memory_space<vmem>>, vector<1x16xf32>
    %92 = vector.shape_cast %91 : vector<1x16xf32> to vector<16xf32>
    %93 = vector.shape_cast %92 : vector<16xf32> to vector<1x16xf32>
    %94 = vector.broadcast %93 : vector<1x16xf32> to vector<32x16xf32>
    %95 = arith.addf %90, %94 : vector<32x16xf32>
    %96 = vector.shape_cast %95 : vector<32x16xf32> to vector<8x4x16xf32>
    %97 = arith.addf %0, %96 : vector<8x4x16xf32>
    %c0_40 = arith.constant 0 : index
    %c0_41 = arith.constant 0 : index
    %c0_42 = arith.constant 0 : index
    %98 = vector.load %arg9[%c0_40, %c0_41, %c0_42] : memref<8x4x16xf32, #tpu.memory_space<vmem>>, vector<8x4x16xf32>
    tpu.vector_store %arg9[%c0_40, %c0_41, %c0_42], %97 {strides = array<i32>} : memref<8x4x16xf32, #tpu.memory_space<vmem>>, vector<8x4x16xf32>,
    return
  }
  func.func @transform_0(%arg0: i32) -> (i32, i32, i32) {
    %c0_i32 = arith.constant 0 : i32
    %c0_i32_0 = arith.constant 0 : i32
    %c0_i32_1 = arith.constant 0 : i32
    return %arg0, %c0_i32, %c0_i32_0 : i32, i32, i32
  }
  func.func @transform_1(%arg0: i32) -> (i32, i32) {
    %c0_i32 = arith.constant 0 : i32
    %c0_i32_0 = arith.constant 0 : i32
    %c0_i32_1 = arith.constant 0 : i32
    return %c0_i32, %c0_i32_0 : i32, i32
  }
  func.func @transform_2(%arg0: i32) -> (i32, i32) {
    %c0_i32 = arith.constant 0 : i32
    %c0_i32_0 = arith.constant 0 : i32
    %c0_i32_1 = arith.constant 0 : i32
    return %c0_i32, %c0_i32_0 : i32, i32
  }
  func.func @transform_3(%arg0: i32) -> (i32, i32) {
    %c0_i32 = arith.constant 0 : i32
    %c0_i32_0 = arith.constant 0 : i32
    %c0_i32_1 = arith.constant 0 : i32
    return %c0_i32, %c0_i32_0 : i32, i32
  }
  func.func @transform_4(%arg0: i32) -> (i32, i32) {
    %c0_i32 = arith.constant 0 : i32
    %c0_i32_0 = arith.constant 0 : i32
    %c0_i32_1 = arith.constant 0 : i32
    return %c0_i32, %c0_i32_0 : i32, i32
  }
  func.func @transform_5(%arg0: i32) -> (i32, i32) {
    %c0_i32 = arith.constant 0 : i32
    %c0_i32_0 = arith.constant 0 : i32
    %c0_i32_1 = arith.constant 0 : i32
    return %c0_i32, %c0_i32_0 : i32, i32
  }
  func.func @transform_6(%arg0: i32) -> (i32, i32) {
    %c0_i32 = arith.constant 0 : i32
    %c0_i32_0 = arith.constant 0 : i32
    %c0_i32_1 = arith.constant 0 : i32
    return %c0_i32, %c0_i32_0 : i32, i32
  }
  func.func @transform_7(%arg0: i32) -> (i32, i32, i32) {
    %c0_i32 = arith.constant 0 : i32
    %c0_i32_0 = arith.constant 0 : i32
    %c0_i32_1 = arith.constant 0 : i32
    %c0_i32_2 = arith.constant 0 : i32
    return %c0_i32, %c0_i32_0, %c0_i32_1 : i32, i32, i32
  }
  func.func @transform_8(%arg0: i32) -> (i32, i32, i32) {
    %c0_i32 = arith.constant 0 : i32
    %c0_i32_0 = arith.constant 0 : i32
    %c0_i32_1 = arith.constant 0 : i32
    return %arg0, %c0_i32, %c0_i32_0 : i32, i32, i32
  }
}

</mosaic_0001>

<llo_original>
// kernel: tpu_custom_call.1
$region0: #{tpu_custom_call.1}
  #allocation0 [shape = 'u32[]', space=smem, size = 0x4, offset = 0x4, fixed_abs, tag = 'smem constant byte address 0x4 - core index']
  #allocation1 [shape = 'u32[144,128]{1,0:T(1,128)}', space=vmem, size = 0x12000, scoped, tag = 'internal scratch']
  %s0 = inlined_call_operand.vmem [shape: f32[32,4,16], index: 0, kind: input, shape index: {}]
  %s1 = inlined_call_operand.vmem [shape: f32[4,16], index: 1, kind: input, shape index: {}]
  %s2 = inlined_call_operand.vmem [shape: f32[4,16], index: 2, kind: input, shape index: {}]
  %s3 = inlined_call_operand.vmem [shape: f32[16,16], index: 3, kind: input, shape index: {}]
  %s4 = inlined_call_operand.vmem [shape: f32[16,32], index: 4, kind: input, shape index: {}]
  %s5 = inlined_call_operand.vmem [shape: f32[16,16], index: 5, kind: input, shape index: {}]
  %s6 = inlined_call_operand.vmem [shape: f32[1,16], index: 6, kind: input, shape index: {}]
  %s7 = inlined_call_operand.vmem [shape: f32[2,4,4], index: 7, kind: input, shape index: {}]
  %s8 = inlined_call_operand.vmem [shape: f32[32,4,16], index: 8, kind: output, shape index: {}]
  %s9 = sld [smem:[#allocation0]]
  $region65: #{tpu_custom_call.1} parent=0
    _
  %s11 = ssub.s32 1, %s9
  %s12 = scalar_select 0, %s11, %s9
  loop: start=0, step=1, limit=6
  $region2: #{tpu_custom_call.1} parent=0 // loop_pre_header
    _
  $region3: #{tpu_custom_call.1} parent=0 // loop_header
    %s14 = sphi 0, %s18
    %p15 = scmp.ge.s32.totalorder %s14, 6
    %s24 = sphi 0, %s26
    %s27 = sphi 0, %s24
    %s28 = sphi 0, %s27
    %s44 = sphi 0, %s28
    %s48 = sphi 0, %s48
    %s50 = sphi 0, %s48
    %s51 = sphi 0, %s50
    %s65 = sphi 0, %s51
    %s69 = sphi 0, %s69
    %s71 = sphi 0, %s69
    %s72 = sphi 0, %s71
    %s86 = sphi 0, %s72
    %s90 = sphi 0, %s90
    %s92 = sphi 0, %s90
    %s93 = sphi 0, %s92
    %s107 = sphi 0, %s93
    %s111 = sphi 0, %s111
    %s113 = sphi 0, %s111
    %s114 = sphi 0, %s113
    %s128 = sphi 0, %s114
    %s132 = sphi 0, %s132
    %s134 = sphi 0, %s132
    %s135 = sphi 0, %s134
    %s149 = sphi 0, %s135
    %s153 = sphi 0, %s153
    %s155 = sphi 0, %s153
    %s156 = sphi 0, %s155
    %s170 = sphi 0, %s156
    %s174 = sphi 0, %s174
    %s176 = sphi 0, %s174
    %s177 = sphi 0, %s176
    %s191 = sphi 0, %s177
    %s197 = sphi 0, %s199
    %s200 = sphi 0, %s197
    %s201 = sphi 0, %s200
    %s217 = sphi 0, %s201
  $region4: #{tpu_custom_call.1} parent=0 // loop_header_branch
    %17 = sbr.rel (%p15) target = $region8
  $region5: #{tpu_custom_call.1} parent=0 // loop_body
    %s19 = ssub.s32 %s14, 1
    %s20 = ssub.s32 %s14, 2
    %s21 = sadd.s32 %s14, 1
    %s22 = ssub.s32 %s14, %s21
    %p23 = scmp.eq.s32.totalorder %s22, 0
    %s25 = sadd.s32 %s24, 1
    %s26 = scalar_select %p23, %s24, %s25
    %p29 = pneg %p23
    %p30 = scmp.eq.s32.totalorder %s14, 3
    %p31 = por %p29, %p30
    %p32 = scmp.ne.s32.totalorder %s24, %s27
    %p33 = scmp.eq.s32.totalorder %s14, 0
    %p34 = por %p32, %p33
    %p35 = scmp.ne.s32.totalorder %s24, %s27
    %p36 = scmp.eq.s32.totalorder %s19, 3
    %p37 = por %p35, %p36
    %p38 = scmp.ne.s32.totalorder %s27, %s28
    %p39 = scmp.eq.s32.totalorder %s19, 0
    %p40 = por %p38, %p39
    %p41 = scmp.ne.s32.totalorder %s27, %s28
    %p42 = scmp.eq.s32.totalorder %s20, 3
    %p43 = por %p41, %p42
    %p45 = scmp.ne.s32.totalorder %s28, %s44
    %p46 = scmp.eq.s32.totalorder %s20, 0
    %p47 = por %p45, %p46
    %s49 = sadd.s32 %s48, 1
    %p52 = scmp.eq.s32.totalorder %s14, 3
    %p53 = scmp.ne.s32.totalorder %s48, %s50
    %p54 = scmp.eq.s32.totalorder %s14, 0
    %p55 = por %p53, %p54
    %p56 = scmp.ne.s32.totalorder %s48, %s50
    %p57 = scmp.eq.s32.totalorder %s19, 3
    %p58 = por %p56, %p57
    %p59 = scmp.ne.s32.totalorder %s50, %s51
    %p60 = scmp.eq.s32.totalorder %s19, 0
    %p61 = por %p59, %p60
    %p62 = scmp.ne.s32.totalorder %s50, %s51
    %p63 = scmp.eq.s32.totalorder %s20, 3
    %p64 = por %p62, %p63
    %p66 = scmp.ne.s32.totalorder %s51, %s65
    %p67 = scmp.eq.s32.totalorder %s20, 0
    %p68 = por %p66, %p67
    %s70 = sadd.s32 %s69, 1
    %p73 = scmp.eq.s32.totalorder %s14, 3
    %p74 = scmp.ne.s32.totalorder %s69, %s71
    %p75 = scmp.eq.s32.totalorder %s14, 0
    %p76 = por %p74, %p75
    %p77 = scmp.ne.s32.totalorder %s69, %s71
    %p78 = scmp.eq.s32.totalorder %s19, 3
    %p79 = por %p77, %p78
    %p80 = scmp.ne.s32.totalorder %s71, %s72
    %p81 = scmp.eq.s32.totalorder %s19, 0
    %p82 = por %p80, %p81
    %p83 = scmp.ne.s32.totalorder %s71, %s72
    %p84 = scmp.eq.s32.totalorder %s20, 3
    %p85 = por %p83, %p84
    %p87 = scmp.ne.s32.totalorder %s72, %s86
    %p88 = scmp.eq.s32.totalorder %s20, 0
    %p89 = por %p87, %p88
    %s91 = sadd.s32 %s90, 1
    %p94 = scmp.eq.s32.totalorder %s14, 3
    %p95 = scmp.ne.s32.totalorder %s90, %s92
    %p96 = scmp.eq.s32.totalorder %s14, 0
    %p97 = por %p95, %p96
    %p98 = scmp.ne.s32.totalorder %s90, %s92
    %p99 = scmp.eq.s32.totalorder %s19, 3
    %p100 = por %p98, %p99
    %p101 = scmp.ne.s32.totalorder %s92, %s93
    %p102 = scmp.eq.s32.totalorder %s19, 0
    %p103 = por %p101, %p102
    %p104 = scmp.ne.s32.totalorder %s92, %s93
    %p105 = scmp.eq.s32.totalorder %s20, 3
    %p106 = por %p104, %p105
    %p108 = scmp.ne.s32.totalorder %s93, %s107
    %p109 = scmp.eq.s32.totalorder %s20, 0
    %p110 = por %p108, %p109
    %s112 = sadd.s32 %s111, 1
    %p115 = scmp.eq.s32.totalorder %s14, 3
    %p116 = scmp.ne.s32.totalorder %s111, %s113
    %p117 = scmp.eq.s32.totalorder %s14, 0
    %p118 = por %p116, %p117
    %p119 = scmp.ne.s32.totalorder %s111, %s113
    %p120 = scmp.eq.s32.totalorder %s19, 3
    %p121 = por %p119, %p120
    %p122 = scmp.ne.s32.totalorder %s113, %s114
    %p123 = scmp.eq.s32.totalorder %s19, 0
    %p124 = por %p122, %p123
    %p125 = scmp.ne.s32.totalorder %s113, %s114
    %p126 = scmp.eq.s32.totalorder %s20, 3
    %p127 = por %p125, %p126
    %p129 = scmp.ne.s32.totalorder %s114, %s128
    %p130 = scmp.eq.s32.totalorder %s20, 0
    %p131 = por %p129, %p130
    %s133 = sadd.s32 %s132, 1
    %p136 = scmp.eq.s32.totalorder %s14, 3
    %p137 = scmp.ne.s32.totalorder %s132, %s134
    %p138 = scmp.eq.s32.totalorder %s14, 0
    %p139 = por %p137, %p138
    %p140 = scmp.ne.s32.totalorder %s132, %s134
    %p141 = scmp.eq.s32.totalorder %s19, 3
    %p142 = por %p140, %p141
    %p143 = scmp.ne.s32.totalorder %s134, %s135
    %p144 = scmp.eq.s32.totalorder %s19, 0
    %p145 = por %p143, %p144
    %p146 = scmp.ne.s32.totalorder %s134, %s135
    %p147 = scmp.eq.s32.totalorder %s20, 3
    %p148 = por %p146, %p147
    %p150 = scmp.ne.s32.totalorder %s135, %s149
    %p151 = scmp.eq.s32.totalorder %s20, 0
    %p152 = por %p150, %p151
    %s154 = sadd.s32 %s153, 1
    %p157 = scmp.eq.s32.totalorder %s14, 3
    %p158 = scmp.ne.s32.totalorder %s153, %s155
    %p159 = scmp.eq.s32.totalorder %s14, 0
    %p160 = por %p158, %p159
    %p161 = scmp.ne.s32.totalorder %s153, %s155
    %p162 = scmp.eq.s32.totalorder %s19, 3
    %p163 = por %p161, %p162
    %p164 = scmp.ne.s32.totalorder %s155, %s156
    %p165 = scmp.eq.s32.totalorder %s19, 0
    %p166 = por %p164, %p165
    %p167 = scmp.ne.s32.totalorder %s155, %s156
    %p168 = scmp.eq.s32.totalorder %s20, 3
    %p169 = por %p167, %p168
    %p171 = scmp.ne.s32.totalorder %s156, %s170
    %p172 = scmp.eq.s32.totalorder %s20, 0
    %p173 = por %p171, %p172
    %s175 = sadd.s32 %s174, 1
    %p178 = scmp.eq.s32.totalorder %s14, 3
    %p179 = scmp.ne.s32.totalorder %s174, %s176
    %p180 = scmp.eq.s32.totalorder %s14, 0
    %p181 = por %p179, %p180
    %p182 = scmp.ne.s32.totalorder %s174, %s176
    %p183 = scmp.eq.s32.totalorder %s19, 3
    %p184 = por %p182, %p183
    %p185 = scmp.ne.s32.totalorder %s176, %s177
    %p186 = scmp.eq.s32.totalorder %s19, 0
    %p187 = por %p185, %p186
    %p188 = scmp.ne.s32.totalorder %s176, %s177
    %p189 = scmp.eq.s32.totalorder %s20, 3
    %p190 = por %p188, %p189
    %p192 = scmp.ne.s32.totalorder %s177, %s191
    %p193 = scmp.eq.s32.totalorder %s20, 0
    %p194 = por %p192, %p193
    %s195 = ssub.s32 %s14, %s21
    %p196 = scmp.eq.s32.totalorder %s195, 0
    %s198 = sadd.s32 %s197, 1
    %s199 = scalar_select %p196, %s197, %s198
    %p202 = pneg %p196
    %p203 = scmp.eq.s32.totalorder %s14, 3
    %p204 = por %p202, %p203
    %p205 = scmp.ne.s32.totalorder %s197, %s200
    %p206 = scmp.eq.s32.totalorder %s14, 0
    %p207 = por %p205, %p206
    %p208 = scmp.ne.s32.totalorder %s197, %s200
    %p209 = scmp.eq.s32.totalorder %s19, 3
    %p210 = por %p208, %p209
    %p211 = scmp.ne.s32.totalorder %s200, %s201
    %p212 = scmp.eq.s32.totalorder %s19, 0
    %p213 = por %p211, %p212
    %p214 = scmp.ne.s32.totalorder %s200, %s201
    %p215 = scmp.eq.s32.totalorder %s20, 3
    %p216 = por %p214, %p215
    %p218 = scmp.ne.s32.totalorder %s201, %s217
    %p219 = scmp.eq.s32.totalorder %s20, 0
    %p220 = por %p218, %p219
    %p221 = scmp.le.s32.totalorder 1, %s14
    %p222 = scmp.lt.s32.totalorder %s14, 5
    %p223 = pnand %p221, %p222
    %p224 = pneg %p223
    // Predicated region
    $region9: #{tpu_custom_call.1} parent=5 // pred_check
      _
    $region10: #{tpu_custom_call.1} parent=5 // pred_check_branch
      %226 = sbr.rel (%p223) target = $region12
    $region11: #{tpu_custom_call.1} parent=5 // pred_region
      %s227 = ssub.s32 %s14, 1
      // Predicated region
      $region13: #{tpu_custom_call.1} parent=11 // pred_check
        %p228 = pneg %p61
      $region14: #{tpu_custom_call.1} parent=11 // pred_check_branch
        %230 = sbr.rel (%p228) target = $region16
      $region15: #{tpu_custom_call.1} parent=11 // pred_region
        _
      $region16: #{tpu_custom_call.1} parent=11 // pred_fallthru
        _
      // Predicated region
      $region17: #{tpu_custom_call.1} parent=11 // pred_check
        %p231 = pneg %p82
      $region18: #{tpu_custom_call.1} parent=11 // pred_check_branch
        %233 = sbr.rel (%p231) target = $region20
      $region19: #{tpu_custom_call.1} parent=11 // pred_region
        _
      $region20: #{tpu_custom_call.1} parent=11 // pred_fallthru
        _
      // Predicated region
      $region21: #{tpu_custom_call.1} parent=11 // pred_check
        %p234 = pneg %p103
      $region22: #{tpu_custom_call.1} parent=11 // pred_check_branch
        %236 = sbr.rel (%p234) target = $region24
      $region23: #{tpu_custom_call.1} parent=11 // pred_region
        _
      $region24: #{tpu_custom_call.1} parent=11 // pred_fallthru
        _
      // Predicated region
      $region25: #{tpu_custom_call.1} parent=11 // pred_check
        %p237 = pneg %p124
      $region26: #{tpu_custom_call.1} parent=11 // pred_check_branch
        %239 = sbr.rel (%p237) target = $region28
      $region27: #{tpu_custom_call.1} parent=11 // pred_region
        _
      $region28: #{tpu_custom_call.1} parent=11 // pred_fallthru
        _
      // Predicated region
      $region29: #{tpu_custom_call.1} parent=11 // pred_check
        %p240 = pneg %p145
      $region30: #{tpu_custom_call.1} parent=11 // pred_check_branch
        %242 = sbr.rel (%p240) target = $region32
      $region31: #{tpu_custom_call.1} parent=11 // pred_region
        _
      $region32: #{tpu_custom_call.1} parent=11 // pred_fallthru
        _
      // Predicated region
      $region33: #{tpu_custom_call.1} parent=11 // pred_check
        %p243 = pneg %p166
      $region34: #{tpu_custom_call.1} parent=11 // pred_check_branch
        %245 = sbr.rel (%p243) target = $region36
      $region35: #{tpu_custom_call.1} parent=11 // pred_region
        _
      $region36: #{tpu_custom_call.1} parent=11 // pred_fallthru
        _
      // Predicated region
      $region37: #{tpu_custom_call.1} parent=11 // pred_check
        %p246 = pneg %p187
      $region38: #{tpu_custom_call.1} parent=11 // pred_check_branch
        %248 = sbr.rel (%p246) target = $region40
      $region39: #{tpu_custom_call.1} parent=11 // pred_region
        _
      $region40: #{tpu_custom_call.1} parent=11 // pred_fallthru
        _
    $region12: #{tpu_custom_call.1} parent=5 // pred_fallthru
      _
    %p249 = scmp.lt.s32.totalorder %s14, 4
    // Predicated region
    $region41: #{tpu_custom_call.1} parent=5 // pred_check
      %p250 = pneg %p249
    $region42: #{tpu_custom_call.1} parent=5 // pred_check_branch
      %252 = sbr.rel (%p250) target = $region44
    $region43: #{tpu_custom_call.1} parent=5 // pred_region
      // Predicated region
      $region45: #{tpu_custom_call.1} parent=43 // pred_check
        %p253 = pneg %p34
      $region46: #{tpu_custom_call.1} parent=43 // pred_check_branch
        %255 = sbr.rel (%p253) target = $region48
      $region47: #{tpu_custom_call.1} parent=43 // pred_region
        %s256 = smul.u32 8, %s14
        %p257 = scmp.lt.s32.totalorder %s256, 31
        %s258 = scalar_select %p257, %s256, 31
        %s259 = smul.addr %s258, 4
        %s260 = scalar_lea.vmem %s0, %s259
        %s261 = smul.u32 8, %s14
      $region48: #{tpu_custom_call.1} parent=43 // pred_fallthru
        _
    $region44: #{tpu_custom_call.1} parent=5 // pred_fallthru
      _
    %p262 = scmp.le.s32.totalorder 1, %s14
    %p263 = scmp.lt.s32.totalorder %s14, 5
    %p264 = pnand %p262, %p263
    %p265 = pneg %p264
    // Predicated region
    $region49: #{tpu_custom_call.1} parent=5 // pred_check
      _
    $region50: #{tpu_custom_call.1} parent=5 // pred_check_branch
      %267 = sbr.rel (%p264) target = $region52
    $region51: #{tpu_custom_call.1} parent=5 // pred_region
      %s268 = ssub.s32 %s14, 1
      %s269 = smul.u32 8, %s19
      %p270 = scmp.lt.s32.totalorder %s269, 31
      %s271 = scalar_select %p270, %s269, 31
      %s272 = smul.addr %s271, 4
      %s273 = scalar_lea.vmem %s0, %s272
      %p274 = pneg %p40
      %p275 = pneg %p37
      %p276 = pneg %p61
      %p277 = pneg %p58
      %p278 = pneg %p82
      %p279 = pneg %p79
      %p280 = pneg %p103
      %p281 = pneg %p100
      %p282 = pneg %p124
      %p283 = pneg %p121
      %p284 = pneg %p145
      %p285 = pneg %p142
      %p286 = pneg %p166
      %p287 = pneg %p163
      %p288 = pneg %p187
      %p289 = pneg %p184
      %p290 = pneg %p213
      %p291 = pneg %p210
      %s292 = smul.u32 8, %s19
      %p293 = scmp.lt.s32.totalorder %s292, 31
      %s294 = scalar_select %p293, %s292, 31
      %s295 = smul.addr %s294, 4
      %s296 = scalar_lea.vmem %s8, %s295
      %s297 = smul.u32 8, %s19
      %p298 = scmp.lt.s32.totalorder %s297, 31
      %s299 = scalar_select %p298, %s297, 31
      %s300 = smul.addr %s299, 4
      %s301 = scalar_lea.vmem %s0, %s300
      %s302 = smul.u32 8, %s19
      %s303 = smul.u32 8, %s19
      %p304 = scmp.lt.s32.totalorder %s303, 31
      %s305 = scalar_select %p304, %s303, 31
      %s306 = smul.addr %s305, 4
      %s307 = scalar_lea.vmem %s8, %s306
      %s308 = smul.u32 8, %s19
      %v309 = vld [vmem:[%s301] sm:$0xf]
      %v310 = vld [vmem:[%s301 + $0x4] sm:$0xf]
      %v311 = vld [vmem:[%s301 + $0x8] sm:$0xf]
      %v312 = vld [vmem:[%s301 + $0xc] sm:$0xf]
      %v313 = vld [vmem:[%s301 + $0x10] sm:$0xf]
      %v314 = vld [vmem:[%s301 + $0x14] sm:$0xf]
      %v315 = vld [vmem:[%s301 + $0x18] sm:$0xf]
      %v316 = vld [vmem:[%s301 + $0x1c] sm:$0xf]
      %v317 = vld [vmem:[%s1] sm:$0xf]
      %v318 = vld [vmem:[%s2] sm:$0xf]
      %vm319 = vcmask 125952
      %v320 = vsel %vm319, %v309, 0.0
      %321 = vadd.xlane.f32.xlu0 %v320
      %v322 = vpop.xlane.xlu0 %321
      %v323 = vsel %vm319, %v310, 0.0
      %324 = vadd.xlane.f32.xlu0 %v323
      %v325 = vpop.xlane.xlu0 %324
      %v326 = vsel %vm319, %v311, 0.0
      %327 = vadd.xlane.f32.xlu0 %v326
      %v328 = vpop.xlane.xlu0 %327
      %v329 = vsel %vm319, %v312, 0.0
      %330 = vadd.xlane.f32.xlu0 %v329
      %v331 = vpop.xlane.xlu0 %330
      %v332 = vsel %vm319, %v313, 0.0
      %333 = vadd.xlane.f32.xlu0 %v332
      %v334 = vpop.xlane.xlu0 %333
      %v335 = vsel %vm319, %v314, 0.0
      %336 = vadd.xlane.f32.xlu0 %v335
      %v337 = vpop.xlane.xlu0 %336
      %v338 = vsel %vm319, %v315, 0.0
      %339 = vadd.xlane.f32.xlu0 %v338
      %v340 = vpop.xlane.xlu0 %339
      %v341 = vsel %vm319, %v316, 0.0
      %342 = vadd.xlane.f32.xlu0 %v341
      %v343 = vpop.xlane.xlu0 %342
      %v344 = vrcp.pop 16.0
      %v345 = vmul.f32 %v322, %v344
      %v346 = vmul.f32 %v325, %v344
      %v347 = vmul.f32 %v328, %v344
      %v348 = vmul.f32 %v331, %v344
      %v349 = vmul.f32 %v334, %v344
      %v350 = vmul.f32 %v337, %v344
      %v351 = vmul.f32 %v340, %v344
      %v352 = vmul.f32 %v343, %v344
      %vm353 = vcmask 1043456
      %v354 = vsel %vm353, %v345, 0.0
      %v355 = vrot.slane %v354, 4
      %v356 = vadd.f32 %v354, %v355
      %v357 = vrot.slane %v356, 2
      %v358 = vadd.f32 %v356, %v357
      %v359 = vrot.slane %v358, 1
      %v360 = vadd.f32 %v358, %v359
      %v361 = vsel %vm353, %v346, 0.0
      %v362 = vrot.slane %v361, 4
      %v363 = vadd.f32 %v361, %v362
      %v364 = vrot.slane %v363, 2
      %v365 = vadd.f32 %v363, %v364
      %v366 = vrot.slane %v365, 1
      %v367 = vadd.f32 %v365, %v366
      %v368 = vsel %vm353, %v347, 0.0
      %v369 = vrot.slane %v368, 4
      %v370 = vadd.f32 %v368, %v369
      %v371 = vrot.slane %v370, 2
      %v372 = vadd.f32 %v370, %v371
      %v373 = vrot.slane %v372, 1
      %v374 = vadd.f32 %v372, %v373
      %v375 = vsel %vm353, %v348, 0.0
      %v376 = vrot.slane %v375, 4
      %v377 = vadd.f32 %v375, %v376
      %v378 = vrot.slane %v377, 2
      %v379 = vadd.f32 %v377, %v378
      %v380 = vrot.slane %v379, 1
      %v381 = vadd.f32 %v379, %v380
      %v382 = vsel %vm353, %v349, 0.0
      %v383 = vrot.slane %v382, 4
      %v384 = vadd.f32 %v382, %v383
      %v385 = vrot.slane %v384, 2
      %v386 = vadd.f32 %v384, %v385
      %v387 = vrot.slane %v386, 1
      %v388 = vadd.f32 %v386, %v387
      %v389 = vsel %vm353, %v350, 0.0
      %v390 = vrot.slane %v389, 4
      %v391 = vadd.f32 %v389, %v390
      %v392 = vrot.slane %v391, 2
      %v393 = vadd.f32 %v391, %v392
      %v394 = vrot.slane %v393, 1
      %v395 = vadd.f32 %v393, %v394
      %v396 = vsel %vm353, %v351, 0.0
      %v397 = vrot.slane %v396, 4
      %v398 = vadd.f32 %v396, %v397
      %v399 = vrot.slane %v398, 2
      %v400 = vadd.f32 %v398, %v399
      %v401 = vrot.slane %v400, 1
      %v402 = vadd.f32 %v400, %v401
      %v403 = vsel %vm353, %v352, 0.0
      %v404 = vrot.slane %v403, 4
      %v405 = vadd.f32 %v403, %v404
      %v406 = vrot.slane %v405, 2
      %v407 = vadd.f32 %v405, %v406
      %v408 = vrot.slane %v407, 1
      %v409 = vadd.f32 %v407, %v408
      %v410 = vrcp.pop 4.0
      %v411 = vmul.f32 %v360, %v410
      %v412 = vmul.f32 %v367, %v410
      %v413 = vmul.f32 %v374, %v410
      %v414 = vmul.f32 %v381, %v410
      %v415 = vmul.f32 %v388, %v410
      %v416 = vmul.f32 %v395, %v410
      %v417 = vmul.f32 %v402, %v410
      %v418 = vmul.f32 %v409, %v410
      %v419 = vsub.f32 %v309, %v411
      %v420 = vsub.f32 %v310, %v412
      %v421 = vsub.f32 %v311, %v413
      %v422 = vsub.f32 %v312, %v414
      %v423 = vsub.f32 %v313, %v415
      %v424 = vsub.f32 %v314, %v416
      %v425 = vsub.f32 %v315, %v417
      %v426 = vsub.f32 %v316, %v418
      %v427 = vmul.f32 %v419, %v419
      %v428 = vmul.f32 %v420, %v420
      %v429 = vmul.f32 %v421, %v421
      %v430 = vmul.f32 %v422, %v422
      %v431 = vmul.f32 %v423, %v423
      %v432 = vmul.f32 %v424, %v424
      %v433 = vmul.f32 %v425, %v425
      %v434 = vmul.f32 %v426, %v426
      %v435 = vsel %vm319, %v427, 0.0
      %436 = vadd.xlane.f32.xlu0 %v435
      %v437 = vpop.xlane.xlu0 %436
      %v438 = vsel %vm319, %v428, 0.0
      %439 = vadd.xlane.f32.xlu0 %v438
      %v440 = vpop.xlane.xlu0 %439
      %v441 = vsel %vm319, %v429, 0.0
      %442 = vadd.xlane.f32.xlu0 %v441
      %v443 = vpop.xlane.xlu0 %442
      %v444 = vsel %vm319, %v430, 0.0
      %445 = vadd.xlane.f32.xlu0 %v444
      %v446 = vpop.xlane.xlu0 %445
      %v447 = vsel %vm319, %v431, 0.0
      %448 = vadd.xlane.f32.xlu0 %v447
      %v449 = vpop.xlane.xlu0 %448
      %v450 = vsel %vm319, %v432, 0.0
      %451 = vadd.xlane.f32.xlu0 %v450
      %v452 = vpop.xlane.xlu0 %451
      %v453 = vsel %vm319, %v433, 0.0
      %454 = vadd.xlane.f32.xlu0 %v453
      %v455 = vpop.xlane.xlu0 %454
      %v456 = vsel %vm319, %v434, 0.0
      %457 = vadd.xlane.f32.xlu0 %v456
      %v458 = vpop.xlane.xlu0 %457
      %v459 = vmul.f32 %v437, %v344
      %v460 = vmul.f32 %v440, %v344
      %v461 = vmul.f32 %v443, %v344
      %v462 = vmul.f32 %v446, %v344
      %v463 = vmul.f32 %v449, %v344
      %v464 = vmul.f32 %v452, %v344
      %v465 = vmul.f32 %v455, %v344
      %v466 = vmul.f32 %v458, %v344
      %v467 = vsel %vm353, %v459, 0.0
      %v468 = vrot.slane %v467, 4
      %v469 = vadd.f32 %v467, %v468
      %v470 = vrot.slane %v469, 2
      %v471 = vadd.f32 %v469, %v470
      %v472 = vrot.slane %v471, 1
      %v473 = vadd.f32 %v471, %v472
      %v474 = vsel %vm353, %v460, 0.0
      %v475 = vrot.slane %v474, 4
      %v476 = vadd.f32 %v474, %v475
      %v477 = vrot.slane %v476, 2
      %v478 = vadd.f32 %v476, %v477
      %v479 = vrot.slane %v478, 1
      %v480 = vadd.f32 %v478, %v479
      %v481 = vsel %vm353, %v461, 0.0
      %v482 = vrot.slane %v481, 4
      %v483 = vadd.f32 %v481, %v482
      %v484 = vrot.slane %v483, 2
      %v485 = vadd.f32 %v483, %v484
      %v486 = vrot.slane %v485, 1
      %v487 = vadd.f32 %v485, %v486
      %v488 = vsel %vm353, %v462, 0.0
      %v489 = vrot.slane %v488, 4
      %v490 = vadd.f32 %v488, %v489
      %v491 = vrot.slane %v490, 2
      %v492 = vadd.f32 %v490, %v491
      %v493 = vrot.slane %v492, 1
      %v494 = vadd.f32 %v492, %v493
      %v495 = vsel %vm353, %v463, 0.0
      %v496 = vrot.slane %v495, 4
      %v497 = vadd.f32 %v495, %v496
      %v498 = vrot.slane %v497, 2
      %v499 = vadd.f32 %v497, %v498
      %v500 = vrot.slane %v499, 1
      %v501 = vadd.f32 %v499, %v500
      %v502 = vsel %vm353, %v464, 0.0
      %v503 = vrot.slane %v502, 4
      %v504 = vadd.f32 %v502, %v503
      %v505 = vrot.slane %v504, 2
      %v506 = vadd.f32 %v504, %v505
      %v507 = vrot.slane %v506, 1
      %v508 = vadd.f32 %v506, %v507
      %v509 = vsel %vm353, %v465, 0.0
      %v510 = vrot.slane %v509, 4
      %v511 = vadd.f32 %v509, %v510
      %v512 = vrot.slane %v511, 2
      %v513 = vadd.f32 %v511, %v512
      %v514 = vrot.slane %v513, 1
      %v515 = vadd.f32 %v513, %v514
      %v516 = vsel %vm353, %v466, 0.0
      %v517 = vrot.slane %v516, 4
      %v518 = vadd.f32 %v516, %v517
      %v519 = vrot.slane %v518, 2
      %v520 = vadd.f32 %v518, %v519
      %v521 = vrot.slane %v520, 1
      %v522 = vadd.f32 %v520, %v521
      %v523 = vmul.f32 %v473, %v410
      %v524 = vmul.f32 %v480, %v410
      %v525 = vmul.f32 %v487, %v410
      %v526 = vmul.f32 %v494, %v410
      %v527 = vmul.f32 %v501, %v410
      %v528 = vmul.f32 %v508, %v410
      %v529 = vmul.f32 %v515, %v410
      %v530 = vmul.f32 %v522, %v410
      %v531 = vadd.f32 %v523, 1e-05
      %v532 = vadd.f32 %v524, 1e-05
      %v533 = vadd.f32 %v525, 1e-05
      %v534 = vadd.f32 %v526, 1e-05
      %v535 = vadd.f32 %v527, 1e-05
      %v536 = vadd.f32 %v528, 1e-05
      %v537 = vadd.f32 %v529, 1e-05
      %v538 = vadd.f32 %v530, 1e-05
      %v539 = vrsqrt.pop %v531
      %v540 = vrsqrt.pop %v532
      %v541 = vrsqrt.pop %v533
      %v542 = vrsqrt.pop %v534
      %v543 = vrsqrt.pop %v535
      %v544 = vrsqrt.pop %v536
      %v545 = vrsqrt.pop %v537
      %v546 = vrsqrt.pop %v538
      %v547 = vmul.f32 %v419, %v539
      %v548 = vmul.f32 %v420, %v540
      %v549 = vmul.f32 %v421, %v541
      %v550 = vmul.f32 %v422, %v542
      %v551 = vmul.f32 %v423, %v543
      %v552 = vmul.f32 %v424, %v544
      %v553 = vmul.f32 %v425, %v545
      %v554 = vmul.f32 %v426, %v546
      %v555 = vmul.f32 %v547, %v317
      %v556 = vmul.f32 %v548, %v317
      %v557 = vmul.f32 %v549, %v317
      %v558 = vmul.f32 %v550, %v317
      %v559 = vmul.f32 %v551, %v317
      %v560 = vmul.f32 %v552, %v317
      %v561 = vmul.f32 %v553, %v317
      %v562 = vmul.f32 %v554, %v317
      %v563 = vadd.f32 %v555, %v318
      %v564 = vadd.f32 %v556, %v318
      %v565 = vadd.f32 %v557, %v318
      %v566 = vadd.f32 %v558, %v318
      %v567 = vadd.f32 %v559, %v318
      %v568 = vadd.f32 %v560, %v318
      %v569 = vadd.f32 %v561, %v318
      %v570 = vadd.f32 %v562, %v318
      %v571 = vld [vmem:[%s3] sm:$0xff]
      %v572 = vld [vmem:[%s3 + $0x8] sm:$0xff]
      %v581 = vcombine.low %v563, %v564
      %v582 = vcombine.low %v565, %v566
      %v583 = vcombine.low %v567, %v568
      %v584 = vcombine.low %v569, %v570
      %vm585 = vcmask 130048
      %v586 = vsel %vm585, %v581, 0
      %v588 = vsel %vm585, %v582, 0
      %v590 = vsel %vm585, %v583, 0
      %v592 = vsel %vm585, %v584, 0
      %594 = vmatprep.subr.mxu0 0.0
      %595 = vmatpush1.msra.mxu0 %v571
      %596 = vmatprep.subr.mxu0 0.0
      %597 = vmatpush1.msra.mxu0 %v572
      %598 = vmatprep.subr.mxu0 0.0
      %599 = vmatpush1.msra.mxu0 0.0
      %600 = vmatprep.subr.mxu0 0.0
      %601 = vmatpush1.msra.mxu0 0.0
      %602 = vmatprep.subr.mxu0 0.0
      %603 = vmatpush1.msra.mxu0 0.0
      %604 = vmatprep.subr.mxu0 0.0
      %605 = vmatpush1.msra.mxu0 0.0
      %606 = vmatprep.subr.mxu0 0.0
      %607 = vmatpush1.msra.mxu0 0.0
      %608 = vmatprep.subr.mxu0 0.0
      %609 = vmatpush1.msra.mxu0 0.0
      %610 = vmatprep.subr.mxu0 0.0
      %611 = vmatpush1.msra.mxu0 0.0
      %612 = vmatprep.subr.mxu0 0.0
      %613 = vmatpush1.msra.mxu0 0.0
      %614 = vmatprep.subr.mxu0 0.0
      %615 = vmatpush1.msra.mxu0 0.0
      %616 = vmatprep.subr.mxu0 0.0
      %617 = vmatpush1.msra.mxu0 0.0
      %618 = vmatprep.subr.mxu0 0.0
      %619 = vmatpush1.msra.mxu0 0.0
      %620 = vmatprep.subr.mxu0 0.0
      %621 = vmatpush1.msra.mxu0 0.0
      %622 = vmatprep.subr.mxu0 0.0
      %623 = vmatpush1.msra.mxu0 0.0
      %624 = vmatprep.subr.mxu0 0.0
      %625 = vmatpush1.msra.mxu0 0.0
      %626 = vmatprep.subr.mxu0 0.0
      %627 = vmatpush1.msra.mxu0 0.0
      %628 = vmatprep.subr.mxu0 0.0
      %629 = vmatpush1.msra.mxu0 0.0
      %630 = vmatprep.subr.mxu0 0.0
      %631 = vmatpush1.msra.mxu0 0.0
      %632 = vmatprep.subr.mxu0 0.0
      %633 = vmatpush1.msra.mxu0 0.0
      %634 = vmatprep.subr.mxu0 0.0
      %635 = vmatpush1.msra.mxu0 0.0
      %636 = vmatprep.subr.mxu0 0.0
      %637 = vmatpush1.msra.mxu0 0.0
      %638 = vmatprep.subr.mxu0 0.0
      %639 = vmatpush1.msra.mxu0 0.0
      %640 = vmatprep.subr.mxu0 0.0
      %641 = vmatpush1.msra.mxu0 0.0
      %642 = vmatprep.subr.mxu0 0.0
      %643 = vmatpush1.msra.mxu0 0.0
      %644 = vmatprep.subr.mxu0 0.0
      %645 = vmatpush1.msra.mxu0 0.0
      %646 = vmatprep.subr.mxu0 0.0
      %647 = vmatpush1.msra.mxu0 0.0
      %648 = vmatprep.subr.mxu0 0.0
      %649 = vmatpush1.msra.mxu0 0.0
      %650 = vmatprep.subr.mxu0 0.0
      %651 = vmatpush1.msra.mxu0 0.0
      %652 = vmatprep.subr.mxu0 0.0
      %653 = vmatpush1.msra.mxu0 0.0
      %654 = vmatprep.subr.mxu0 0.0
      %655 = vmatpush1.msra.mxu0 0.0
      %656 = vmatprep.subr.mxu0 0.0
      %657 = vmatpush1.msra.mxu0 0.0
      %658 = vmatprep.mubr.f32.mxu0 0.0
      %659 = vmatmul.mubr.f32.gmra.mrb[0].mxu0 %v586
      %v660 = vpop.f32.mrb[0].mxu0
      %v661 = vadd.f32 0.0, %v660
      %v662 = vpop.f32.mrb[0].mxu0
      %663 = vmatprep.mubr.f32.mxu0 0.0
      %664 = vmatmul.mubr.f32.gmra.mrb[0].mxu0 %v588
      %v665 = vpop.f32.mrb[0].mxu0
      %v666 = vadd.f32 0.0, %v665
      %v667 = vpop.f32.mrb[0].mxu0
      %668 = vmatprep.mubr.f32.mxu0 0.0
      %669 = vmatmul.mubr.f32.gmra.mrb[0].mxu0 %v590
      %v670 = vpop.f32.mrb[0].mxu0
      %v671 = vadd.f32 0.0, %v670
      %v672 = vpop.f32.mrb[0].mxu0
      %673 = vmatprep.mubr.f32.mxu0 0.0
      %674 = vmatmul.mubr.f32.gmra.mrb[0].mxu0 %v592
      %v675 = vpop.f32.mrb[0].mxu0
      %v676 = vadd.f32 0.0, %v675
      %v677 = vpop.f32.mrb[0].mxu0
      %678 = vdwg.mxu0
      %v679 = vld [vmem:[%s4] sm:$0xff]
      %v680 = vld [vmem:[%s4 + $0x8] sm:$0xff]
      %681 = vmatprep.subr.mxu0 0.0
      %682 = vmatpush1.msra.mxu0 %v679
      %683 = vmatprep.subr.mxu0 0.0
      %684 = vmatpush1.msra.mxu0 %v680
      %685 = vmatprep.subr.mxu0 0.0
      %686 = vmatpush1.msra.mxu0 0.0
      %687 = vmatprep.subr.mxu0 0.0
      %688 = vmatpush1.msra.mxu0 0.0
      %689 = vmatprep.subr.mxu0 0.0
      %690 = vmatpush1.msra.mxu0 0.0
      %691 = vmatprep.subr.mxu0 0.0
      %692 = vmatpush1.msra.mxu0 0.0
      %693 = vmatprep.subr.mxu0 0.0
      %694 = vmatpush1.msra.mxu0 0.0
      %695 = vmatprep.subr.mxu0 0.0
      %696 = vmatpush1.msra.mxu0 0.0
      %697 = vmatprep.subr.mxu0 0.0
      %698 = vmatpush1.msra.mxu0 0.0
      %699 = vmatprep.subr.mxu0 0.0
      %700 = vmatpush1.msra.mxu0 0.0
      %701 = vmatprep.subr.mxu0 0.0
      %702 = vmatpush1.msra.mxu0 0.0
      %703 = vmatprep.subr.mxu0 0.0
      %704 = vmatpush1.msra.mxu0 0.0
      %705 = vmatprep.subr.mxu0 0.0
      %706 = vmatpush1.msra.mxu0 0.0
      %707 = vmatprep.subr.mxu0 0.0
      %708 = vmatpush1.msra.mxu0 0.0
      %709 = vmatprep.subr.mxu0 0.0
      %710 = vmatpush1.msra.mxu0 0.0
      %711 = vmatprep.subr.mxu0 0.0
      %712 = vmatpush1.msra.mxu0 0.0
      %713 = vmatprep.subr.mxu0 0.0
      %714 = vmatpush1.msra.mxu0 0.0
      %715 = vmatprep.subr.mxu0 0.0
      %716 = vmatpush1.msra.mxu0 0.0
      %717 = vmatprep.subr.mxu0 0.0
      %718 = vmatpush1.msra.mxu0 0.0
      %719 = vmatprep.subr.mxu0 0.0
      %720 = vmatpush1.msra.mxu0 0.0
      %721 = vmatprep.subr.mxu0 0.0
      %722 = vmatpush1.msra.mxu0 0.0
      %723 = vmatprep.subr.mxu0 0.0
      %724 = vmatpush1.msra.mxu0 0.0
      %725 = vmatprep.subr.mxu0 0.0
      %726 = vmatpush1.msra.mxu0 0.0
      %727 = vmatprep.subr.mxu0 0.0
      %728 = vmatpush1.msra.mxu0 0.0
      %729 = vmatprep.subr.mxu0 0.0
      %730 = vmatpush1.msra.mxu0 0.0
      %731 = vmatprep.subr.mxu0 0.0
      %732 = vmatpush1.msra.mxu0 0.0
      %733 = vmatprep.subr.mxu0 0.0
      %734 = vmatpush1.msra.mxu0 0.0
      %735 = vmatprep.subr.mxu0 0.0
      %736 = vmatpush1.msra.mxu0 0.0
      %737 = vmatprep.subr.mxu0 0.0
      %738 = vmatpush1.msra.mxu0 0.0
      %739 = vmatprep.subr.mxu0 0.0
      %740 = vmatpush1.msra.mxu0 0.0
      %741 = vmatprep.subr.mxu0 0.0
      %742 = vmatpush1.msra.mxu0 0.0
      %743 = vmatprep.subr.mxu0 0.0
      %744 = vmatpush1.msra.mxu0 0.0
      %745 = vmatprep.mubr.f32.mxu0 0.0
      %746 = vmatmul.mubr.f32.gmra.mrb[0].mxu0 %v586
      %v747 = vpop.f32.mrb[0].mxu0
      %v748 = vadd.f32 0.0, %v747
      %v749 = vpop.f32.mrb[0].mxu0
      %750 = vmatprep.mubr.f32.mxu0 0.0
      %751 = vmatmul.mubr.f32.gmra.mrb[0].mxu0 %v588
      %v752 = vpop.f32.mrb[0].mxu0
      %v753 = vadd.f32 0.0, %v752
      %v754 = vpop.f32.mrb[0].mxu0
      %755 = vmatprep.mubr.f32.mxu0 0.0
      %756 = vmatmul.mubr.f32.gmra.mrb[0].mxu0 %v590
      %v757 = vpop.f32.mrb[0].mxu0
      %v758 = vadd.f32 0.0, %v757
      %v759 = vpop.f32.mrb[0].mxu0
      %760 = vmatprep.mubr.f32.mxu0 0.0
      %761 = vmatmul.mubr.f32.gmra.mrb[0].mxu0 %v592
      %v762 = vpop.f32.mrb[0].mxu0
      %v763 = vadd.f32 0.0, %v762
      %v764 = vpop.f32.mrb[0].mxu0
      %765 = vdwg.mxu0
      %v770 = vcombine.high %v661, %v661
      %v771 = vcombine.high %v666, %v666
      %v772 = vcombine.high %v671, %v671
      %v773 = vcombine.high %v676, %v676
      %v778 = vcombine.high %v748, %v748
      %v779 = vcombine.high %v753, %v753
      %v780 = vcombine.high %v758, %v758
      %v781 = vcombine.high %v763, %v763
      %vm782 = vcmask 64512
      %v783 = vsel %vm782, %v661, 0
      %v785 = vsel %vm782, %v748, 0
      %787 = vmatprep.subr.mxu0 0.0
      %788 = vmatpush1.xpose.msra.mxu0 %v785
      %789 = vmatprep.subr.mxu0 0.0
      %790 = vmatpush1.xpose.msra.mxu0 0.0
      %791 = vmatprep.subr.mxu0 0.0
      %792 = vmatpush1.xpose.msra.mxu0 0.0
      %793 = vmatprep.subr.mxu0 0.0
      %794 = vmatpush1.xpose.msra.mxu0 0.0
      %795 = vmatprep.subr.mxu0 0.0
      %796 = vmatpush1.xpose.msra.mxu0 0.0
      %797 = vmatprep.subr.mxu0 0.0
      %798 = vmatpush1.xpose.msra.mxu0 0.0
      %799 = vmatprep.subr.mxu0 0.0
      %800 = vmatpush1.xpose.msra.mxu0 0.0
      %801 = vmatprep.subr.mxu0 0.0
      %802 = vmatpush1.xpose.msra.mxu0 0.0
      %803 = vmatprep.subr.mxu0 0.0
      %804 = vmatpush1.xpose.msra.mxu0 0.0
      %805 = vmatprep.subr.mxu0 0.0
      %806 = vmatpush1.xpose.msra.mxu0 0.0
      %807 = vmatprep.subr.mxu0 0.0
      %808 = vmatpush1.xpose.msra.mxu0 0.0
      %809 = vmatprep.subr.mxu0 0.0
      %810 = vmatpush1.xpose.msra.mxu0 0.0
      %811 = vmatprep.subr.mxu0 0.0
      %812 = vmatpush1.xpose.msra.mxu0 0.0
      %813 = vmatprep.subr.mxu0 0.0
      %814 = vmatpush1.xpose.msra.mxu0 0.0
      %815 = vmatprep.subr.mxu0 0.0
      %816 = vmatpush1.xpose.msra.mxu0 0.0
      %817 = vmatprep.subr.mxu0 0.0
      %818 = vmatpush1.xpose.msra.mxu0 0.0
      %819 = vmatprep.subr.mxu0 0.0
      %820 = vmatpush1.xpose.msra.mxu0 0.0
      %821 = vmatprep.subr.mxu0 0.0
      %822 = vmatpush1.xpose.msra.mxu0 0.0
      %823 = vmatprep.subr.mxu0 0.0
      %824 = vmatpush1.xpose.msra.mxu0 0.0
      %825 = vmatprep.subr.mxu0 0.0
      %826 = vmatpush1.xpose.msra.mxu0 0.0
      %827 = vmatprep.subr.mxu0 0.0
      %828 = vmatpush1.xpose.msra.mxu0 0.0
      %829 = vmatprep.subr.mxu0 0.0
      %830 = vmatpush1.xpose.msra.mxu0 0.0
      %831 = vmatprep.subr.mxu0 0.0
      %832 = vmatpush1.xpose.msra.mxu0 0.0
      %833 = vmatprep.subr.mxu0 0.0
      %834 = vmatpush1.xpose.msra.mxu0 0.0
      %835 = vmatprep.subr.mxu0 0.0
      %836 = vmatpush1.xpose.msra.mxu0 0.0
      %837 = vmatprep.subr.mxu0 0.0
      %838 = vmatpush1.xpose.msra.mxu0 0.0
      %839 = vmatprep.subr.mxu0 0.0
      %840 = vmatpush1.xpose.msra.mxu0 0.0
      %841 = vmatprep.subr.mxu0 0.0
      %842 = vmatpush1.xpose.msra.mxu0 0.0
      %843 = vmatprep.subr.mxu0 0.0
      %844 = vmatpush1.xpose.msra.mxu0 0.0
      %845 = vmatprep.subr.mxu0 0.0
      %846 = vmatpush1.xpose.msra.mxu0 0.0
      %847 = vmatprep.subr.mxu0 0.0
      %848 = vmatpush1.xpose.msra.mxu0 0.0
      %849 = vmatprep.subr.mxu0 0.0
      %850 = vmatpush1.xpose.msra.mxu0 0.0
      %851 = vmatprep.mubr.f32.mxu0 0.0
      %852 = vmatmul.mubr.f32.gmra.mrb[0].mxu0 %v783
      %v853 = vpop.f32.mrb[0].mxu0
      %v854 = vadd.f32 0.0, %v853
      %v855 = vpop.f32.mrb[0].mxu0
      %856 = vdwg.mxu0
      %v857 = vsel %vm782, %v770, 0
      %v859 = vsel %vm782, %v778, 0
      %861 = vmatprep.subr.mxu0 0.0
      %862 = vmatpush1.xpose.msra.mxu0 %v859
      %863 = vmatprep.subr.mxu0 0.0
      %864 = vmatpush1.xpose.msra.mxu0 0.0
      %865 = vmatprep.subr.mxu0 0.0
      %866 = vmatpush1.xpose.msra.mxu0 0.0
      %867 = vmatprep.subr.mxu0 0.0
      %868 = vmatpush1.xpose.msra.mxu0 0.0
      %869 = vmatprep.subr.mxu0 0.0
      %870 = vmatpush1.xpose.msra.mxu0 0.0
      %871 = vmatprep.subr.mxu0 0.0
      %872 = vmatpush1.xpose.msra.mxu0 0.0
      %873 = vmatprep.subr.mxu0 0.0
      %874 = vmatpush1.xpose.msra.mxu0 0.0
      %875 = vmatprep.subr.mxu0 0.0
      %876 = vmatpush1.xpose.msra.mxu0 0.0
      %877 = vmatprep.subr.mxu0 0.0
      %878 = vmatpush1.xpose.msra.mxu0 0.0
      %879 = vmatprep.subr.mxu0 0.0
      %880 = vmatpush1.xpose.msra.mxu0 0.0
      %881 = vmatprep.subr.mxu0 0.0
      %882 = vmatpush1.xpose.msra.mxu0 0.0
      %883 = vmatprep.subr.mxu0 0.0
      %884 = vmatpush1.xpose.msra.mxu0 0.0
      %885 = vmatprep.subr.mxu0 0.0
      %886 = vmatpush1.xpose.msra.mxu0 0.0
      %887 = vmatprep.subr.mxu0 0.0
      %888 = vmatpush1.xpose.msra.mxu0 0.0
      %889 = vmatprep.subr.mxu0 0.0
      %890 = vmatpush1.xpose.msra.mxu0 0.0
      %891 = vmatprep.subr.mxu0 0.0
      %892 = vmatpush1.xpose.msra.mxu0 0.0
      %893 = vmatprep.subr.mxu0 0.0
      %894 = vmatpush1.xpose.msra.mxu0 0.0
      %895 = vmatprep.subr.mxu0 0.0
      %896 = vmatpush1.xpose.msra.mxu0 0.0
      %897 = vmatprep.subr.mxu0 0.0
      %898 = vmatpush1.xpose.msra.mxu0 0.0
      %899 = vmatprep.subr.mxu0 0.0
      %900 = vmatpush1.xpose.msra.mxu0 0.0
      %901 = vmatprep.subr.mxu0 0.0
      %902 = vmatpush1.xpose.msra.mxu0 0.0
      %903 = vmatprep.subr.mxu0 0.0
      %904 = vmatpush1.xpose.msra.mxu0 0.0
      %905 = vmatprep.subr.mxu0 0.0
      %906 = vmatpush1.xpose.msra.mxu0 0.0
      %907 = vmatprep.subr.mxu0 0.0
      %908 = vmatpush1.xpose.msra.mxu0 0.0
      %909 = vmatprep.subr.mxu0 0.0
      %910 = vmatpush1.xpose.msra.mxu0 0.0
      %911 = vmatprep.subr.mxu0 0.0
      %912 = vmatpush1.xpose.msra.mxu0 0.0
      %913 = vmatprep.subr.mxu0 0.0
      %914 = vmatpush1.xpose.msra.mxu0 0.0
      %915 = vmatprep.subr.mxu0 0.0
      %916 = vmatpush1.xpose.msra.mxu0 0.0
      %917 = vmatprep.subr.mxu0 0.0
      %918 = vmatpush1.xpose.msra.mxu0 0.0
      %919 = vmatprep.subr.mxu0 0.0
      %920 = vmatpush1.xpose.msra.mxu0 0.0
      %921 = vmatprep.subr.mxu0 0.0
      %922 = vmatpush1.xpose.msra.mxu0 0.0
      %923 = vmatprep.subr.mxu0 0.0
      %924 = vmatpush1.xpose.msra.mxu0 0.0
      %925 = vmatprep.mubr.f32.mxu0 0.0
      %926 = vmatmul.mubr.f32.gmra.mrb[0].mxu0 %v857
      %v927 = vpop.f32.mrb[0].mxu0
      %v928 = vadd.f32 0.0, %v927
      %v929 = vpop.f32.mrb[0].mxu0
      %930 = vdwg.mxu0
      %v931 = vsel %vm782, %v666, 0
      %v933 = vsel %vm782, %v753, 0
      %935 = vmatprep.subr.mxu0 0.0
      %936 = vmatpush1.xpose.msra.mxu0 %v933
      %937 = vmatprep.subr.mxu0 0.0
      %938 = vmatpush1.xpose.msra.mxu0 0.0
      %939 = vmatprep.subr.mxu0 0.0
      %940 = vmatpush1.xpose.msra.mxu0 0.0
      %941 = vmatprep.subr.mxu0 0.0
      %942 = vmatpush1.xpose.msra.mxu0 0.0
      %943 = vmatprep.subr.mxu0 0.0
      %944 = vmatpush1.xpose.msra.mxu0 0.0
      %945 = vmatprep.subr.mxu0 0.0
      %946 = vmatpush1.xpose.msra.mxu0 0.0
      %947 = vmatprep.subr.mxu0 0.0
      %948 = vmatpush1.xpose.msra.mxu0 0.0
      %949 = vmatprep.subr.mxu0 0.0
      %950 = vmatpush1.xpose.msra.mxu0 0.0
      %951 = vmatprep.subr.mxu0 0.0
      %952 = vmatpush1.xpose.msra.mxu0 0.0
      %953 = vmatprep.subr.mxu0 0.0
      %954 = vmatpush1.xpose.msra.mxu0 0.0
      %955 = vmatprep.subr.mxu0 0.0
      %956 = vmatpush1.xpose.msra.mxu0 0.0
      %957 = vmatprep.subr.mxu0 0.0
      %958 = vmatpush1.xpose.msra.mxu0 0.0
      %959 = vmatprep.subr.mxu0 0.0
      %960 = vmatpush1.xpose.msra.mxu0 0.0
      %961 = vmatprep.subr.mxu0 0.0
      %962 = vmatpush1.xpose.msra.mxu0 0.0
      %963 = vmatprep.subr.mxu0 0.0
      %964 = vmatpush1.xpose.msra.mxu0 0.0
      %965 = vmatprep.subr.mxu0 0.0
      %966 = vmatpush1.xpose.msra.mxu0 0.0
      %967 = vmatprep.subr.mxu0 0.0
      %968 = vmatpush1.xpose.msra.mxu0 0.0
      %969 = vmatprep.subr.mxu0 0.0
      %970 = vmatpush1.xpose.msra.mxu0 0.0
      %971 = vmatprep.subr.mxu0 0.0
      %972 = vmatpush1.xpose.msra.mxu0 0.0
      %973 = vmatprep.subr.mxu0 0.0
      %974 = vmatpush1.xpose.msra.mxu0 0.0
      %975 = vmatprep.subr.mxu0 0.0
      %976 = vmatpush1.xpose.msra.mxu0 0.0
      %977 = vmatprep.subr.mxu0 0.0
      %978 = vmatpush1.xpose.msra.mxu0 0.0
      %979 = vmatprep.subr.mxu0 0.0
      %980 = vmatpush1.xpose.msra.mxu0 0.0
      %981 = vmatprep.subr.mxu0 0.0
      %982 = vmatpush1.xpose.msra.mxu0 0.0
      %983 = vmatprep.subr.mxu0 0.0
      %984 = vmatpush1.xpose.msra.mxu0 0.0
      %985 = vmatprep.subr.mxu0 0.0
      %986 = vmatpush1.xpose.msra.mxu0 0.0
      %987 = vmatprep.subr.mxu0 0.0
      %988 = vmatpush1.xpose.msra.mxu0 0.0
      %989 = vmatprep.subr.mxu0 0.0
      %990 = vmatpush1.xpose.msra.mxu0 0.0
      %991 = vmatprep.subr.mxu0 0.0
      %992 = vmatpush1.xpose.msra.mxu0 0.0
      %993 = vmatprep.subr.mxu0 0.0
      %994 = vmatpush1.xpose.msra.mxu0 0.0
      %995 = vmatprep.subr.mxu0 0.0
      %996 = vmatpush1.xpose.msra.mxu0 0.0
      %997 = vmatprep.subr.mxu0 0.0
      %998 = vmatpush1.xpose.msra.mxu0 0.0
      %999 = vmatprep.mubr.f32.mxu0 0.0
      %1000 = vmatmul.mubr.f32.gmra.mrb[0].mxu0 %v931
      %v1001 = vpop.f32.mrb[0].mxu0
      %v1002 = vadd.f32 0.0, %v1001
      %v1003 = vpop.f32.mrb[0].mxu0
      %1004 = vdwg.mxu0
      %v1005 = vsel %vm782, %v771, 0
      %v1007 = vsel %vm782, %v779, 0
      %1009 = vmatprep.subr.mxu0 0.0
      %1010 = vmatpush1.xpose.msra.mxu0 %v1007
      %1011 = vmatprep.subr.mxu0 0.0
      %1012 = vmatpush1.xpose.msra.mxu0 0.0
      %1013 = vmatprep.subr.mxu0 0.0
      %1014 = vmatpush1.xpose.msra.mxu0 0.0
      %1015 = vmatprep.subr.mxu0 0.0
      %1016 = vmatpush1.xpose.msra.mxu0 0.0
      %1017 = vmatprep.subr.mxu0 0.0
      %1018 = vmatpush1.xpose.msra.mxu0 0.0
      %1019 = vmatprep.subr.mxu0 0.0
      %1020 = vmatpush1.xpose.msra.mxu0 0.0
      %1021 = vmatprep.subr.mxu0 0.0
      %1022 = vmatpush1.xpose.msra.mxu0 0.0
      %1023 = vmatprep.subr.mxu0 0.0
      %1024 = vmatpush1.xpose.msra.mxu0 0.0
      %1025 = vmatprep.subr.mxu0 0.0
      %1026 = vmatpush1.xpose.msra.mxu0 0.0
      %1027 = vmatprep.subr.mxu0 0.0
      %1028 = vmatpush1.xpose.msra.mxu0 0.0
      %1029 = vmatprep.subr.mxu0 0.0
      %1030 = vmatpush1.xpose.msra.mxu0 0.0
      %1031 = vmatprep.subr.mxu0 0.0
      %1032 = vmatpush1.xpose.msra.mxu0 0.0
      %1033 = vmatprep.subr.mxu0 0.0
      %1034 = vmatpush1.xpose.msra.mxu0 0.0
      %1035 = vmatprep.subr.mxu0 0.0
      %1036 = vmatpush1.xpose.msra.mxu0 0.0
      %1037 = vmatprep.subr.mxu0 0.0
      %1038 = vmatpush1.xpose.msra.mxu0 0.0
      %1039 = vmatprep.subr.mxu0 0.0
      %1040 = vmatpush1.xpose.msra.mxu0 0.0
      %1041 = vmatprep.subr.mxu0 0.0
      %1042 = vmatpush1.xpose.msra.mxu0 0.0
      %1043 = vmatprep.subr.mxu0 0.0
      %1044 = vmatpush1.xpose.msra.mxu0 0.0
      %1045 = vmatprep.subr.mxu0 0.0
      %1046 = vmatpush1.xpose.msra.mxu0 0.0
      %1047 = vmatprep.subr.mxu0 0.0
      %1048 = vmatpush1.xpose.msra.mxu0 0.0
      %1049 = vmatprep.subr.mxu0 0.0
      %1050 = vmatpush1.xpose.msra.mxu0 0.0
      %1051 = vmatprep.subr.mxu0 0.0
      %1052 = vmatpush1.xpose.msra.mxu0 0.0
      %1053 = vmatprep.subr.mxu0 0.0
      %1054 = vmatpush1.xpose.msra.mxu0 0.0
      %1055 = vmatprep.subr.mxu0 0.0
      %1056 = vmatpush1.xpose.msra.mxu0 0.0
      %1057 = vmatprep.subr.mxu0 0.0
      %1058 = vmatpush1.xpose.msra.mxu0 0.0
      %1059 = vmatprep.subr.mxu0 0.0
      %1060 = vmatpush1.xpose.msra.mxu0 0.0
      %1061 = vmatprep.subr.mxu0 0.0
      %1062 = vmatpush1.xpose.msra.mxu0 0.0
      %1063 = vmatprep.subr.mxu0 0.0
      %1064 = vmatpush1.xpose.msra.mxu0 0.0
      %1065 = vmatprep.subr.mxu0 0.0
      %1066 = vmatpush1.xpose.msra.mxu0 0.0
      %1067 = vmatprep.subr.mxu0 0.0
      %1068 = vmatpush1.xpose.msra.mxu0 0.0
      %1069 = vmatprep.subr.mxu0 0.0
      %1070 = vmatpush1.xpose.msra.mxu0 0.0
      %1071 = vmatprep.subr.mxu0 0.0
      %1072 = vmatpush1.xpose.msra.mxu0 0.0
      %1073 = vmatprep.mubr.f32.mxu0 0.0
      %1074 = vmatmul.mubr.f32.gmra.mrb[0].mxu0 %v1005
      %v1075 = vpop.f32.mrb[0].mxu0
      %v1076 = vadd.f32 0.0, %v1075
      %v1077 = vpop.f32.mrb[0].mxu0
      %1078 = vdwg.mxu0
      %v1079 = vsel %vm782, %v671, 0
      %v1081 = vsel %vm782, %v758, 0
      %1083 = vmatprep.subr.mxu0 0.0
      %1084 = vmatpush1.xpose.msra.mxu0 %v1081
      %1085 = vmatprep.subr.mxu0 0.0
      %1086 = vmatpush1.xpose.msra.mxu0 0.0
      %1087 = vmatprep.subr.mxu0 0.0
      %1088 = vmatpush1.xpose.msra.mxu0 0.0
      %1089 = vmatprep.subr.mxu0 0.0
      %1090 = vmatpush1.xpose.msra.mxu0 0.0
      %1091 = vmatprep.subr.mxu0 0.0
      %1092 = vmatpush1.xpose.msra.mxu0 0.0
      %1093 = vmatprep.subr.mxu0 0.0
      %1094 = vmatpush1.xpose.msra.mxu0 0.0
      %1095 = vmatprep.subr.mxu0 0.0
      %1096 = vmatpush1.xpose.msra.mxu0 0.0
      %1097 = vmatprep.subr.mxu0 0.0
      %1098 = vmatpush1.xpose.msra.mxu0 0.0
      %1099 = vmatprep.subr.mxu0 0.0
      %1100 = vmatpush1.xpose.msra.mxu0 0.0
      %1101 = vmatprep.subr.mxu0 0.0
      %1102 = vmatpush1.xpose.msra.mxu0 0.0
      %1103 = vmatprep.subr.mxu0 0.0
      %1104 = vmatpush1.xpose.msra.mxu0 0.0
      %1105 = vmatprep.subr.mxu0 0.0
      %1106 = vmatpush1.xpose.msra.mxu0 0.0
      %1107 = vmatprep.subr.mxu0 0.0
      %1108 = vmatpush1.xpose.msra.mxu0 0.0
      %1109 = vmatprep.subr.mxu0 0.0
      %1110 = vmatpush1.xpose.msra.mxu0 0.0
      %1111 = vmatprep.subr.mxu0 0.0
      %1112 = vmatpush1.xpose.msra.mxu0 0.0
      %1113 = vmatprep.subr.mxu0 0.0
      %1114 = vmatpush1.xpose.msra.mxu0 0.0
      %1115 = vmatprep.subr.mxu0 0.0
      %1116 = vmatpush1.xpose.msra.mxu0 0.0
      %1117 = vmatprep.subr.mxu0 0.0
      %1118 = vmatpush1.xpose.msra.mxu0 0.0
      %1119 = vmatprep.subr.mxu0 0.0
      %1120 = vmatpush1.xpose.msra.mxu0 0.0
      %1121 = vmatprep.subr.mxu0 0.0
      %1122 = vmatpush1.xpose.msra.mxu0 0.0
      %1123 = vmatprep.subr.mxu0 0.0
      %1124 = vmatpush1.xpose.msra.mxu0 0.0
      %1125 = vmatprep.subr.mxu0 0.0
      %1126 = vmatpush1.xpose.msra.mxu0 0.0
      %1127 = vmatprep.subr.mxu0 0.0
      %1128 = vmatpush1.xpose.msra.mxu0 0.0
      %1129 = vmatprep.subr.mxu0 0.0
      %1130 = vmatpush1.xpose.msra.mxu0 0.0
      %1131 = vmatprep.subr.mxu0 0.0
      %1132 = vmatpush1.xpose.msra.mxu0 0.0
      %1133 = vmatprep.subr.mxu0 0.0
      %1134 = vmatpush1.xpose.msra.mxu0 0.0
      %1135 = vmatprep.subr.mxu0 0.0
      %1136 = vmatpush1.xpose.msra.mxu0 0.0
      %1137 = vmatprep.subr.mxu0 0.0
      %1138 = vmatpush1.xpose.msra.mxu0 0.0
      %1139 = vmatprep.subr.mxu0 0.0
      %1140 = vmatpush1.xpose.msra.mxu0 0.0
      %1141 = vmatprep.subr.mxu0 0.0
      %1142 = vmatpush1.xpose.msra.mxu0 0.0
      %1143 = vmatprep.subr.mxu0 0.0
      %1144 = vmatpush1.xpose.msra.mxu0 0.0
      %1145 = vmatprep.subr.mxu0 0.0
      %1146 = vmatpush1.xpose.msra.mxu0 0.0
      %1147 = vmatprep.mubr.f32.mxu0 0.0
      %1148 = vmatmul.mubr.f32.gmra.mrb[0].mxu0 %v1079
      %v1149 = vpop.f32.mrb[0].mxu0
      %v1150 = vadd.f32 0.0, %v1149
      %v1151 = vpop.f32.mrb[0].mxu0
      %1152 = vdwg.mxu0
      %v1153 = vsel %vm782, %v772, 0
      %v1155 = vsel %vm782, %v780, 0
      %1157 = vmatprep.subr.mxu0 0.0
      %1158 = vmatpush1.xpose.msra.mxu0 %v1155
      %1159 = vmatprep.subr.mxu0 0.0
      %1160 = vmatpush1.xpose.msra.mxu0 0.0
      %1161 = vmatprep.subr.mxu0 0.0
      %1162 = vmatpush1.xpose.msra.mxu0 0.0
      %1163 = vmatprep.subr.mxu0 0.0
      %1164 = vmatpush1.xpose.msra.mxu0 0.0
      %1165 = vmatprep.subr.mxu0 0.0
      %1166 = vmatpush1.xpose.msra.mxu0 0.0
      %1167 = vmatprep.subr.mxu0 0.0
      %1168 = vmatpush1.xpose.msra.mxu0 0.0
      %1169 = vmatprep.subr.mxu0 0.0
      %1170 = vmatpush1.xpose.msra.mxu0 0.0
      %1171 = vmatprep.subr.mxu0 0.0
      %1172 = vmatpush1.xpose.msra.mxu0 0.0
      %1173 = vmatprep.subr.mxu0 0.0
      %1174 = vmatpush1.xpose.msra.mxu0 0.0
      %1175 = vmatprep.subr.mxu0 0.0
      %1176 = vmatpush1.xpose.msra.mxu0 0.0
      %1177 = vmatprep.subr.mxu0 0.0
      %1178 = vmatpush1.xpose.msra.mxu0 0.0
      %1179 = vmatprep.subr.mxu0 0.0
      %1180 = vmatpush1.xpose.msra.mxu0 0.0
      %1181 = vmatprep.subr.mxu0 0.0
      %1182 = vmatpush1.xpose.msra.mxu0 0.0
      %1183 = vmatprep.subr.mxu0 0.0
      %1184 = vmatpush1.xpose.msra.mxu0 0.0
      %1185 = vmatprep.subr.mxu0 0.0
      %1186 = vmatpush1.xpose.msra.mxu0 0.0
      %1187 = vmatprep.subr.mxu0 0.0
      %1188 = vmatpush1.xpose.msra.mxu0 0.0
      %1189 = vmatprep.subr.mxu0 0.0
      %1190 = vmatpush1.xpose.msra.mxu0 0.0
      %1191 = vmatprep.subr.mxu0 0.0
      %1192 = vmatpush1.xpose.msra.mxu0 0.0
      %1193 = vmatprep.subr.mxu0 0.0
      %1194 = vmatpush1.xpose.msra.mxu0 0.0
      %1195 = vmatprep.subr.mxu0 0.0
      %1196 = vmatpush1.xpose.msra.mxu0 0.0
      %1197 = vmatprep.subr.mxu0 0.0
      %1198 = vmatpush1.xpose.msra.mxu0 0.0
      %1199 = vmatprep.subr.mxu0 0.0
      %1200 = vmatpush1.xpose.msra.mxu0 0.0
      %1201 = vmatprep.subr.mxu0 0.0
      %1202 = vmatpush1.xpose.msra.mxu0 0.0
      %1203 = vmatprep.subr.mxu0 0.0
      %1204 = vmatpush1.xpose.msra.mxu0 0.0
      %1205 = vmatprep.subr.mxu0 0.0
      %1206 = vmatpush1.xpose.msra.mxu0 0.0
      %1207 = vmatprep.subr.mxu0 0.0
      %1208 = vmatpush1.xpose.msra.mxu0 0.0
      %1209 = vmatprep.subr.mxu0 0.0
      %1210 = vmatpush1.xpose.msra.mxu0 0.0
      %1211 = vmatprep.subr.mxu0 0.0
      %1212 = vmatpush1.xpose.msra.mxu0 0.0
      %1213 = vmatprep.subr.mxu0 0.0
      %1214 = vmatpush1.xpose.msra.mxu0 0.0
      %1215 = vmatprep.subr.mxu0 0.0
      %1216 = vmatpush1.xpose.msra.mxu0 0.0
      %1217 = vmatprep.subr.mxu0 0.0
      %1218 = vmatpush1.xpose.msra.mxu0 0.0
      %1219 = vmatprep.subr.mxu0 0.0
      %1220 = vmatpush1.xpose.msra.mxu0 0.0
      %1221 = vmatprep.mubr.f32.mxu0 0.0
      %1222 = vmatmul.mubr.f32.gmra.mrb[0].mxu0 %v1153
      %v1223 = vpop.f32.mrb[0].mxu0
      %v1224 = vadd.f32 0.0, %v1223
      %v1225 = vpop.f32.mrb[0].mxu0
      %1226 = vdwg.mxu0
      %v1227 = vsel %vm782, %v676, 0
      %v1229 = vsel %vm782, %v763, 0
      %1231 = vmatprep.subr.mxu0 0.0
      %1232 = vmatpush1.xpose.msra.mxu0 %v1229
      %1233 = vmatprep.subr.mxu0 0.0
      %1234 = vmatpush1.xpose.msra.mxu0 0.0
      %1235 = vmatprep.subr.mxu0 0.0
      %1236 = vmatpush1.xpose.msra.mxu0 0.0
      %1237 = vmatprep.subr.mxu0 0.0
      %1238 = vmatpush1.xpose.msra.mxu0 0.0
      %1239 = vmatprep.subr.mxu0 0.0
      %1240 = vmatpush1.xpose.msra.mxu0 0.0
      %1241 = vmatprep.subr.mxu0 0.0
      %1242 = vmatpush1.xpose.msra.mxu0 0.0
      %1243 = vmatprep.subr.mxu0 0.0
      %1244 = vmatpush1.xpose.msra.mxu0 0.0
      %1245 = vmatprep.subr.mxu0 0.0
      %1246 = vmatpush1.xpose.msra.mxu0 0.0
      %1247 = vmatprep.subr.mxu0 0.0
      %1248 = vmatpush1.xpose.msra.mxu0 0.0
      %1249 = vmatprep.subr.mxu0 0.0
      %1250 = vmatpush1.xpose.msra.mxu0 0.0
      %1251 = vmatprep.subr.mxu0 0.0
      %1252 = vmatpush1.xpose.msra.mxu0 0.0
      %1253 = vmatprep.subr.mxu0 0.0
      %1254 = vmatpush1.xpose.msra.mxu0 0.0
      %1255 = vmatprep.subr.mxu0 0.0
      %1256 = vmatpush1.xpose.msra.mxu0 0.0
      %1257 = vmatprep.subr.mxu0 0.0
      %1258 = vmatpush1.xpose.msra.mxu0 0.0
      %1259 = vmatprep.subr.mxu0 0.0
      %1260 = vmatpush1.xpose.msra.mxu0 0.0
      %1261 = vmatprep.subr.mxu0 0.0
      %1262 = vmatpush1.xpose.msra.mxu0 0.0
      %1263 = vmatprep.subr.mxu0 0.0
      %1264 = vmatpush1.xpose.msra.mxu0 0.0
      %1265 = vmatprep.subr.mxu0 0.0
      %1266 = vmatpush1.xpose.msra.mxu0 0.0
      %1267 = vmatprep.subr.mxu0 0.0
      %1268 = vmatpush1.xpose.msra.mxu0 0.0
      %1269 = vmatprep.subr.mxu0 0.0
      %1270 = vmatpush1.xpose.msra.mxu0 0.0
      %1271 = vmatprep.subr.mxu0 0.0
      %1272 = vmatpush1.xpose.msra.mxu0 0.0
      %1273 = vmatprep.subr.mxu0 0.0
      %1274 = vmatpush1.xpose.msra.mxu0 0.0
      %1275 = vmatprep.subr.mxu0 0.0
      %1276 = vmatpush1.xpose.msra.mxu0 0.0
      %1277 = vmatprep.subr.mxu0 0.0
      %1278 = vmatpush1.xpose.msra.mxu0 0.0
      %1279 = vmatprep.subr.mxu0 0.0
      %1280 = vmatpush1.xpose.msra.mxu0 0.0
      %1281 = vmatprep.subr.mxu0 0.0
      %1282 = vmatpush1.xpose.msra.mxu0 0.0
      %1283 = vmatprep.subr.mxu0 0.0
      %1284 = vmatpush1.xpose.msra.mxu0 0.0
      %1285 = vmatprep.subr.mxu0 0.0
      %1286 = vmatpush1.xpose.msra.mxu0 0.0
      %1287 = vmatprep.subr.mxu0 0.0
      %1288 = vmatpush1.xpose.msra.mxu0 0.0
      %1289 = vmatprep.subr.mxu0 0.0
      %1290 = vmatpush1.xpose.msra.mxu0 0.0
      %1291 = vmatprep.subr.mxu0 0.0
      %1292 = vmatpush1.xpose.msra.mxu0 0.0
      %1293 = vmatprep.subr.mxu0 0.0
      %1294 = vmatpush1.xpose.msra.mxu0 0.0
      %1295 = vmatprep.mubr.f32.mxu0 0.0
      %1296 = vmatmul.mubr.f32.gmra.mrb[0].mxu0 %v1227
      %v1297 = vpop.f32.mrb[0].mxu0
      %v1298 = vadd.f32 0.0, %v1297
      %v1299 = vpop.f32.mrb[0].mxu0
      %1300 = vdwg.mxu0
      %v1301 = vsel %vm782, %v773, 0
      %v1303 = vsel %vm782, %v781, 0
      %1305 = vmatprep.subr.mxu0 0.0
      %1306 = vmatpush1.xpose.msra.mxu0 %v1303
      %1307 = vmatprep.subr.mxu0 0.0
      %1308 = vmatpush1.xpose.msra.mxu0 0.0
      %1309 = vmatprep.subr.mxu0 0.0
      %1310 = vmatpush1.xpose.msra.mxu0 0.0
      %1311 = vmatprep.subr.mxu0 0.0
      %1312 = vmatpush1.xpose.msra.mxu0 0.0
      %1313 = vmatprep.subr.mxu0 0.0
      %1314 = vmatpush1.xpose.msra.mxu0 0.0
      %1315 = vmatprep.subr.mxu0 0.0
      %1316 = vmatpush1.xpose.msra.mxu0 0.0
      %1317 = vmatprep.subr.mxu0 0.0
      %1318 = vmatpush1.xpose.msra.mxu0 0.0
      %1319 = vmatprep.subr.mxu0 0.0
      %1320 = vmatpush1.xpose.msra.mxu0 0.0
      %1321 = vmatprep.subr.mxu0 0.0
      %1322 = vmatpush1.xpose.msra.mxu0 0.0
      %1323 = vmatprep.subr.mxu0 0.0
      %1324 = vmatpush1.xpose.msra.mxu0 0.0
      %1325 = vmatprep.subr.mxu0 0.0
      %1326 = vmatpush1.xpose.msra.mxu0 0.0
      %1327 = vmatprep.subr.mxu0 0.0
      %1328 = vmatpush1.xpose.msra.mxu0 0.0
      %1329 = vmatprep.subr.mxu0 0.0
      %1330 = vmatpush1.xpose.msra.mxu0 0.0
      %1331 = vmatprep.subr.mxu0 0.0
      %1332 = vmatpush1.xpose.msra.mxu0 0.0
      %1333 = vmatprep.subr.mxu0 0.0
      %1334 = vmatpush1.xpose.msra.mxu0 0.0
      %1335 = vmatprep.subr.mxu0 0.0
      %1336 = vmatpush1.xpose.msra.mxu0 0.0
      %1337 = vmatprep.subr.mxu0 0.0
      %1338 = vmatpush1.xpose.msra.mxu0 0.0
      %1339 = vmatprep.subr.mxu0 0.0
      %1340 = vmatpush1.xpose.msra.mxu0 0.0
      %1341 = vmatprep.subr.mxu0 0.0
      %1342 = vmatpush1.xpose.msra.mxu0 0.0
      %1343 = vmatprep.subr.mxu0 0.0
      %1344 = vmatpush1.xpose.msra.mxu0 0.0
      %1345 = vmatprep.subr.mxu0 0.0
      %1346 = vmatpush1.xpose.msra.mxu0 0.0
      %1347 = vmatprep.subr.mxu0 0.0
      %1348 = vmatpush1.xpose.msra.mxu0 0.0
      %1349 = vmatprep.subr.mxu0 0.0
      %1350 = vmatpush1.xpose.msra.mxu0 0.0
      %1351 = vmatprep.subr.mxu0 0.0
      %1352 = vmatpush1.xpose.msra.mxu0 0.0
      %1353 = vmatprep.subr.mxu0 0.0
      %1354 = vmatpush1.xpose.msra.mxu0 0.0
      %1355 = vmatprep.subr.mxu0 0.0
      %1356 = vmatpush1.xpose.msra.mxu0 0.0
      %1357 = vmatprep.subr.mxu0 0.0
      %1358 = vmatpush1.xpose.msra.mxu0 0.0
      %1359 = vmatprep.subr.mxu0 0.0
      %1360 = vmatpush1.xpose.msra.mxu0 0.0
      %1361 = vmatprep.subr.mxu0 0.0
      %1362 = vmatpush1.xpose.msra.mxu0 0.0
      %1363 = vmatprep.subr.mxu0 0.0
      %1364 = vmatpush1.xpose.msra.mxu0 0.0
      %1365 = vmatprep.subr.mxu0 0.0
      %1366 = vmatpush1.xpose.msra.mxu0 0.0
      %1367 = vmatprep.subr.mxu0 0.0
      %1368 = vmatpush1.xpose.msra.mxu0 0.0
      %1369 = vmatprep.mubr.f32.mxu0 0.0
      %1370 = vmatmul.mubr.f32.gmra.mrb[0].mxu0 %v1301
      %v1371 = vpop.f32.mrb[0].mxu0
      %v1372 = vadd.f32 0.0, %v1371
      %v1373 = vpop.f32.mrb[0].mxu0
      %1374 = vdwg.mxu0
      %v1375 = vmul.f32 %v854, 0.35355338
      %v1376 = vmul.f32 %v928, 0.35355338
      %v1377 = vmul.f32 %v1002, 0.35355338
      %v1378 = vmul.f32 %v1076, 0.35355338
      %v1379 = vmul.f32 %v1150, 0.35355338
      %v1380 = vmul.f32 %v1224, 0.35355338
      %v1381 = vmul.f32 %v1298, 0.35355338
      %v1382 = vmul.f32 %v1372, 0.35355338
      %v1383 = vld [vmem:[%s7] sm:$0xf]
      %v1384 = vadd.f32 %v1375, %v1383
      %v1385 = vadd.f32 %v1376, %v1383
      %v1386 = vadd.f32 %v1377, %v1383
      %v1387 = vadd.f32 %v1378, %v1383
      %v1388 = vadd.f32 %v1379, %v1383
      %v1389 = vadd.f32 %v1380, %v1383
      %v1390 = vadd.f32 %v1381, %v1383
      %v1391 = vadd.f32 %v1382, %v1383
      %vm1392 = vcmask 27648
      %v1393 = vsel %vm1392, %v1384, -inf
      %1394 = vmax.xlane.f32.xlu0 %v1393
      %v1395 = vpop.xlane.xlu0 %1394
      %v1396 = vsel %vm1392, %v1385, -inf
      %1397 = vmax.xlane.f32.xlu0 %v1396
      %v1398 = vpop.xlane.xlu0 %1397
      %v1399 = vsel %vm1392, %v1386, -inf
      %1400 = vmax.xlane.f32.xlu0 %v1399
      %v1401 = vpop.xlane.xlu0 %1400
      %v1402 = vsel %vm1392, %v1387, -inf
      %1403 = vmax.xlane.f32.xlu0 %v1402
      %v1404 = vpop.xlane.xlu0 %1403
      %v1405 = vsel %vm1392, %v1388, -inf
      %1406 = vmax.xlane.f32.xlu0 %v1405
      %v1407 = vpop.xlane.xlu0 %1406
      %v1408 = vsel %vm1392, %v1389, -inf
      %1409 = vmax.xlane.f32.xlu0 %v1408
      %v1410 = vpop.xlane.xlu0 %1409
      %v1411 = vsel %vm1392, %v1390, -inf
      %1412 = vmax.xlane.f32.xlu0 %v1411
      %v1413 = vpop.xlane.xlu0 %1412
      %v1414 = vsel %vm1392, %v1391, -inf
      %1415 = vmax.xlane.f32.xlu0 %v1414
      %v1416 = vpop.xlane.xlu0 %1415
      %v1417 = vsub.f32 %v1384, %v1395
      %v1418 = vsub.f32 %v1385, %v1398
      %v1419 = vsub.f32 %v1386, %v1401
      %v1420 = vsub.f32 %v1387, %v1404
      %v1421 = vsub.f32 %v1388, %v1407
      %v1422 = vsub.f32 %v1389, %v1410
      %v1423 = vsub.f32 %v1390, %v1413
      %v1424 = vsub.f32 %v1391, %v1416
      %v1425 = vmul.f32 %v1417, 1.442695
      %v1426 = vpow.pop %v1425
      %v1427 = vmul.f32 %v1418, 1.442695
      %v1428 = vpow.pop %v1427
      %v1429 = vmul.f32 %v1419, 1.442695
      %v1430 = vpow.pop %v1429
      %v1431 = vmul.f32 %v1420, 1.442695
      %v1432 = vpow.pop %v1431
      %v1433 = vmul.f32 %v1421, 1.442695
      %v1434 = vpow.pop %v1433
      %v1435 = vmul.f32 %v1422, 1.442695
      %v1436 = vpow.pop %v1435
      %v1437 = vmul.f32 %v1423, 1.442695
      %v1438 = vpow.pop %v1437
      %v1439 = vmul.f32 %v1424, 1.442695
      %v1440 = vpow.pop %v1439
      %v1441 = vsel %vm1392, %v1426, 0.0
      %1442 = vadd.xlane.f32.xlu0 %v1441
      %v1443 = vpop.xlane.xlu0 %1442
      %v1444 = vsel %vm1392, %v1428, 0.0
      %1445 = vadd.xlane.f32.xlu0 %v1444
      %v1446 = vpop.xlane.xlu0 %1445
      %v1447 = vsel %vm1392, %v1430, 0.0
      %1448 = vadd.xlane.f32.xlu0 %v1447
      %v1449 = vpop.xlane.xlu0 %1448
      %v1450 = vsel %vm1392, %v1432, 0.0
      %1451 = vadd.xlane.f32.xlu0 %v1450
      %v1452 = vpop.xlane.xlu0 %1451
      %v1453 = vsel %vm1392, %v1434, 0.0
      %1454 = vadd.xlane.f32.xlu0 %v1453
      %v1455 = vpop.xlane.xlu0 %1454
      %v1456 = vsel %vm1392, %v1436, 0.0
      %1457 = vadd.xlane.f32.xlu0 %v1456
      %v1458 = vpop.xlane.xlu0 %1457
      %v1459 = vsel %vm1392, %v1438, 0.0
      %1460 = vadd.xlane.f32.xlu0 %v1459
      %v1461 = vpop.xlane.xlu0 %1460
      %v1462 = vsel %vm1392, %v1440, 0.0
      %1463 = vadd.xlane.f32.xlu0 %v1462
      %v1464 = vpop.xlane.xlu0 %1463
      %v1465 = vrcp.pop %v1443
      %v1466 = vmul.f32 %v1426, %v1465
      %v1467 = vrcp.pop %v1446
      %v1468 = vmul.f32 %v1428, %v1467
      %v1469 = vrcp.pop %v1449
      %v1470 = vmul.f32 %v1430, %v1469
      %v1471 = vrcp.pop %v1452
      %v1472 = vmul.f32 %v1432, %v1471
      %v1473 = vrcp.pop %v1455
      %v1474 = vmul.f32 %v1434, %v1473
      %v1475 = vrcp.pop %v1458
      %v1476 = vmul.f32 %v1436, %v1475
      %v1477 = vrcp.pop %v1461
      %v1478 = vmul.f32 %v1438, %v1477
      %v1479 = vrcp.pop %v1464
      %v1480 = vmul.f32 %v1440, %v1479
      %1481 = vrot.lane.b32.xlu0 %v748, 112
      %v1482 = vpop.permute.xlu0 %1481
      %vm1483 = vcmask 31744
      %v1485 = vsel %vm1483, %v1466, 0
      %v1487 = vsel %vm353, %v1482, 0
      %1489 = vmatprep.subr.mxu0 0.0
      %1490 = vmatpush1.msra.mxu0 %v1487
      %1491 = vmatprep.subr.mxu0 0.0
      %1492 = vmatpush1.msra.mxu0 0.0
      %1493 = vmatprep.subr.mxu0 0.0
      %1494 = vmatpush1.msra.mxu0 0.0
      %1495 = vmatprep.subr.mxu0 0.0
      %1496 = vmatpush1.msra.mxu0 0.0
      %1497 = vmatprep.subr.mxu0 0.0
      %1498 = vmatpush1.msra.mxu0 0.0
      %1499 = vmatprep.subr.mxu0 0.0
      %1500 = vmatpush1.msra.mxu0 0.0
      %1501 = vmatprep.subr.mxu0 0.0
      %1502 = vmatpush1.msra.mxu0 0.0
      %1503 = vmatprep.subr.mxu0 0.0
      %1504 = vmatpush1.msra.mxu0 0.0
      %1505 = vmatprep.subr.mxu0 0.0
      %1506 = vmatpush1.msra.mxu0 0.0
      %1507 = vmatprep.subr.mxu0 0.0
      %1508 = vmatpush1.msra.mxu0 0.0
      %1509 = vmatprep.subr.mxu0 0.0
      %1510 = vmatpush1.msra.mxu0 0.0
      %1511 = vmatprep.subr.mxu0 0.0
      %1512 = vmatpush1.msra.mxu0 0.0
      %1513 = vmatprep.subr.mxu0 0.0
      %1514 = vmatpush1.msra.mxu0 0.0
      %1515 = vmatprep.subr.mxu0 0.0
      %1516 = vmatpush1.msra.mxu0 0.0
      %1517 = vmatprep.subr.mxu0 0.0
      %1518 = vmatpush1.msra.mxu0 0.0
      %1519 = vmatprep.subr.mxu0 0.0
      %1520 = vmatpush1.msra.mxu0 0.0
      %1521 = vmatprep.subr.mxu0 0.0
      %1522 = vmatpush1.msra.mxu0 0.0
      %1523 = vmatprep.subr.mxu0 0.0
      %1524 = vmatpush1.msra.mxu0 0.0
      %1525 = vmatprep.subr.mxu0 0.0
      %1526 = vmatpush1.msra.mxu0 0.0
      %1527 = vmatprep.subr.mxu0 0.0
      %1528 = vmatpush1.msra.mxu0 0.0
      %1529 = vmatprep.subr.mxu0 0.0
      %1530 = vmatpush1.msra.mxu0 0.0
      %1531 = vmatprep.subr.mxu0 0.0
      %1532 = vmatpush1.msra.mxu0 0.0
      %1533 = vmatprep.subr.mxu0 0.0
      %1534 = vmatpush1.msra.mxu0 0.0
      %1535 = vmatprep.subr.mxu0 0.0
      %1536 = vmatpush1.msra.mxu0 0.0
      %1537 = vmatprep.subr.mxu0 0.0
      %1538 = vmatpush1.msra.mxu0 0.0
      %1539 = vmatprep.subr.mxu0 0.0
      %1540 = vmatpush1.msra.mxu0 0.0
      %1541 = vmatprep.subr.mxu0 0.0
      %1542 = vmatpush1.msra.mxu0 0.0
      %1543 = vmatprep.subr.mxu0 0.0
      %1544 = vmatpush1.msra.mxu0 0.0
      %1545 = vmatprep.subr.mxu0 0.0
      %1546 = vmatpush1.msra.mxu0 0.0
      %1547 = vmatprep.subr.mxu0 0.0
      %1548 = vmatpush1.msra.mxu0 0.0
      %1549 = vmatprep.subr.mxu0 0.0
      %1550 = vmatpush1.msra.mxu0 0.0
      %1551 = vmatprep.subr.mxu0 0.0
      %1552 = vmatpush1.msra.mxu0 0.0
      %1553 = vmatprep.mubr.f32.mxu0 0.0
      %1554 = vmatmul.mubr.f32.gmra.mrb[0].mxu0 %v1485
      %v1555 = vpop.f32.mrb[0].mxu0
      %v1556 = vadd.f32 0.0, %v1555
      %v1557 = vpop.f32.mrb[0].mxu0
      %1558 = vdwg.mxu0
      %1559 = vrot.lane.b32.xlu0 %v778, 112
      %v1560 = vpop.permute.xlu0 %1559
      %v1562 = vsel %vm1483, %v1468, 0
      %v1564 = vsel %vm353, %v1560, 0
      %1566 = vmatprep.subr.mxu0 0.0
      %1567 = vmatpush1.msra.mxu0 %v1564
      %1568 = vmatprep.subr.mxu0 0.0
      %1569 = vmatpush1.msra.mxu0 0.0
      %1570 = vmatprep.subr.mxu0 0.0
      %1571 = vmatpush1.msra.mxu0 0.0
      %1572 = vmatprep.subr.mxu0 0.0
      %1573 = vmatpush1.msra.mxu0 0.0
      %1574 = vmatprep.subr.mxu0 0.0
      %1575 = vmatpush1.msra.mxu0 0.0
      %1576 = vmatprep.subr.mxu0 0.0
      %1577 = vmatpush1.msra.mxu0 0.0
      %1578 = vmatprep.subr.mxu0 0.0
      %1579 = vmatpush1.msra.mxu0 0.0
      %1580 = vmatprep.subr.mxu0 0.0
      %1581 = vmatpush1.msra.mxu0 0.0
      %1582 = vmatprep.subr.mxu0 0.0
      %1583 = vmatpush1.msra.mxu0 0.0
      %1584 = vmatprep.subr.mxu0 0.0
      %1585 = vmatpush1.msra.mxu0 0.0
      %1586 = vmatprep.subr.mxu0 0.0
      %1587 = vmatpush1.msra.mxu0 0.0
      %1588 = vmatprep.subr.mxu0 0.0
      %1589 = vmatpush1.msra.mxu0 0.0
      %1590 = vmatprep.subr.mxu0 0.0
      %1591 = vmatpush1.msra.mxu0 0.0
      %1592 = vmatprep.subr.mxu0 0.0
      %1593 = vmatpush1.msra.mxu0 0.0
      %1594 = vmatprep.subr.mxu0 0.0
      %1595 = vmatpush1.msra.mxu0 0.0
      %1596 = vmatprep.subr.mxu0 0.0
      %1597 = vmatpush1.msra.mxu0 0.0
      %1598 = vmatprep.subr.mxu0 0.0
      %1599 = vmatpush1.msra.mxu0 0.0
      %1600 = vmatprep.subr.mxu0 0.0
      %1601 = vmatpush1.msra.mxu0 0.0
      %1602 = vmatprep.subr.mxu0 0.0
      %1603 = vmatpush1.msra.mxu0 0.0
      %1604 = vmatprep.subr.mxu0 0.0
      %1605 = vmatpush1.msra.mxu0 0.0
      %1606 = vmatprep.subr.mxu0 0.0
      %1607 = vmatpush1.msra.mxu0 0.0
      %1608 = vmatprep.subr.mxu0 0.0
      %1609 = vmatpush1.msra.mxu0 0.0
      %1610 = vmatprep.subr.mxu0 0.0
      %1611 = vmatpush1.msra.mxu0 0.0
      %1612 = vmatprep.subr.mxu0 0.0
      %1613 = vmatpush1.msra.mxu0 0.0
      %1614 = vmatprep.subr.mxu0 0.0
      %1615 = vmatpush1.msra.mxu0 0.0
      %1616 = vmatprep.subr.mxu0 0.0
      %1617 = vmatpush1.msra.mxu0 0.0
      %1618 = vmatprep.subr.mxu0 0.0
      %1619 = vmatpush1.msra.mxu0 0.0
      %1620 = vmatprep.subr.mxu0 0.0
      %1621 = vmatpush1.msra.mxu0 0.0
      %1622 = vmatprep.subr.mxu0 0.0
      %1623 = vmatpush1.msra.mxu0 0.0
      %1624 = vmatprep.subr.mxu0 0.0
      %1625 = vmatpush1.msra.mxu0 0.0
      %1626 = vmatprep.subr.mxu0 0.0
      %1627 = vmatpush1.msra.mxu0 0.0
      %1628 = vmatprep.subr.mxu0 0.0
      %1629 = vmatpush1.msra.mxu0 0.0
      %1630 = vmatprep.mubr.f32.mxu0 0.0
      %1631 = vmatmul.mubr.f32.gmra.mrb[0].mxu0 %v1562
      %v1632 = vpop.f32.mrb[0].mxu0
      %v1633 = vadd.f32 0.0, %v1632
      %v1634 = vpop.f32.mrb[0].mxu0
      %1635 = vdwg.mxu0
      %1636 = vrot.lane.b32.xlu0 %v753, 112
      %v1637 = vpop.permute.xlu0 %1636
      %v1639 = vsel %vm1483, %v1470, 0
      %v1641 = vsel %vm353, %v1637, 0
      %1643 = vmatprep.subr.mxu0 0.0
      %1644 = vmatpush1.msra.mxu0 %v1641
      %1645 = vmatprep.subr.mxu0 0.0
      %1646 = vmatpush1.msra.mxu0 0.0
      %1647 = vmatprep.subr.mxu0 0.0
      %1648 = vmatpush1.msra.mxu0 0.0
      %1649 = vmatprep.subr.mxu0 0.0
      %1650 = vmatpush1.msra.mxu0 0.0
      %1651 = vmatprep.subr.mxu0 0.0
      %1652 = vmatpush1.msra.mxu0 0.0
      %1653 = vmatprep.subr.mxu0 0.0
      %1654 = vmatpush1.msra.mxu0 0.0
      %1655 = vmatprep.subr.mxu0 0.0
      %1656 = vmatpush1.msra.mxu0 0.0
      %1657 = vmatprep.subr.mxu0 0.0
      %1658 = vmatpush1.msra.mxu0 0.0
      %1659 = vmatprep.subr.mxu0 0.0
      %1660 = vmatpush1.msra.mxu0 0.0
      %1661 = vmatprep.subr.mxu0 0.0
      %1662 = vmatpush1.msra.mxu0 0.0
      %1663 = vmatprep.subr.mxu0 0.0
      %1664 = vmatpush1.msra.mxu0 0.0
      %1665 = vmatprep.subr.mxu0 0.0
      %1666 = vmatpush1.msra.mxu0 0.0
      %1667 = vmatprep.subr.mxu0 0.0
      %1668 = vmatpush1.msra.mxu0 0.0
      %1669 = vmatprep.subr.mxu0 0.0
      %1670 = vmatpush1.msra.mxu0 0.0
      %1671 = vmatprep.subr.mxu0 0.0
      %1672 = vmatpush1.msra.mxu0 0.0
      %1673 = vmatprep.subr.mxu0 0.0
      %1674 = vmatpush1.msra.mxu0 0.0
      %1675 = vmatprep.subr.mxu0 0.0
      %1676 = vmatpush1.msra.mxu0 0.0
      %1677 = vmatprep.subr.mxu0 0.0
      %1678 = vmatpush1.msra.mxu0 0.0
      %1679 = vmatprep.subr.mxu0 0.0
      %1680 = vmatpush1.msra.mxu0 0.0
      %1681 = vmatprep.subr.mxu0 0.0
      %1682 = vmatpush1.msra.mxu0 0.0
      %1683 = vmatprep.subr.mxu0 0.0
      %1684 = vmatpush1.msra.mxu0 0.0
      %1685 = vmatprep.subr.mxu0 0.0
      %1686 = vmatpush1.msra.mxu0 0.0
      %1687 = vmatprep.subr.mxu0 0.0
      %1688 = vmatpush1.msra.mxu0 0.0
      %1689 = vmatprep.subr.mxu0 0.0
      %1690 = vmatpush1.msra.mxu0 0.0
      %1691 = vmatprep.subr.mxu0 0.0
      %1692 = vmatpush1.msra.mxu0 0.0
      %1693 = vmatprep.subr.mxu0 0.0
      %1694 = vmatpush1.msra.mxu0 0.0
      %1695 = vmatprep.subr.mxu0 0.0
      %1696 = vmatpush1.msra.mxu0 0.0
      %1697 = vmatprep.subr.mxu0 0.0
      %1698 = vmatpush1.msra.mxu0 0.0
      %1699 = vmatprep.subr.mxu0 0.0
      %1700 = vmatpush1.msra.mxu0 0.0
      %1701 = vmatprep.subr.mxu0 0.0
      %1702 = vmatpush1.msra.mxu0 0.0
      %1703 = vmatprep.subr.mxu0 0.0
      %1704 = vmatpush1.msra.mxu0 0.0
      %1705 = vmatprep.subr.mxu0 0.0
      %1706 = vmatpush1.msra.mxu0 0.0
      %1707 = vmatprep.mubr.f32.mxu0 0.0
      %1708 = vmatmul.mubr.f32.gmra.mrb[0].mxu0 %v1639
      %v1709 = vpop.f32.mrb[0].mxu0
      %v1710 = vadd.f32 0.0, %v1709
      %v1711 = vpop.f32.mrb[0].mxu0
      %1712 = vdwg.mxu0
      %1713 = vrot.lane.b32.xlu0 %v779, 112
      %v1714 = vpop.permute.xlu0 %1713
      %v1716 = vsel %vm1483, %v1472, 0
      %v1718 = vsel %vm353, %v1714, 0
      %1720 = vmatprep.subr.mxu0 0.0
      %1721 = vmatpush1.msra.mxu0 %v1718
      %1722 = vmatprep.subr.mxu0 0.0
      %1723 = vmatpush1.msra.mxu0 0.0
      %1724 = vmatprep.subr.mxu0 0.0
      %1725 = vmatpush1.msra.mxu0 0.0
      %1726 = vmatprep.subr.mxu0 0.0
      %1727 = vmatpush1.msra.mxu0 0.0
      %1728 = vmatprep.subr.mxu0 0.0
      %1729 = vmatpush1.msra.mxu0 0.0
      %1730 = vmatprep.subr.mxu0 0.0
      %1731 = vmatpush1.msra.mxu0 0.0
      %1732 = vmatprep.subr.mxu0 0.0
      %1733 = vmatpush1.msra.mxu0 0.0
      %1734 = vmatprep.subr.mxu0 0.0
      %1735 = vmatpush1.msra.mxu0 0.0
      %1736 = vmatprep.subr.mxu0 0.0
      %1737 = vmatpush1.msra.mxu0 0.0
      %1738 = vmatprep.subr.mxu0 0.0
      %1739 = vmatpush1.msra.mxu0 0.0
      %1740 = vmatprep.subr.mxu0 0.0
      %1741 = vmatpush1.msra.mxu0 0.0
      %1742 = vmatprep.subr.mxu0 0.0
      %1743 = vmatpush1.msra.mxu0 0.0
      %1744 = vmatprep.subr.mxu0 0.0
      %1745 = vmatpush1.msra.mxu0 0.0
      %1746 = vmatprep.subr.mxu0 0.0
      %1747 = vmatpush1.msra.mxu0 0.0
      %1748 = vmatprep.subr.mxu0 0.0
      %1749 = vmatpush1.msra.mxu0 0.0
      %1750 = vmatprep.subr.mxu0 0.0
      %1751 = vmatpush1.msra.mxu0 0.0
      %1752 = vmatprep.subr.mxu0 0.0
      %1753 = vmatpush1.msra.mxu0 0.0
      %1754 = vmatprep.subr.mxu0 0.0
      %1755 = vmatpush1.msra.mxu0 0.0
      %1756 = vmatprep.subr.mxu0 0.0
      %1757 = vmatpush1.msra.mxu0 0.0
      %1758 = vmatprep.subr.mxu0 0.0
      %1759 = vmatpush1.msra.mxu0 0.0
      %1760 = vmatprep.subr.mxu0 0.0
      %1761 = vmatpush1.msra.mxu0 0.0
      %1762 = vmatprep.subr.mxu0 0.0
      %1763 = vmatpush1.msra.mxu0 0.0
      %1764 = vmatprep.subr.mxu0 0.0
      %1765 = vmatpush1.msra.mxu0 0.0
      %1766 = vmatprep.subr.mxu0 0.0
      %1767 = vmatpush1.msra.mxu0 0.0
      %1768 = vmatprep.subr.mxu0 0.0
      %1769 = vmatpush1.msra.mxu0 0.0
      %1770 = vmatprep.subr.mxu0 0.0
      %1771 = vmatpush1.msra.mxu0 0.0
      %1772 = vmatprep.subr.mxu0 0.0
      %1773 = vmatpush1.msra.mxu0 0.0
      %1774 = vmatprep.subr.mxu0 0.0
      %1775 = vmatpush1.msra.mxu0 0.0
      %1776 = vmatprep.subr.mxu0 0.0
      %1777 = vmatpush1.msra.mxu0 0.0
      %1778 = vmatprep.subr.mxu0 0.0
      %1779 = vmatpush1.msra.mxu0 0.0
      %1780 = vmatprep.subr.mxu0 0.0
      %1781 = vmatpush1.msra.mxu0 0.0
      %1782 = vmatprep.subr.mxu0 0.0
      %1783 = vmatpush1.msra.mxu0 0.0
      %1784 = vmatprep.mubr.f32.mxu0 0.0
      %1785 = vmatmul.mubr.f32.gmra.mrb[0].mxu0 %v1716
      %v1786 = vpop.f32.mrb[0].mxu0
      %v1787 = vadd.f32 0.0, %v1786
      %v1788 = vpop.f32.mrb[0].mxu0
      %1789 = vdwg.mxu0
      %1790 = vrot.lane.b32.xlu0 %v758, 112
      %v1791 = vpop.permute.xlu0 %1790
      %v1793 = vsel %vm1483, %v1474, 0
      %v1795 = vsel %vm353, %v1791, 0
      %1797 = vmatprep.subr.mxu0 0.0
      %1798 = vmatpush1.msra.mxu0 %v1795
      %1799 = vmatprep.subr.mxu0 0.0
      %1800 = vmatpush1.msra.mxu0 0.0
      %1801 = vmatprep.subr.mxu0 0.0
      %1802 = vmatpush1.msra.mxu0 0.0
      %1803 = vmatprep.subr.mxu0 0.0
      %1804 = vmatpush1.msra.mxu0 0.0
      %1805 = vmatprep.subr.mxu0 0.0
      %1806 = vmatpush1.msra.mxu0 0.0
      %1807 = vmatprep.subr.mxu0 0.0
      %1808 = vmatpush1.msra.mxu0 0.0
      %1809 = vmatprep.subr.mxu0 0.0
      %1810 = vmatpush1.msra.mxu0 0.0
      %1811 = vmatprep.subr.mxu0 0.0
      %1812 = vmatpush1.msra.mxu0 0.0
      %1813 = vmatprep.subr.mxu0 0.0
      %1814 = vmatpush1.msra.mxu0 0.0
      %1815 = vmatprep.subr.mxu0 0.0
      %1816 = vmatpush1.msra.mxu0 0.0
      %1817 = vmatprep.subr.mxu0 0.0
      %1818 = vmatpush1.msra.mxu0 0.0
      %1819 = vmatprep.subr.mxu0 0.0
      %1820 = vmatpush1.msra.mxu0 0.0
      %1821 = vmatprep.subr.mxu0 0.0
      %1822 = vmatpush1.msra.mxu0 0.0
      %1823 = vmatprep.subr.mxu0 0.0
      %1824 = vmatpush1.msra.mxu0 0.0
      %1825 = vmatprep.subr.mxu0 0.0
      %1826 = vmatpush1.msra.mxu0 0.0
      %1827 = vmatprep.subr.mxu0 0.0
      %1828 = vmatpush1.msra.mxu0 0.0
      %1829 = vmatprep.subr.mxu0 0.0
      %1830 = vmatpush1.msra.mxu0 0.0
      %1831 = vmatprep.subr.mxu0 0.0
      %1832 = vmatpush1.msra.mxu0 0.0
      %1833 = vmatprep.subr.mxu0 0.0
      %1834 = vmatpush1.msra.mxu0 0.0
      %1835 = vmatprep.subr.mxu0 0.0
      %1836 = vmatpush1.msra.mxu0 0.0
      %1837 = vmatprep.subr.mxu0 0.0
      %1838 = vmatpush1.msra.mxu0 0.0
      %1839 = vmatprep.subr.mxu0 0.0
      %1840 = vmatpush1.msra.mxu0 0.0
      %1841 = vmatprep.subr.mxu0 0.0
      %1842 = vmatpush1.msra.mxu0 0.0
      %1843 = vmatprep.subr.mxu0 0.0
      %1844 = vmatpush1.msra.mxu0 0.0
      %1845 = vmatprep.subr.mxu0 0.0
      %1846 = vmatpush1.msra.mxu0 0.0
      %1847 = vmatprep.subr.mxu0 0.0
      %1848 = vmatpush1.msra.mxu0 0.0
      %1849 = vmatprep.subr.mxu0 0.0
      %1850 = vmatpush1.msra.mxu0 0.0
      %1851 = vmatprep.subr.mxu0 0.0
      %1852 = vmatpush1.msra.mxu0 0.0
      %1853 = vmatprep.subr.mxu0 0.0
      %1854 = vmatpush1.msra.mxu0 0.0
      %1855 = vmatprep.subr.mxu0 0.0
      %1856 = vmatpush1.msra.mxu0 0.0
      %1857 = vmatprep.subr.mxu0 0.0
      %1858 = vmatpush1.msra.mxu0 0.0
      %1859 = vmatprep.subr.mxu0 0.0
      %1860 = vmatpush1.msra.mxu0 0.0
      %1861 = vmatprep.mubr.f32.mxu0 0.0
      %1862 = vmatmul.mubr.f32.gmra.mrb[0].mxu0 %v1793
      %v1863 = vpop.f32.mrb[0].mxu0
      %v1864 = vadd.f32 0.0, %v1863
      %v1865 = vpop.f32.mrb[0].mxu0
      %1866 = vdwg.mxu0
      %1867 = vrot.lane.b32.xlu0 %v780, 112
      %v1868 = vpop.permute.xlu0 %1867
      %v1870 = vsel %vm1483, %v1476, 0
      %v1872 = vsel %vm353, %v1868, 0
      %1874 = vmatprep.subr.mxu0 0.0
      %1875 = vmatpush1.msra.mxu0 %v1872
      %1876 = vmatprep.subr.mxu0 0.0
      %1877 = vmatpush1.msra.mxu0 0.0
      %1878 = vmatprep.subr.mxu0 0.0
      %1879 = vmatpush1.msra.mxu0 0.0
      %1880 = vmatprep.subr.mxu0 0.0
      %1881 = vmatpush1.msra.mxu0 0.0
      %1882 = vmatprep.subr.mxu0 0.0
      %1883 = vmatpush1.msra.mxu0 0.0
      %1884 = vmatprep.subr.mxu0 0.0
      %1885 = vmatpush1.msra.mxu0 0.0
      %1886 = vmatprep.subr.mxu0 0.0
      %1887 = vmatpush1.msra.mxu0 0.0
      %1888 = vmatprep.subr.mxu0 0.0
      %1889 = vmatpush1.msra.mxu0 0.0
      %1890 = vmatprep.subr.mxu0 0.0
      %1891 = vmatpush1.msra.mxu0 0.0
      %1892 = vmatprep.subr.mxu0 0.0
      %1893 = vmatpush1.msra.mxu0 0.0
      %1894 = vmatprep.subr.mxu0 0.0
      %1895 = vmatpush1.msra.mxu0 0.0
      %1896 = vmatprep.subr.mxu0 0.0
      %1897 = vmatpush1.msra.mxu0 0.0
      %1898 = vmatprep.subr.mxu0 0.0
      %1899 = vmatpush1.msra.mxu0 0.0
      %1900 = vmatprep.subr.mxu0 0.0
      %1901 = vmatpush1.msra.mxu0 0.0
      %1902 = vmatprep.subr.mxu0 0.0
      %1903 = vmatpush1.msra.mxu0 0.0
      %1904 = vmatprep.subr.mxu0 0.0
      %1905 = vmatpush1.msra.mxu0 0.0
      %1906 = vmatprep.subr.mxu0 0.0
      %1907 = vmatpush1.msra.mxu0 0.0
      %1908 = vmatprep.subr.mxu0 0.0
      %1909 = vmatpush1.msra.mxu0 0.0
      %1910 = vmatprep.subr.mxu0 0.0
      %1911 = vmatpush1.msra.mxu0 0.0
      %1912 = vmatprep.subr.mxu0 0.0
      %1913 = vmatpush1.msra.mxu0 0.0
      %1914 = vmatprep.subr.mxu0 0.0
      %1915 = vmatpush1.msra.mxu0 0.0
      %1916 = vmatprep.subr.mxu0 0.0
      %1917 = vmatpush1.msra.mxu0 0.0
      %1918 = vmatprep.subr.mxu0 0.0
      %1919 = vmatpush1.msra.mxu0 0.0
      %1920 = vmatprep.subr.mxu0 0.0
      %1921 = vmatpush1.msra.mxu0 0.0
      %1922 = vmatprep.subr.mxu0 0.0
      %1923 = vmatpush1.msra.mxu0 0.0
      %1924 = vmatprep.subr.mxu0 0.0
      %1925 = vmatpush1.msra.mxu0 0.0
      %1926 = vmatprep.subr.mxu0 0.0
      %1927 = vmatpush1.msra.mxu0 0.0
      %1928 = vmatprep.subr.mxu0 0.0
      %1929 = vmatpush1.msra.mxu0 0.0
      %1930 = vmatprep.subr.mxu0 0.0
      %1931 = vmatpush1.msra.mxu0 0.0
      %1932 = vmatprep.subr.mxu0 0.0
      %1933 = vmatpush1.msra.mxu0 0.0
      %1934 = vmatprep.subr.mxu0 0.0
      %1935 = vmatpush1.msra.mxu0 0.0
      %1936 = vmatprep.subr.mxu0 0.0
      %1937 = vmatpush1.msra.mxu0 0.0
      %1938 = vmatprep.mubr.f32.mxu0 0.0
      %1939 = vmatmul.mubr.f32.gmra.mrb[0].mxu0 %v1870
      %v1940 = vpop.f32.mrb[0].mxu0
      %v1941 = vadd.f32 0.0, %v1940
      %v1942 = vpop.f32.mrb[0].mxu0
      %1943 = vdwg.mxu0
      %1944 = vrot.lane.b32.xlu0 %v763, 112
      %v1945 = vpop.permute.xlu0 %1944
      %v1947 = vsel %vm1483, %v1478, 0
      %v1949 = vsel %vm353, %v1945, 0
      %1951 = vmatprep.subr.mxu0 0.0
      %1952 = vmatpush1.msra.mxu0 %v1949
      %1953 = vmatprep.subr.mxu0 0.0
      %1954 = vmatpush1.msra.mxu0 0.0
      %1955 = vmatprep.subr.mxu0 0.0
      %1956 = vmatpush1.msra.mxu0 0.0
      %1957 = vmatprep.subr.mxu0 0.0
      %1958 = vmatpush1.msra.mxu0 0.0
      %1959 = vmatprep.subr.mxu0 0.0
      %1960 = vmatpush1.msra.mxu0 0.0
      %1961 = vmatprep.subr.mxu0 0.0
      %1962 = vmatpush1.msra.mxu0 0.0
      %1963 = vmatprep.subr.mxu0 0.0
      %1964 = vmatpush1.msra.mxu0 0.0
      %1965 = vmatprep.subr.mxu0 0.0
      %1966 = vmatpush1.msra.mxu0 0.0
      %1967 = vmatprep.subr.mxu0 0.0
      %1968 = vmatpush1.msra.mxu0 0.0
      %1969 = vmatprep.subr.mxu0 0.0
      %1970 = vmatpush1.msra.mxu0 0.0
      %1971 = vmatprep.subr.mxu0 0.0
      %1972 = vmatpush1.msra.mxu0 0.0
      %1973 = vmatprep.subr.mxu0 0.0
      %1974 = vmatpush1.msra.mxu0 0.0
      %1975 = vmatprep.subr.mxu0 0.0
      %1976 = vmatpush1.msra.mxu0 0.0
      %1977 = vmatprep.subr.mxu0 0.0
      %1978 = vmatpush1.msra.mxu0 0.0
      %1979 = vmatprep.subr.mxu0 0.0
      %1980 = vmatpush1.msra.mxu0 0.0
      %1981 = vmatprep.subr.mxu0 0.0
      %1982 = vmatpush1.msra.mxu0 0.0
      %1983 = vmatprep.subr.mxu0 0.0
      %1984 = vmatpush1.msra.mxu0 0.0
      %1985 = vmatprep.subr.mxu0 0.0
      %1986 = vmatpush1.msra.mxu0 0.0
      %1987 = vmatprep.subr.mxu0 0.0
      %1988 = vmatpush1.msra.mxu0 0.0
      %1989 = vmatprep.subr.mxu0 0.0
      %1990 = vmatpush1.msra.mxu0 0.0
      %1991 = vmatprep.subr.mxu0 0.0
      %1992 = vmatpush1.msra.mxu0 0.0
      %1993 = vmatprep.subr.mxu0 0.0
      %1994 = vmatpush1.msra.mxu0 0.0
      %1995 = vmatprep.subr.mxu0 0.0
      %1996 = vmatpush1.msra.mxu0 0.0
      %1997 = vmatprep.subr.mxu0 0.0
      %1998 = vmatpush1.msra.mxu0 0.0
      %1999 = vmatprep.subr.mxu0 0.0
      %2000 = vmatpush1.msra.mxu0 0.0
      %2001 = vmatprep.subr.mxu0 0.0
      %2002 = vmatpush1.msra.mxu0 0.0
      %2003 = vmatprep.subr.mxu0 0.0
      %2004 = vmatpush1.msra.mxu0 0.0
      %2005 = vmatprep.subr.mxu0 0.0
      %2006 = vmatpush1.msra.mxu0 0.0
      %2007 = vmatprep.subr.mxu0 0.0
      %2008 = vmatpush1.msra.mxu0 0.0
      %2009 = vmatprep.subr.mxu0 0.0
      %2010 = vmatpush1.msra.mxu0 0.0
      %2011 = vmatprep.subr.mxu0 0.0
      %2012 = vmatpush1.msra.mxu0 0.0
      %2013 = vmatprep.subr.mxu0 0.0
      %2014 = vmatpush1.msra.mxu0 0.0
      %2015 = vmatprep.mubr.f32.mxu0 0.0
      %2016 = vmatmul.mubr.f32.gmra.mrb[0].mxu0 %v1947
      %v2017 = vpop.f32.mrb[0].mxu0
      %v2018 = vadd.f32 0.0, %v2017
      %v2019 = vpop.f32.mrb[0].mxu0
      %2020 = vdwg.mxu0
      %2021 = vrot.lane.b32.xlu0 %v781, 112
      %v2022 = vpop.permute.xlu0 %2021
      %v2024 = vsel %vm1483, %v1480, 0
      %v2026 = vsel %vm353, %v2022, 0
      %2028 = vmatprep.subr.mxu0 0.0
      %2029 = vmatpush1.msra.mxu0 %v2026
      %2030 = vmatprep.subr.mxu0 0.0
      %2031 = vmatpush1.msra.mxu0 0.0
      %2032 = vmatprep.subr.mxu0 0.0
      %2033 = vmatpush1.msra.mxu0 0.0
      %2034 = vmatprep.subr.mxu0 0.0
      %2035 = vmatpush1.msra.mxu0 0.0
      %2036 = vmatprep.subr.mxu0 0.0
      %2037 = vmatpush1.msra.mxu0 0.0
      %2038 = vmatprep.subr.mxu0 0.0
      %2039 = vmatpush1.msra.mxu0 0.0
      %2040 = vmatprep.subr.mxu0 0.0
      %2041 = vmatpush1.msra.mxu0 0.0
      %2042 = vmatprep.subr.mxu0 0.0
      %2043 = vmatpush1.msra.mxu0 0.0
      %2044 = vmatprep.subr.mxu0 0.0
      %2045 = vmatpush1.msra.mxu0 0.0
      %2046 = vmatprep.subr.mxu0 0.0
      %2047 = vmatpush1.msra.mxu0 0.0
      %2048 = vmatprep.subr.mxu0 0.0
      %2049 = vmatpush1.msra.mxu0 0.0
      %2050 = vmatprep.subr.mxu0 0.0
      %2051 = vmatpush1.msra.mxu0 0.0
      %2052 = vmatprep.subr.mxu0 0.0
      %2053 = vmatpush1.msra.mxu0 0.0
      %2054 = vmatprep.subr.mxu0 0.0
      %2055 = vmatpush1.msra.mxu0 0.0
      %2056 = vmatprep.subr.mxu0 0.0
      %2057 = vmatpush1.msra.mxu0 0.0
      %2058 = vmatprep.subr.mxu0 0.0
      %2059 = vmatpush1.msra.mxu0 0.0
      %2060 = vmatprep.subr.mxu0 0.0
      %2061 = vmatpush1.msra.mxu0 0.0
      %2062 = vmatprep.subr.mxu0 0.0
      %2063 = vmatpush1.msra.mxu0 0.0
      %2064 = vmatprep.subr.mxu0 0.0
      %2065 = vmatpush1.msra.mxu0 0.0
      %2066 = vmatprep.subr.mxu0 0.0
      %2067 = vmatpush1.msra.mxu0 0.0
      %2068 = vmatprep.subr.mxu0 0.0
      %2069 = vmatpush1.msra.mxu0 0.0
      %2070 = vmatprep.subr.mxu0 0.0
      %2071 = vmatpush1.msra.mxu0 0.0
      %2072 = vmatprep.subr.mxu0 0.0
      %2073 = vmatpush1.msra.mxu0 0.0
      %2074 = vmatprep.subr.mxu0 0.0
      %2075 = vmatpush1.msra.mxu0 0.0
      %2076 = vmatprep.subr.mxu0 0.0
      %2077 = vmatpush1.msra.mxu0 0.0
      %2078 = vmatprep.subr.mxu0 0.0
      %2079 = vmatpush1.msra.mxu0 0.0
      %2080 = vmatprep.subr.mxu0 0.0
      %2081 = vmatpush1.msra.mxu0 0.0
      %2082 = vmatprep.subr.mxu0 0.0
      %2083 = vmatpush1.msra.mxu0 0.0
      %2084 = vmatprep.subr.mxu0 0.0
      %2085 = vmatpush1.msra.mxu0 0.0
      %2086 = vmatprep.subr.mxu0 0.0
      %2087 = vmatpush1.msra.mxu0 0.0
      %2088 = vmatprep.subr.mxu0 0.0
      %2089 = vmatpush1.msra.mxu0 0.0
      %2090 = vmatprep.subr.mxu0 0.0
      %2091 = vmatpush1.msra.mxu0 0.0
      %2092 = vmatprep.mubr.f32.mxu0 0.0
      %2093 = vmatmul.mubr.f32.gmra.mrb[0].mxu0 %v2024
      %v2094 = vpop.f32.mrb[0].mxu0
      %v2095 = vadd.f32 0.0, %v2094
      %v2096 = vpop.f32.mrb[0].mxu0
      %2097 = vdwg.mxu0
      %2098 = vrot.lane.b32.xlu0 %v661, 120
      %v2099 = vpop.permute.xlu0 %2098
      %2100 = vrot.lane.b32.xlu0 %v748, 120
      %v2101 = vpop.permute.xlu0 %2100
      %v2102 = vsel %vm782, %v2099, 0
      %v2104 = vsel %vm782, %v2101, 0
      %2106 = vmatprep.subr.mxu0 0.0
      %2107 = vmatpush1.xpose.msra.mxu0 %v2104
      %2108 = vmatprep.subr.mxu0 0.0
      %2109 = vmatpush1.xpose.msra.mxu0 0.0
      %2110 = vmatprep.subr.mxu0 0.0
      %2111 = vmatpush1.xpose.msra.mxu0 0.0
      %2112 = vmatprep.subr.mxu0 0.0
      %2113 = vmatpush1.xpose.msra.mxu0 0.0
      %2114 = vmatprep.subr.mxu0 0.0
      %2115 = vmatpush1.xpose.msra.mxu0 0.0
      %2116 = vmatprep.subr.mxu0 0.0
      %2117 = vmatpush1.xpose.msra.mxu0 0.0
      %2118 = vmatprep.subr.mxu0 0.0
      %2119 = vmatpush1.xpose.msra.mxu0 0.0
      %2120 = vmatprep.subr.mxu0 0.0
      %2121 = vmatpush1.xpose.msra.mxu0 0.0
      %2122 = vmatprep.subr.mxu0 0.0
      %2123 = vmatpush1.xpose.msra.mxu0 0.0
      %2124 = vmatprep.subr.mxu0 0.0
      %2125 = vmatpush1.xpose.msra.mxu0 0.0
      %2126 = vmatprep.subr.mxu0 0.0
      %2127 = vmatpush1.xpose.msra.mxu0 0.0
      %2128 = vmatprep.subr.mxu0 0.0
      %2129 = vmatpush1.xpose.msra.mxu0 0.0
      %2130 = vmatprep.subr.mxu0 0.0
      %2131 = vmatpush1.xpose.msra.mxu0 0.0
      %2132 = vmatprep.subr.mxu0 0.0
      %2133 = vmatpush1.xpose.msra.mxu0 0.0
      %2134 = vmatprep.subr.mxu0 0.0
      %2135 = vmatpush1.xpose.msra.mxu0 0.0
      %2136 = vmatprep.subr.mxu0 0.0
      %2137 = vmatpush1.xpose.msra.mxu0 0.0
      %2138 = vmatprep.subr.mxu0 0.0
      %2139 = vmatpush1.xpose.msra.mxu0 0.0
      %2140 = vmatprep.subr.mxu0 0.0
      %2141 = vmatpush1.xpose.msra.mxu0 0.0
      %2142 = vmatprep.subr.mxu0 0.0
      %2143 = vmatpush1.xpose.msra.mxu0 0.0
      %2144 = vmatprep.subr.mxu0 0.0
      %2145 = vmatpush1.xpose.msra.mxu0 0.0
      %2146 = vmatprep.subr.mxu0 0.0
      %2147 = vmatpush1.xpose.msra.mxu0 0.0
      %2148 = vmatprep.subr.mxu0 0.0
      %2149 = vmatpush1.xpose.msra.mxu0 0.0
      %2150 = vmatprep.subr.mxu0 0.0
      %2151 = vmatpush1.xpose.msra.mxu0 0.0
      %2152 = vmatprep.subr.mxu0 0.0
      %2153 = vmatpush1.xpose.msra.mxu0 0.0
      %2154 = vmatprep.subr.mxu0 0.0
      %2155 = vmatpush1.xpose.msra.mxu0 0.0
      %2156 = vmatprep.subr.mxu0 0.0
      %2157 = vmatpush1.xpose.msra.mxu0 0.0
      %2158 = vmatprep.subr.mxu0 0.0
      %2159 = vmatpush1.xpose.msra.mxu0 0.0
      %2160 = vmatprep.subr.mxu0 0.0
      %2161 = vmatpush1.xpose.msra.mxu0 0.0
      %2162 = vmatprep.subr.mxu0 0.0
      %2163 = vmatpush1.xpose.msra.mxu0 0.0
      %2164 = vmatprep.subr.mxu0 0.0
      %2165 = vmatpush1.xpose.msra.mxu0 0.0
      %2166 = vmatprep.subr.mxu0 0.0
      %2167 = vmatpush1.xpose.msra.mxu0 0.0
      %2168 = vmatprep.subr.mxu0 0.0
      %2169 = vmatpush1.xpose.msra.mxu0 0.0
      %2170 = vmatprep.mubr.f32.mxu0 0.0
      %2171 = vmatmul.mubr.f32.gmra.mrb[0].mxu0 %v2102
      %v2172 = vpop.f32.mrb[0].mxu0
      %v2173 = vadd.f32 0.0, %v2172
      %v2174 = vpop.f32.mrb[0].mxu0
      %2175 = vdwg.mxu0
      %2176 = vrot.lane.b32.xlu0 %v770, 120
      %v2177 = vpop.permute.xlu0 %2176
      %2178 = vrot.lane.b32.xlu0 %v778, 120
      %v2179 = vpop.permute.xlu0 %2178
      %v2180 = vsel %vm782, %v2177, 0
      %v2182 = vsel %vm782, %v2179, 0
      %2184 = vmatprep.subr.mxu0 0.0
      %2185 = vmatpush1.xpose.msra.mxu0 %v2182
      %2186 = vmatprep.subr.mxu0 0.0
      %2187 = vmatpush1.xpose.msra.mxu0 0.0
      %2188 = vmatprep.subr.mxu0 0.0
      %2189 = vmatpush1.xpose.msra.mxu0 0.0
      %2190 = vmatprep.subr.mxu0 0.0
      %2191 = vmatpush1.xpose.msra.mxu0 0.0
      %2192 = vmatprep.subr.mxu0 0.0
      %2193 = vmatpush1.xpose.msra.mxu0 0.0
      %2194 = vmatprep.subr.mxu0 0.0
      %2195 = vmatpush1.xpose.msra.mxu0 0.0
      %2196 = vmatprep.subr.mxu0 0.0
      %2197 = vmatpush1.xpose.msra.mxu0 0.0
      %2198 = vmatprep.subr.mxu0 0.0
      %2199 = vmatpush1.xpose.msra.mxu0 0.0
      %2200 = vmatprep.subr.mxu0 0.0
      %2201 = vmatpush1.xpose.msra.mxu0 0.0
      %2202 = vmatprep.subr.mxu0 0.0
      %2203 = vmatpush1.xpose.msra.mxu0 0.0
      %2204 = vmatprep.subr.mxu0 0.0
      %2205 = vmatpush1.xpose.msra.mxu0 0.0
      %2206 = vmatprep.subr.mxu0 0.0
      %2207 = vmatpush1.xpose.msra.mxu0 0.0
      %2208 = vmatprep.subr.mxu0 0.0
      %2209 = vmatpush1.xpose.msra.mxu0 0.0
      %2210 = vmatprep.subr.mxu0 0.0
      %2211 = vmatpush1.xpose.msra.mxu0 0.0
      %2212 = vmatprep.subr.mxu0 0.0
      %2213 = vmatpush1.xpose.msra.mxu0 0.0
      %2214 = vmatprep.subr.mxu0 0.0
      %2215 = vmatpush1.xpose.msra.mxu0 0.0
      %2216 = vmatprep.subr.mxu0 0.0
      %2217 = vmatpush1.xpose.msra.mxu0 0.0
      %2218 = vmatprep.subr.mxu0 0.0
      %2219 = vmatpush1.xpose.msra.mxu0 0.0
      %2220 = vmatprep.subr.mxu0 0.0
      %2221 = vmatpush1.xpose.msra.mxu0 0.0
      %2222 = vmatprep.subr.mxu0 0.0
      %2223 = vmatpush1.xpose.msra.mxu0 0.0
      %2224 = vmatprep.subr.mxu0 0.0
      %2225 = vmatpush1.xpose.msra.mxu0 0.0
      %2226 = vmatprep.subr.mxu0 0.0
      %2227 = vmatpush1.xpose.msra.mxu0 0.0
      %2228 = vmatprep.subr.mxu0 0.0
      %2229 = vmatpush1.xpose.msra.mxu0 0.0
      %2230 = vmatprep.subr.mxu0 0.0
      %2231 = vmatpush1.xpose.msra.mxu0 0.0
      %2232 = vmatprep.subr.mxu0 0.0
      %2233 = vmatpush1.xpose.msra.mxu0 0.0
      %2234 = vmatprep.subr.mxu0 0.0
      %2235 = vmatpush1.xpose.msra.mxu0 0.0
      %2236 = vmatprep.subr.mxu0 0.0
      %2237 = vmatpush1.xpose.msra.mxu0 0.0
      %2238 = vmatprep.subr.mxu0 0.0
      %2239 = vmatpush1.xpose.msra.mxu0 0.0
      %2240 = vmatprep.subr.mxu0 0.0
      %2241 = vmatpush1.xpose.msra.mxu0 0.0
      %2242 = vmatprep.subr.mxu0 0.0
      %2243 = vmatpush1.xpose.msra.mxu0 0.0
      %2244 = vmatprep.subr.mxu0 0.0
      %2245 = vmatpush1.xpose.msra.mxu0 0.0
      %2246 = vmatprep.subr.mxu0 0.0
      %2247 = vmatpush1.xpose.msra.mxu0 0.0
      %2248 = vmatprep.mubr.f32.mxu0 0.0
      %2249 = vmatmul.mubr.f32.gmra.mrb[0].mxu0 %v2180
      %v2250 = vpop.f32.mrb[0].mxu0
      %v2251 = vadd.f32 0.0, %v2250
      %v2252 = vpop.f32.mrb[0].mxu0
      %2253 = vdwg.mxu0
      %2254 = vrot.lane.b32.xlu0 %v666, 120
      %v2255 = vpop.permute.xlu0 %2254
      %2256 = vrot.lane.b32.xlu0 %v753, 120
      %v2257 = vpop.permute.xlu0 %2256
      %v2258 = vsel %vm782, %v2255, 0
      %v2260 = vsel %vm782, %v2257, 0
      %2262 = vmatprep.subr.mxu0 0.0
      %2263 = vmatpush1.xpose.msra.mxu0 %v2260
      %2264 = vmatprep.subr.mxu0 0.0
      %2265 = vmatpush1.xpose.msra.mxu0 0.0
      %2266 = vmatprep.subr.mxu0 0.0
      %2267 = vmatpush1.xpose.msra.mxu0 0.0
      %2268 = vmatprep.subr.mxu0 0.0
      %2269 = vmatpush1.xpose.msra.mxu0 0.0
      %2270 = vmatprep.subr.mxu0 0.0
      %2271 = vmatpush1.xpose.msra.mxu0 0.0
      %2272 = vmatprep.subr.mxu0 0.0
      %2273 = vmatpush1.xpose.msra.mxu0 0.0
      %2274 = vmatprep.subr.mxu0 0.0
      %2275 = vmatpush1.xpose.msra.mxu0 0.0
      %2276 = vmatprep.subr.mxu0 0.0
      %2277 = vmatpush1.xpose.msra.mxu0 0.0
      %2278 = vmatprep.subr.mxu0 0.0
      %2279 = vmatpush1.xpose.msra.mxu0 0.0
      %2280 = vmatprep.subr.mxu0 0.0
      %2281 = vmatpush1.xpose.msra.mxu0 0.0
      %2282 = vmatprep.subr.mxu0 0.0
      %2283 = vmatpush1.xpose.msra.mxu0 0.0
      %2284 = vmatprep.subr.mxu0 0.0
      %2285 = vmatpush1.xpose.msra.mxu0 0.0
      %2286 = vmatprep.subr.mxu0 0.0
      %2287 = vmatpush1.xpose.msra.mxu0 0.0
      %2288 = vmatprep.subr.mxu0 0.0
      %2289 = vmatpush1.xpose.msra.mxu0 0.0
      %2290 = vmatprep.subr.mxu0 0.0
      %2291 = vmatpush1.xpose.msra.mxu0 0.0
      %2292 = vmatprep.subr.mxu0 0.0
      %2293 = vmatpush1.xpose.msra.mxu0 0.0
      %2294 = vmatprep.subr.mxu0 0.0
      %2295 = vmatpush1.xpose.msra.mxu0 0.0
      %2296 = vmatprep.subr.mxu0 0.0
      %2297 = vmatpush1.xpose.msra.mxu0 0.0
      %2298 = vmatprep.subr.mxu0 0.0
      %2299 = vmatpush1.xpose.msra.mxu0 0.0
      %2300 = vmatprep.subr.mxu0 0.0
      %2301 = vmatpush1.xpose.msra.mxu0 0.0
      %2302 = vmatprep.subr.mxu0 0.0
      %2303 = vmatpush1.xpose.msra.mxu0 0.0
      %2304 = vmatprep.subr.mxu0 0.0
      %2305 = vmatpush1.xpose.msra.mxu0 0.0
      %2306 = vmatprep.subr.mxu0 0.0
      %2307 = vmatpush1.xpose.msra.mxu0 0.0
      %2308 = vmatprep.subr.mxu0 0.0
      %2309 = vmatpush1.xpose.msra.mxu0 0.0
      %2310 = vmatprep.subr.mxu0 0.0
      %2311 = vmatpush1.xpose.msra.mxu0 0.0
      %2312 = vmatprep.subr.mxu0 0.0
      %2313 = vmatpush1.xpose.msra.mxu0 0.0
      %2314 = vmatprep.subr.mxu0 0.0
      %2315 = vmatpush1.xpose.msra.mxu0 0.0
      %2316 = vmatprep.subr.mxu0 0.0
      %2317 = vmatpush1.xpose.msra.mxu0 0.0
      %2318 = vmatprep.subr.mxu0 0.0
      %2319 = vmatpush1.xpose.msra.mxu0 0.0
      %2320 = vmatprep.subr.mxu0 0.0
      %2321 = vmatpush1.xpose.msra.mxu0 0.0
      %2322 = vmatprep.subr.mxu0 0.0
      %2323 = vmatpush1.xpose.msra.mxu0 0.0
      %2324 = vmatprep.subr.mxu0 0.0
      %2325 = vmatpush1.xpose.msra.mxu0 0.0
      %2326 = vmatprep.mubr.f32.mxu0 0.0
      %2327 = vmatmul.mubr.f32.gmra.mrb[0].mxu0 %v2258
      %v2328 = vpop.f32.mrb[0].mxu0
      %v2329 = vadd.f32 0.0, %v2328
      %v2330 = vpop.f32.mrb[0].mxu0
      %2331 = vdwg.mxu0
      %2332 = vrot.lane.b32.xlu0 %v771, 120
      %v2333 = vpop.permute.xlu0 %2332
      %2334 = vrot.lane.b32.xlu0 %v779, 120
      %v2335 = vpop.permute.xlu0 %2334
      %v2336 = vsel %vm782, %v2333, 0
      %v2338 = vsel %vm782, %v2335, 0
      %2340 = vmatprep.subr.mxu0 0.0
      %2341 = vmatpush1.xpose.msra.mxu0 %v2338
      %2342 = vmatprep.subr.mxu0 0.0
      %2343 = vmatpush1.xpose.msra.mxu0 0.0
      %2344 = vmatprep.subr.mxu0 0.0
      %2345 = vmatpush1.xpose.msra.mxu0 0.0
      %2346 = vmatprep.subr.mxu0 0.0
      %2347 = vmatpush1.xpose.msra.mxu0 0.0
      %2348 = vmatprep.subr.mxu0 0.0
      %2349 = vmatpush1.xpose.msra.mxu0 0.0
      %2350 = vmatprep.subr.mxu0 0.0
      %2351 = vmatpush1.xpose.msra.mxu0 0.0
      %2352 = vmatprep.subr.mxu0 0.0
      %2353 = vmatpush1.xpose.msra.mxu0 0.0
      %2354 = vmatprep.subr.mxu0 0.0
      %2355 = vmatpush1.xpose.msra.mxu0 0.0
      %2356 = vmatprep.subr.mxu0 0.0
      %2357 = vmatpush1.xpose.msra.mxu0 0.0
      %2358 = vmatprep.subr.mxu0 0.0
      %2359 = vmatpush1.xpose.msra.mxu0 0.0
      %2360 = vmatprep.subr.mxu0 0.0
      %2361 = vmatpush1.xpose.msra.mxu0 0.0
      %2362 = vmatprep.subr.mxu0 0.0
      %2363 = vmatpush1.xpose.msra.mxu0 0.0
      %2364 = vmatprep.subr.mxu0 0.0
      %2365 = vmatpush1.xpose.msra.mxu0 0.0
      %2366 = vmatprep.subr.mxu0 0.0
      %2367 = vmatpush1.xpose.msra.mxu0 0.0
      %2368 = vmatprep.subr.mxu0 0.0
      %2369 = vmatpush1.xpose.msra.mxu0 0.0
      %2370 = vmatprep.subr.mxu0 0.0
      %2371 = vmatpush1.xpose.msra.mxu0 0.0
      %2372 = vmatprep.subr.mxu0 0.0
      %2373 = vmatpush1.xpose.msra.mxu0 0.0
      %2374 = vmatprep.subr.mxu0 0.0
      %2375 = vmatpush1.xpose.msra.mxu0 0.0
      %2376 = vmatprep.subr.mxu0 0.0
      %2377 = vmatpush1.xpose.msra.mxu0 0.0
      %2378 = vmatprep.subr.mxu0 0.0
      %2379 = vmatpush1.xpose.msra.mxu0 0.0
      %2380 = vmatprep.subr.mxu0 0.0
      %2381 = vmatpush1.xpose.msra.mxu0 0.0
      %2382 = vmatprep.subr.mxu0 0.0
      %2383 = vmatpush1.xpose.msra.mxu0 0.0
      %2384 = vmatprep.subr.mxu0 0.0
      %2385 = vmatpush1.xpose.msra.mxu0 0.0
      %2386 = vmatprep.subr.mxu0 0.0
      %2387 = vmatpush1.xpose.msra.mxu0 0.0
      %2388 = vmatprep.subr.mxu0 0.0
      %2389 = vmatpush1.xpose.msra.mxu0 0.0
      %2390 = vmatprep.subr.mxu0 0.0
      %2391 = vmatpush1.xpose.msra.mxu0 0.0
      %2392 = vmatprep.subr.mxu0 0.0
      %2393 = vmatpush1.xpose.msra.mxu0 0.0
      %2394 = vmatprep.subr.mxu0 0.0
      %2395 = vmatpush1.xpose.msra.mxu0 0.0
      %2396 = vmatprep.subr.mxu0 0.0
      %2397 = vmatpush1.xpose.msra.mxu0 0.0
      %2398 = vmatprep.subr.mxu0 0.0
      %2399 = vmatpush1.xpose.msra.mxu0 0.0
      %2400 = vmatprep.subr.mxu0 0.0
      %2401 = vmatpush1.xpose.msra.mxu0 0.0
      %2402 = vmatprep.subr.mxu0 0.0
      %2403 = vmatpush1.xpose.msra.mxu0 0.0
      %2404 = vmatprep.mubr.f32.mxu0 0.0
      %2405 = vmatmul.mubr.f32.gmra.mrb[0].mxu0 %v2336
      %v2406 = vpop.f32.mrb[0].mxu0
      %v2407 = vadd.f32 0.0, %v2406
      %v2408 = vpop.f32.mrb[0].mxu0
      %2409 = vdwg.mxu0
      %2410 = vrot.lane.b32.xlu0 %v671, 120
      %v2411 = vpop.permute.xlu0 %2410
      %2412 = vrot.lane.b32.xlu0 %v758, 120
      %v2413 = vpop.permute.xlu0 %2412
      %v2414 = vsel %vm782, %v2411, 0
      %v2416 = vsel %vm782, %v2413, 0
      %2418 = vmatprep.subr.mxu0 0.0
      %2419 = vmatpush1.xpose.msra.mxu0 %v2416
      %2420 = vmatprep.subr.mxu0 0.0
      %2421 = vmatpush1.xpose.msra.mxu0 0.0
      %2422 = vmatprep.subr.mxu0 0.0
      %2423 = vmatpush1.xpose.msra.mxu0 0.0
      %2424 = vmatprep.subr.mxu0 0.0
      %2425 = vmatpush1.xpose.msra.mxu0 0.0
      %2426 = vmatprep.subr.mxu0 0.0
      %2427 = vmatpush1.xpose.msra.mxu0 0.0
      %2428 = vmatprep.subr.mxu0 0.0
      %2429 = vmatpush1.xpose.msra.mxu0 0.0
      %2430 = vmatprep.subr.mxu0 0.0
      %2431 = vmatpush1.xpose.msra.mxu0 0.0
      %2432 = vmatprep.subr.mxu0 0.0
      %2433 = vmatpush1.xpose.msra.mxu0 0.0
      %2434 = vmatprep.subr.mxu0 0.0
      %2435 = vmatpush1.xpose.msra.mxu0 0.0
      %2436 = vmatprep.subr.mxu0 0.0
      %2437 = vmatpush1.xpose.msra.mxu0 0.0
      %2438 = vmatprep.subr.mxu0 0.0
      %2439 = vmatpush1.xpose.msra.mxu0 0.0
      %2440 = vmatprep.subr.mxu0 0.0
      %2441 = vmatpush1.xpose.msra.mxu0 0.0
      %2442 = vmatprep.subr.mxu0 0.0
      %2443 = vmatpush1.xpose.msra.mxu0 0.0
      %2444 = vmatprep.subr.mxu0 0.0
      %2445 = vmatpush1.xpose.msra.mxu0 0.0
      %2446 = vmatprep.subr.mxu0 0.0
      %2447 = vmatpush1.xpose.msra.mxu0 0.0
      %2448 = vmatprep.subr.mxu0 0.0
      %2449 = vmatpush1.xpose.msra.mxu0 0.0
      %2450 = vmatprep.subr.mxu0 0.0
      %2451 = vmatpush1.xpose.msra.mxu0 0.0
      %2452 = vmatprep.subr.mxu0 0.0
      %2453 = vmatpush1.xpose.msra.mxu0 0.0
      %2454 = vmatprep.subr.mxu0 0.0
      %2455 = vmatpush1.xpose.msra.mxu0 0.0
      %2456 = vmatprep.subr.mxu0 0.0
      %2457 = vmatpush1.xpose.msra.mxu0 0.0
      %2458 = vmatprep.subr.mxu0 0.0
      %2459 = vmatpush1.xpose.msra.mxu0 0.0
      %2460 = vmatprep.subr.mxu0 0.0
      %2461 = vmatpush1.xpose.msra.mxu0 0.0
      %2462 = vmatprep.subr.mxu0 0.0
      %2463 = vmatpush1.xpose.msra.mxu0 0.0
      %2464 = vmatprep.subr.mxu0 0.0
      %2465 = vmatpush1.xpose.msra.mxu0 0.0
      %2466 = vmatprep.subr.mxu0 0.0
      %2467 = vmatpush1.xpose.msra.mxu0 0.0
      %2468 = vmatprep.subr.mxu0 0.0
      %2469 = vmatpush1.xpose.msra.mxu0 0.0
      %2470 = vmatprep.subr.mxu0 0.0
      %2471 = vmatpush1.xpose.msra.mxu0 0.0
      %2472 = vmatprep.subr.mxu0 0.0
      %2473 = vmatpush1.xpose.msra.mxu0 0.0
      %2474 = vmatprep.subr.mxu0 0.0
      %2475 = vmatpush1.xpose.msra.mxu0 0.0
      %2476 = vmatprep.subr.mxu0 0.0
      %2477 = vmatpush1.xpose.msra.mxu0 0.0
      %2478 = vmatprep.subr.mxu0 0.0
      %2479 = vmatpush1.xpose.msra.mxu0 0.0
      %2480 = vmatprep.subr.mxu0 0.0
      %2481 = vmatpush1.xpose.msra.mxu0 0.0
      %2482 = vmatprep.mubr.f32.mxu0 0.0
      %2483 = vmatmul.mubr.f32.gmra.mrb[0].mxu0 %v2414
      %v2484 = vpop.f32.mrb[0].mxu0
      %v2485 = vadd.f32 0.0, %v2484
      %v2486 = vpop.f32.mrb[0].mxu0
      %2487 = vdwg.mxu0
      %2488 = vrot.lane.b32.xlu0 %v772, 120
      %v2489 = vpop.permute.xlu0 %2488
      %2490 = vrot.lane.b32.xlu0 %v780, 120
      %v2491 = vpop.permute.xlu0 %2490
      %v2492 = vsel %vm782, %v2489, 0
      %v2494 = vsel %vm782, %v2491, 0
      %2496 = vmatprep.subr.mxu0 0.0
      %2497 = vmatpush1.xpose.msra.mxu0 %v2494
      %2498 = vmatprep.subr.mxu0 0.0
      %2499 = vmatpush1.xpose.msra.mxu0 0.0
      %2500 = vmatprep.subr.mxu0 0.0
      %2501 = vmatpush1.xpose.msra.mxu0 0.0
      %2502 = vmatprep.subr.mxu0 0.0
      %2503 = vmatpush1.xpose.msra.mxu0 0.0
      %2504 = vmatprep.subr.mxu0 0.0
      %2505 = vmatpush1.xpose.msra.mxu0 0.0
      %2506 = vmatprep.subr.mxu0 0.0
      %2507 = vmatpush1.xpose.msra.mxu0 0.0
      %2508 = vmatprep.subr.mxu0 0.0
      %2509 = vmatpush1.xpose.msra.mxu0 0.0
      %2510 = vmatprep.subr.mxu0 0.0
      %2511 = vmatpush1.xpose.msra.mxu0 0.0
      %2512 = vmatprep.subr.mxu0 0.0
      %2513 = vmatpush1.xpose.msra.mxu0 0.0
      %2514 = vmatprep.subr.mxu0 0.0
      %2515 = vmatpush1.xpose.msra.mxu0 0.0
      %2516 = vmatprep.subr.mxu0 0.0
      %2517 = vmatpush1.xpose.msra.mxu0 0.0
      %2518 = vmatprep.subr.mxu0 0.0
      %2519 = vmatpush1.xpose.msra.mxu0 0.0
      %2520 = vmatprep.subr.mxu0 0.0
      %2521 = vmatpush1.xpose.msra.mxu0 0.0
      %2522 = vmatprep.subr.mxu0 0.0
      %2523 = vmatpush1.xpose.msra.mxu0 0.0
      %2524 = vmatprep.subr.mxu0 0.0
      %2525 = vmatpush1.xpose.msra.mxu0 0.0
      %2526 = vmatprep.subr.mxu0 0.0
      %2527 = vmatpush1.xpose.msra.mxu0 0.0
      %2528 = vmatprep.subr.mxu0 0.0
      %2529 = vmatpush1.xpose.msra.mxu0 0.0
      %2530 = vmatprep.subr.mxu0 0.0
      %2531 = vmatpush1.xpose.msra.mxu0 0.0
      %2532 = vmatprep.subr.mxu0 0.0
      %2533 = vmatpush1.xpose.msra.mxu0 0.0
      %2534 = vmatprep.subr.mxu0 0.0
      %2535 = vmatpush1.xpose.msra.mxu0 0.0
      %2536 = vmatprep.subr.mxu0 0.0
      %2537 = vmatpush1.xpose.msra.mxu0 0.0
      %2538 = vmatprep.subr.mxu0 0.0
      %2539 = vmatpush1.xpose.msra.mxu0 0.0
      %2540 = vmatprep.subr.mxu0 0.0
      %2541 = vmatpush1.xpose.msra.mxu0 0.0
      %2542 = vmatprep.subr.mxu0 0.0
      %2543 = vmatpush1.xpose.msra.mxu0 0.0
      %2544 = vmatprep.subr.mxu0 0.0
      %2545 = vmatpush1.xpose.msra.mxu0 0.0
      %2546 = vmatprep.subr.mxu0 0.0
      %2547 = vmatpush1.xpose.msra.mxu0 0.0
      %2548 = vmatprep.subr.mxu0 0.0
      %2549 = vmatpush1.xpose.msra.mxu0 0.0
      %2550 = vmatprep.subr.mxu0 0.0
      %2551 = vmatpush1.xpose.msra.mxu0 0.0
      %2552 = vmatprep.subr.mxu0 0.0
      %2553 = vmatpush1.xpose.msra.mxu0 0.0
      %2554 = vmatprep.subr.mxu0 0.0
      %2555 = vmatpush1.xpose.msra.mxu0 0.0
      %2556 = vmatprep.subr.mxu0 0.0
      %2557 = vmatpush1.xpose.msra.mxu0 0.0
      %2558 = vmatprep.subr.mxu0 0.0
      %2559 = vmatpush1.xpose.msra.mxu0 0.0
      %2560 = vmatprep.mubr.f32.mxu0 0.0
      %2561 = vmatmul.mubr.f32.gmra.mrb[0].mxu0 %v2492
      %v2562 = vpop.f32.mrb[0].mxu0
      %v2563 = vadd.f32 0.0, %v2562
      %v2564 = vpop.f32.mrb[0].mxu0
      %2565 = vdwg.mxu0
      %2566 = vrot.lane.b32.xlu0 %v676, 120
      %v2567 = vpop.permute.xlu0 %2566
      %2568 = vrot.lane.b32.xlu0 %v763, 120
      %v2569 = vpop.permute.xlu0 %2568
      %v2570 = vsel %vm782, %v2567, 0
      %v2572 = vsel %vm782, %v2569, 0
      %2574 = vmatprep.subr.mxu0 0.0
      %2575 = vmatpush1.xpose.msra.mxu0 %v2572
      %2576 = vmatprep.subr.mxu0 0.0
      %2577 = vmatpush1.xpose.msra.mxu0 0.0
      %2578 = vmatprep.subr.mxu0 0.0
      %2579 = vmatpush1.xpose.msra.mxu0 0.0
      %2580 = vmatprep.subr.mxu0 0.0
      %2581 = vmatpush1.xpose.msra.mxu0 0.0
      %2582 = vmatprep.subr.mxu0 0.0
      %2583 = vmatpush1.xpose.msra.mxu0 0.0
      %2584 = vmatprep.subr.mxu0 0.0
      %2585 = vmatpush1.xpose.msra.mxu0 0.0
      %2586 = vmatprep.subr.mxu0 0.0
      %2587 = vmatpush1.xpose.msra.mxu0 0.0
      %2588 = vmatprep.subr.mxu0 0.0
      %2589 = vmatpush1.xpose.msra.mxu0 0.0
      %2590 = vmatprep.subr.mxu0 0.0
      %2591 = vmatpush1.xpose.msra.mxu0 0.0
      %2592 = vmatprep.subr.mxu0 0.0
      %2593 = vmatpush1.xpose.msra.mxu0 0.0
      %2594 = vmatprep.subr.mxu0 0.0
      %2595 = vmatpush1.xpose.msra.mxu0 0.0
      %2596 = vmatprep.subr.mxu0 0.0
      %2597 = vmatpush1.xpose.msra.mxu0 0.0
      %2598 = vmatprep.subr.mxu0 0.0
      %2599 = vmatpush1.xpose.msra.mxu0 0.0
      %2600 = vmatprep.subr.mxu0 0.0
      %2601 = vmatpush1.xpose.msra.mxu0 0.0
      %2602 = vmatprep.subr.mxu0 0.0
      %2603 = vmatpush1.xpose.msra.mxu0 0.0
      %2604 = vmatprep.subr.mxu0 0.0
      %2605 = vmatpush1.xpose.msra.mxu0 0.0
      %2606 = vmatprep.subr.mxu0 0.0
      %2607 = vmatpush1.xpose.msra.mxu0 0.0
      %2608 = vmatprep.subr.mxu0 0.0
      %2609 = vmatpush1.xpose.msra.mxu0 0.0
      %2610 = vmatprep.subr.mxu0 0.0
      %2611 = vmatpush1.xpose.msra.mxu0 0.0
      %2612 = vmatprep.subr.mxu0 0.0
      %2613 = vmatpush1.xpose.msra.mxu0 0.0
      %2614 = vmatprep.subr.mxu0 0.0
      %2615 = vmatpush1.xpose.msra.mxu0 0.0
      %2616 = vmatprep.subr.mxu0 0.0
      %2617 = vmatpush1.xpose.msra.mxu0 0.0
      %2618 = vmatprep.subr.mxu0 0.0
      %2619 = vmatpush1.xpose.msra.mxu0 0.0
      %2620 = vmatprep.subr.mxu0 0.0
      %2621 = vmatpush1.xpose.msra.mxu0 0.0
      %2622 = vmatprep.subr.mxu0 0.0
      %2623 = vmatpush1.xpose.msra.mxu0 0.0
      %2624 = vmatprep.subr.mxu0 0.0
      %2625 = vmatpush1.xpose.msra.mxu0 0.0
      %2626 = vmatprep.subr.mxu0 0.0
      %2627 = vmatpush1.xpose.msra.mxu0 0.0
      %2628 = vmatprep.subr.mxu0 0.0
      %2629 = vmatpush1.xpose.msra.mxu0 0.0
      %2630 = vmatprep.subr.mxu0 0.0
      %2631 = vmatpush1.xpose.msra.mxu0 0.0
      %2632 = vmatprep.subr.mxu0 0.0
      %2633 = vmatpush1.xpose.msra.mxu0 0.0
      %2634 = vmatprep.subr.mxu0 0.0
      %2635 = vmatpush1.xpose.msra.mxu0 0.0
      %2636 = vmatprep.subr.mxu0 0.0
      %2637 = vmatpush1.xpose.msra.mxu0 0.0
      %2638 = vmatprep.mubr.f32.mxu0 0.0
      %2639 = vmatmul.mubr.f32.gmra.mrb[0].mxu0 %v2570
      %v2640 = vpop.f32.mrb[0].mxu0
      %v2641 = vadd.f32 0.0, %v2640
      %v2642 = vpop.f32.mrb[0].mxu0
      %2643 = vdwg.mxu0
      %2644 = vrot.lane.b32.xlu0 %v773, 120
      %v2645 = vpop.permute.xlu0 %2644
      %2646 = vrot.lane.b32.xlu0 %v781, 120
      %v2647 = vpop.permute.xlu0 %2646
      %v2648 = vsel %vm782, %v2645, 0
      %v2650 = vsel %vm782, %v2647, 0
      %2652 = vmatprep.subr.mxu0 0.0
      %2653 = vmatpush1.xpose.msra.mxu0 %v2650
      %2654 = vmatprep.subr.mxu0 0.0
      %2655 = vmatpush1.xpose.msra.mxu0 0.0
      %2656 = vmatprep.subr.mxu0 0.0
      %2657 = vmatpush1.xpose.msra.mxu0 0.0
      %2658 = vmatprep.subr.mxu0 0.0
      %2659 = vmatpush1.xpose.msra.mxu0 0.0
      %2660 = vmatprep.subr.mxu0 0.0
      %2661 = vmatpush1.xpose.msra.mxu0 0.0
      %2662 = vmatprep.subr.mxu0 0.0
      %2663 = vmatpush1.xpose.msra.mxu0 0.0
      %2664 = vmatprep.subr.mxu0 0.0
      %2665 = vmatpush1.xpose.msra.mxu0 0.0
      %2666 = vmatprep.subr.mxu0 0.0
      %2667 = vmatpush1.xpose.msra.mxu0 0.0
      %2668 = vmatprep.subr.mxu0 0.0
      %2669 = vmatpush1.xpose.msra.mxu0 0.0
      %2670 = vmatprep.subr.mxu0 0.0
      %2671 = vmatpush1.xpose.msra.mxu0 0.0
      %2672 = vmatprep.subr.mxu0 0.0
      %2673 = vmatpush1.xpose.msra.mxu0 0.0
      %2674 = vmatprep.subr.mxu0 0.0
      %2675 = vmatpush1.xpose.msra.mxu0 0.0
      %2676 = vmatprep.subr.mxu0 0.0
      %2677 = vmatpush1.xpose.msra.mxu0 0.0
      %2678 = vmatprep.subr.mxu0 0.0
      %2679 = vmatpush1.xpose.msra.mxu0 0.0
      %2680 = vmatprep.subr.mxu0 0.0
      %2681 = vmatpush1.xpose.msra.mxu0 0.0
      %2682 = vmatprep.subr.mxu0 0.0
      %2683 = vmatpush1.xpose.msra.mxu0 0.0
      %2684 = vmatprep.subr.mxu0 0.0
      %2685 = vmatpush1.xpose.msra.mxu0 0.0
      %2686 = vmatprep.subr.mxu0 0.0
      %2687 = vmatpush1.xpose.msra.mxu0 0.0
      %2688 = vmatprep.subr.mxu0 0.0
      %2689 = vmatpush1.xpose.msra.mxu0 0.0
      %2690 = vmatprep.subr.mxu0 0.0
      %2691 = vmatpush1.xpose.msra.mxu0 0.0
      %2692 = vmatprep.subr.mxu0 0.0
      %2693 = vmatpush1.xpose.msra.mxu0 0.0
      %2694 = vmatprep.subr.mxu0 0.0
      %2695 = vmatpush1.xpose.msra.mxu0 0.0
      %2696 = vmatprep.subr.mxu0 0.0
      %2697 = vmatpush1.xpose.msra.mxu0 0.0
      %2698 = vmatprep.subr.mxu0 0.0
      %2699 = vmatpush1.xpose.msra.mxu0 0.0
      %2700 = vmatprep.subr.mxu0 0.0
      %2701 = vmatpush1.xpose.msra.mxu0 0.0
      %2702 = vmatprep.subr.mxu0 0.0
      %2703 = vmatpush1.xpose.msra.mxu0 0.0
      %2704 = vmatprep.subr.mxu0 0.0
      %2705 = vmatpush1.xpose.msra.mxu0 0.0
      %2706 = vmatprep.subr.mxu0 0.0
      %2707 = vmatpush1.xpose.msra.mxu0 0.0
      %2708 = vmatprep.subr.mxu0 0.0
      %2709 = vmatpush1.xpose.msra.mxu0 0.0
      %2710 = vmatprep.subr.mxu0 0.0
      %2711 = vmatpush1.xpose.msra.mxu0 0.0
      %2712 = vmatprep.subr.mxu0 0.0
      %2713 = vmatpush1.xpose.msra.mxu0 0.0
      %2714 = vmatprep.subr.mxu0 0.0
      %2715 = vmatpush1.xpose.msra.mxu0 0.0
      %2716 = vmatprep.mubr.f32.mxu0 0.0
      %2717 = vmatmul.mubr.f32.gmra.mrb[0].mxu0 %v2648
      %v2718 = vpop.f32.mrb[0].mxu0
      %v2719 = vadd.f32 0.0, %v2718
      %v2720 = vpop.f32.mrb[0].mxu0
      %2721 = vdwg.mxu0
      %v2722 = vmul.f32 %v2173, 0.35355338
      %v2723 = vmul.f32 %v2251, 0.35355338
      %v2724 = vmul.f32 %v2329, 0.35355338
      %v2725 = vmul.f32 %v2407, 0.35355338
      %v2726 = vmul.f32 %v2485, 0.35355338
      %v2727 = vmul.f32 %v2563, 0.35355338
      %v2728 = vmul.f32 %v2641, 0.35355338
      %v2729 = vmul.f32 %v2719, 0.35355338
      %s2730 = scalar_lea.vmem %s7, 4
      %v2731 = vld [vmem:[%s2730] sm:$0xf]
      %v2732 = vadd.f32 %v2722, %v2731
      %v2733 = vadd.f32 %v2723, %v2731
      %v2734 = vadd.f32 %v2724, %v2731
      %v2735 = vadd.f32 %v2725, %v2731
      %v2736 = vadd.f32 %v2726, %v2731
      %v2737 = vadd.f32 %v2727, %v2731
      %v2738 = vadd.f32 %v2728, %v2731
      %v2739 = vadd.f32 %v2729, %v2731
      %v2740 = vsel %vm1392, %v2732, -inf
      %2741 = vmax.xlane.f32.xlu0 %v2740
      %v2742 = vpop.xlane.xlu0 %2741
      %v2743 = vsel %vm1392, %v2733, -inf
      %2744 = vmax.xlane.f32.xlu0 %v2743
      %v2745 = vpop.xlane.xlu0 %2744
      %v2746 = vsel %vm1392, %v2734, -inf
      %2747 = vmax.xlane.f32.xlu0 %v2746
      %v2748 = vpop.xlane.xlu0 %2747
      %v2749 = vsel %vm1392, %v2735, -inf
      %2750 = vmax.xlane.f32.xlu0 %v2749
      %v2751 = vpop.xlane.xlu0 %2750
      %v2752 = vsel %vm1392, %v2736, -inf
      %2753 = vmax.xlane.f32.xlu0 %v2752
      %v2754 = vpop.xlane.xlu0 %2753
      %v2755 = vsel %vm1392, %v2737, -inf
      %2756 = vmax.xlane.f32.xlu0 %v2755
      %v2757 = vpop.xlane.xlu0 %2756
      %v2758 = vsel %vm1392, %v2738, -inf
      %2759 = vmax.xlane.f32.xlu0 %v2758
      %v2760 = vpop.xlane.xlu0 %2759
      %v2761 = vsel %vm1392, %v2739, -inf
      %2762 = vmax.xlane.f32.xlu0 %v2761
      %v2763 = vpop.xlane.xlu0 %2762
      %v2764 = vsub.f32 %v2732, %v2742
      %v2765 = vsub.f32 %v2733, %v2745
      %v2766 = vsub.f32 %v2734, %v2748
      %v2767 = vsub.f32 %v2735, %v2751
      %v2768 = vsub.f32 %v2736, %v2754
      %v2769 = vsub.f32 %v2737, %v2757
      %v2770 = vsub.f32 %v2738, %v2760
      %v2771 = vsub.f32 %v2739, %v2763
      %v2772 = vmul.f32 %v2764, 1.442695
      %v2773 = vpow.pop %v2772
      %v2774 = vmul.f32 %v2765, 1.442695
      %v2775 = vpow.pop %v2774
      %v2776 = vmul.f32 %v2766, 1.442695
      %v2777 = vpow.pop %v2776
      %v2778 = vmul.f32 %v2767, 1.442695
      %v2779 = vpow.pop %v2778
      %v2780 = vmul.f32 %v2768, 1.442695
      %v2781 = vpow.pop %v2780
      %v2782 = vmul.f32 %v2769, 1.442695
      %v2783 = vpow.pop %v2782
      %v2784 = vmul.f32 %v2770, 1.442695
      %v2785 = vpow.pop %v2784
      %v2786 = vmul.f32 %v2771, 1.442695
      %v2787 = vpow.pop %v2786
      %v2788 = vsel %vm1392, %v2773, 0.0
      %2789 = vadd.xlane.f32.xlu0 %v2788
      %v2790 = vpop.xlane.xlu0 %2789
      %v2791 = vsel %vm1392, %v2775, 0.0
      %2792 = vadd.xlane.f32.xlu0 %v2791
      %v2793 = vpop.xlane.xlu0 %2792
      %v2794 = vsel %vm1392, %v2777, 0.0
      %2795 = vadd.xlane.f32.xlu0 %v2794
      %v2796 = vpop.xlane.xlu0 %2795
      %v2797 = vsel %vm1392, %v2779, 0.0
      %2798 = vadd.xlane.f32.xlu0 %v2797
      %v2799 = vpop.xlane.xlu0 %2798
      %v2800 = vsel %vm1392, %v2781, 0.0
      %2801 = vadd.xlane.f32.xlu0 %v2800
      %v2802 = vpop.xlane.xlu0 %2801
      %v2803 = vsel %vm1392, %v2783, 0.0
      %2804 = vadd.xlane.f32.xlu0 %v2803
      %v2805 = vpop.xlane.xlu0 %2804
      %v2806 = vsel %vm1392, %v2785, 0.0
      %2807 = vadd.xlane.f32.xlu0 %v2806
      %v2808 = vpop.xlane.xlu0 %2807
      %v2809 = vsel %vm1392, %v2787, 0.0
      %2810 = vadd.xlane.f32.xlu0 %v2809
      %v2811 = vpop.xlane.xlu0 %2810
      %v2812 = vrcp.pop %v2790
      %v2813 = vmul.f32 %v2773, %v2812
      %v2814 = vrcp.pop %v2793
      %v2815 = vmul.f32 %v2775, %v2814
      %v2816 = vrcp.pop %v2796
      %v2817 = vmul.f32 %v2777, %v2816
      %v2818 = vrcp.pop %v2799
      %v2819 = vmul.f32 %v2779, %v2818
      %v2820 = vrcp.pop %v2802
      %v2821 = vmul.f32 %v2781, %v2820
      %v2822 = vrcp.pop %v2805
      %v2823 = vmul.f32 %v2783, %v2822
      %v2824 = vrcp.pop %v2808
      %v2825 = vmul.f32 %v2785, %v2824
      %v2826 = vrcp.pop %v2811
      %v2827 = vmul.f32 %v2787, %v2826
      %2828 = vrot.lane.b32.xlu0 %v748, 104
      %v2829 = vpop.permute.xlu0 %2828
      %v2831 = vsel %vm1483, %v2813, 0
      %v2833 = vsel %vm353, %v2829, 0
      %2835 = vmatprep.subr.mxu0 0.0
      %2836 = vmatpush1.msra.mxu0 %v2833
      %2837 = vmatprep.subr.mxu0 0.0
      %2838 = vmatpush1.msra.mxu0 0.0
      %2839 = vmatprep.subr.mxu0 0.0
      %2840 = vmatpush1.msra.mxu0 0.0
      %2841 = vmatprep.subr.mxu0 0.0
      %2842 = vmatpush1.msra.mxu0 0.0
      %2843 = vmatprep.subr.mxu0 0.0
      %2844 = vmatpush1.msra.mxu0 0.0
      %2845 = vmatprep.subr.mxu0 0.0
      %2846 = vmatpush1.msra.mxu0 0.0
      %2847 = vmatprep.subr.mxu0 0.0
      %2848 = vmatpush1.msra.mxu0 0.0
      %2849 = vmatprep.subr.mxu0 0.0
      %2850 = vmatpush1.msra.mxu0 0.0
      %2851 = vmatprep.subr.mxu0 0.0
      %2852 = vmatpush1.msra.mxu0 0.0
      %2853 = vmatprep.subr.mxu0 0.0
      %2854 = vmatpush1.msra.mxu0 0.0
      %2855 = vmatprep.subr.mxu0 0.0
      %2856 = vmatpush1.msra.mxu0 0.0
      %2857 = vmatprep.subr.mxu0 0.0
      %2858 = vmatpush1.msra.mxu0 0.0
      %2859 = vmatprep.subr.mxu0 0.0
      %2860 = vmatpush1.msra.mxu0 0.0
      %2861 = vmatprep.subr.mxu0 0.0
      %2862 = vmatpush1.msra.mxu0 0.0
      %2863 = vmatprep.subr.mxu0 0.0
      %2864 = vmatpush1.msra.mxu0 0.0
      %2865 = vmatprep.subr.mxu0 0.0
      %2866 = vmatpush1.msra.mxu0 0.0
      %2867 = vmatprep.subr.mxu0 0.0
      %2868 = vmatpush1.msra.mxu0 0.0
      %2869 = vmatprep.subr.mxu0 0.0
      %2870 = vmatpush1.msra.mxu0 0.0
      %2871 = vmatprep.subr.mxu0 0.0
      %2872 = vmatpush1.msra.mxu0 0.0
      %2873 = vmatprep.subr.mxu0 0.0
      %2874 = vmatpush1.msra.mxu0 0.0
      %2875 = vmatprep.subr.mxu0 0.0
      %2876 = vmatpush1.msra.mxu0 0.0
      %2877 = vmatprep.subr.mxu0 0.0
      %2878 = vmatpush1.msra.mxu0 0.0
      %2879 = vmatprep.subr.mxu0 0.0
      %2880 = vmatpush1.msra.mxu0 0.0
      %2881 = vmatprep.subr.mxu0 0.0
      %2882 = vmatpush1.msra.mxu0 0.0
      %2883 = vmatprep.subr.mxu0 0.0
      %2884 = vmatpush1.msra.mxu0 0.0
      %2885 = vmatprep.subr.mxu0 0.0
      %2886 = vmatpush1.msra.mxu0 0.0
      %2887 = vmatprep.subr.mxu0 0.0
      %2888 = vmatpush1.msra.mxu0 0.0
      %2889 = vmatprep.subr.mxu0 0.0
      %2890 = vmatpush1.msra.mxu0 0.0
      %2891 = vmatprep.subr.mxu0 0.0
      %2892 = vmatpush1.msra.mxu0 0.0
      %2893 = vmatprep.subr.mxu0 0.0
      %2894 = vmatpush1.msra.mxu0 0.0
      %2895 = vmatprep.subr.mxu0 0.0
      %2896 = vmatpush1.msra.mxu0 0.0
      %2897 = vmatprep.subr.mxu0 0.0
      %2898 = vmatpush1.msra.mxu0 0.0
      %2899 = vmatprep.mubr.f32.mxu0 0.0
      %2900 = vmatmul.mubr.f32.gmra.mrb[0].mxu0 %v2831
      %v2901 = vpop.f32.mrb[0].mxu0
      %v2902 = vadd.f32 0.0, %v2901
      %v2903 = vpop.f32.mrb[0].mxu0
      %2904 = vdwg.mxu0
      %2905 = vrot.lane.b32.xlu0 %v778, 104
      %v2906 = vpop.permute.xlu0 %2905
      %v2908 = vsel %vm1483, %v2815, 0
      %v2910 = vsel %vm353, %v2906, 0
      %2912 = vmatprep.subr.mxu0 0.0
      %2913 = vmatpush1.msra.mxu0 %v2910
      %2914 = vmatprep.subr.mxu0 0.0
      %2915 = vmatpush1.msra.mxu0 0.0
      %2916 = vmatprep.subr.mxu0 0.0
      %2917 = vmatpush1.msra.mxu0 0.0
      %2918 = vmatprep.subr.mxu0 0.0
      %2919 = vmatpush1.msra.mxu0 0.0
      %2920 = vmatprep.subr.mxu0 0.0
      %2921 = vmatpush1.msra.mxu0 0.0
      %2922 = vmatprep.subr.mxu0 0.0
      %2923 = vmatpush1.msra.mxu0 0.0
      %2924 = vmatprep.subr.mxu0 0.0
      %2925 = vmatpush1.msra.mxu0 0.0
      %2926 = vmatprep.subr.mxu0 0.0
      %2927 = vmatpush1.msra.mxu0 0.0
      %2928 = vmatprep.subr.mxu0 0.0
      %2929 = vmatpush1.msra.mxu0 0.0
      %2930 = vmatprep.subr.mxu0 0.0
      %2931 = vmatpush1.msra.mxu0 0.0
      %2932 = vmatprep.subr.mxu0 0.0
      %2933 = vmatpush1.msra.mxu0 0.0
      %2934 = vmatprep.subr.mxu0 0.0
      %2935 = vmatpush1.msra.mxu0 0.0
      %2936 = vmatprep.subr.mxu0 0.0
      %2937 = vmatpush1.msra.mxu0 0.0
      %2938 = vmatprep.subr.mxu0 0.0
      %2939 = vmatpush1.msra.mxu0 0.0
      %2940 = vmatprep.subr.mxu0 0.0
      %2941 = vmatpush1.msra.mxu0 0.0
      %2942 = vmatprep.subr.mxu0 0.0
      %2943 = vmatpush1.msra.mxu0 0.0
      %2944 = vmatprep.subr.mxu0 0.0
      %2945 = vmatpush1.msra.mxu0 0.0
      %2946 = vmatprep.subr.mxu0 0.0
      %2947 = vmatpush1.msra.mxu0 0.0
      %2948 = vmatprep.subr.mxu0 0.0
      %2949 = vmatpush1.msra.mxu0 0.0
      %2950 = vmatprep.subr.mxu0 0.0
      %2951 = vmatpush1.msra.mxu0 0.0
      %2952 = vmatprep.subr.mxu0 0.0
      %2953 = vmatpush1.msra.mxu0 0.0
      %2954 = vmatprep.subr.mxu0 0.0
      %2955 = vmatpush1.msra.mxu0 0.0
      %2956 = vmatprep.subr.mxu0 0.0
      %2957 = vmatpush1.msra.mxu0 0.0
      %2958 = vmatprep.subr.mxu0 0.0
      %2959 = vmatpush1.msra.mxu0 0.0
      %2960 = vmatprep.subr.mxu0 0.0
      %2961 = vmatpush1.msra.mxu0 0.0
      %2962 = vmatprep.subr.mxu0 0.0
      %2963 = vmatpush1.msra.mxu0 0.0
      %2964 = vmatprep.subr.mxu0 0.0
      %2965 = vmatpush1.msra.mxu0 0.0
      %2966 = vmatprep.subr.mxu0 0.0
      %2967 = vmatpush1.msra.mxu0 0.0
      %2968 = vmatprep.subr.mxu0 0.0
      %2969 = vmatpush1.msra.mxu0 0.0
      %2970 = vmatprep.subr.mxu0 0.0
      %2971 = vmatpush1.msra.mxu0 0.0
      %2972 = vmatprep.subr.mxu0 0.0
      %2973 = vmatpush1.msra.mxu0 0.0
      %2974 = vmatprep.subr.mxu0 0.0
      %2975 = vmatpush1.msra.mxu0 0.0
      %2976 = vmatprep.mubr.f32.mxu0 0.0
      %2977 = vmatmul.mubr.f32.gmra.mrb[0].mxu0 %v2908
      %v2978 = vpop.f32.mrb[0].mxu0
      %v2979 = vadd.f32 0.0, %v2978
      %v2980 = vpop.f32.mrb[0].mxu0
      %2981 = vdwg.mxu0
      %2982 = vrot.lane.b32.xlu0 %v753, 104
      %v2983 = vpop.permute.xlu0 %2982
      %v2985 = vsel %vm1483, %v2817, 0
      %v2987 = vsel %vm353, %v2983, 0
      %2989 = vmatprep.subr.mxu0 0.0
      %2990 = vmatpush1.msra.mxu0 %v2987
      %2991 = vmatprep.subr.mxu0 0.0
      %2992 = vmatpush1.msra.mxu0 0.0
      %2993 = vmatprep.subr.mxu0 0.0
      %2994 = vmatpush1.msra.mxu0 0.0
      %2995 = vmatprep.subr.mxu0 0.0
      %2996 = vmatpush1.msra.mxu0 0.0
      %2997 = vmatprep.subr.mxu0 0.0
      %2998 = vmatpush1.msra.mxu0 0.0
      %2999 = vmatprep.subr.mxu0 0.0
      %3000 = vmatpush1.msra.mxu0 0.0
      %3001 = vmatprep.subr.mxu0 0.0
      %3002 = vmatpush1.msra.mxu0 0.0
      %3003 = vmatprep.subr.mxu0 0.0
      %3004 = vmatpush1.msra.mxu0 0.0
      %3005 = vmatprep.subr.mxu0 0.0
      %3006 = vmatpush1.msra.mxu0 0.0
      %3007 = vmatprep.subr.mxu0 0.0
      %3008 = vmatpush1.msra.mxu0 0.0
      %3009 = vmatprep.subr.mxu0 0.0
      %3010 = vmatpush1.msra.mxu0 0.0
      %3011 = vmatprep.subr.mxu0 0.0
      %3012 = vmatpush1.msra.mxu0 0.0
      %3013 = vmatprep.subr.mxu0 0.0
      %3014 = vmatpush1.msra.mxu0 0.0
      %3015 = vmatprep.subr.mxu0 0.0
      %3016 = vmatpush1.msra.mxu0 0.0
      %3017 = vmatprep.subr.mxu0 0.0
      %3018 = vmatpush1.msra.mxu0 0.0
      %3019 = vmatprep.subr.mxu0 0.0
      %3020 = vmatpush1.msra.mxu0 0.0
      %3021 = vmatprep.subr.mxu0 0.0
      %3022 = vmatpush1.msra.mxu0 0.0
      %3023 = vmatprep.subr.mxu0 0.0
      %3024 = vmatpush1.msra.mxu0 0.0
      %3025 = vmatprep.subr.mxu0 0.0
      %3026 = vmatpush1.msra.mxu0 0.0
      %3027 = vmatprep.subr.mxu0 0.0
      %3028 = vmatpush1.msra.mxu0 0.0
      %3029 = vmatprep.subr.mxu0 0.0
      %3030 = vmatpush1.msra.mxu0 0.0
      %3031 = vmatprep.subr.mxu0 0.0
      %3032 = vmatpush1.msra.mxu0 0.0
      %3033 = vmatprep.subr.mxu0 0.0
      %3034 = vmatpush1.msra.mxu0 0.0
      %3035 = vmatprep.subr.mxu0 0.0
      %3036 = vmatpush1.msra.mxu0 0.0
      %3037 = vmatprep.subr.mxu0 0.0
      %3038 = vmatpush1.msra.mxu0 0.0
      %3039 = vmatprep.subr.mxu0 0.0
      %3040 = vmatpush1.msra.mxu0 0.0
      %3041 = vmatprep.subr.mxu0 0.0
      %3042 = vmatpush1.msra.mxu0 0.0
      %3043 = vmatprep.subr.mxu0 0.0
      %3044 = vmatpush1.msra.mxu0 0.0
      %3045 = vmatprep.subr.mxu0 0.0
      %3046 = vmatpush1.msra.mxu0 0.0
      %3047 = vmatprep.subr.mxu0 0.0
      %3048 = vmatpush1.msra.mxu0 0.0
      %3049 = vmatprep.subr.mxu0 0.0
      %3050 = vmatpush1.msra.mxu0 0.0
      %3051 = vmatprep.subr.mxu0 0.0
      %3052 = vmatpush1.msra.mxu0 0.0
      %3053 = vmatprep.mubr.f32.mxu0 0.0
      %3054 = vmatmul.mubr.f32.gmra.mrb[0].mxu0 %v2985
      %v3055 = vpop.f32.mrb[0].mxu0
      %v3056 = vadd.f32 0.0, %v3055
      %v3057 = vpop.f32.mrb[0].mxu0
      %3058 = vdwg.mxu0
      %3059 = vrot.lane.b32.xlu0 %v779, 104
      %v3060 = vpop.permute.xlu0 %3059
      %v3062 = vsel %vm1483, %v2819, 0
      %v3064 = vsel %vm353, %v3060, 0
      %3066 = vmatprep.subr.mxu0 0.0
      %3067 = vmatpush1.msra.mxu0 %v3064
      %3068 = vmatprep.subr.mxu0 0.0
      %3069 = vmatpush1.msra.mxu0 0.0
      %3070 = vmatprep.subr.mxu0 0.0
      %3071 = vmatpush1.msra.mxu0 0.0
      %3072 = vmatprep.subr.mxu0 0.0
      %3073 = vmatpush1.msra.mxu0 0.0
      %3074 = vmatprep.subr.mxu0 0.0
      %3075 = vmatpush1.msra.mxu0 0.0
      %3076 = vmatprep.subr.mxu0 0.0
      %3077 = vmatpush1.msra.mxu0 0.0
      %3078 = vmatprep.subr.mxu0 0.0
      %3079 = vmatpush1.msra.mxu0 0.0
      %3080 = vmatprep.subr.mxu0 0.0
      %3081 = vmatpush1.msra.mxu0 0.0
      %3082 = vmatprep.subr.mxu0 0.0
      %3083 = vmatpush1.msra.mxu0 0.0
      %3084 = vmatprep.subr.mxu0 0.0
      %3085 = vmatpush1.msra.mxu0 0.0
      %3086 = vmatprep.subr.mxu0 0.0
      %3087 = vmatpush1.msra.mxu0 0.0
      %3088 = vmatprep.subr.mxu0 0.0
      %3089 = vmatpush1.msra.mxu0 0.0
      %3090 = vmatprep.subr.mxu0 0.0
      %3091 = vmatpush1.msra.mxu0 0.0
      %3092 = vmatprep.subr.mxu0 0.0
      %3093 = vmatpush1.msra.mxu0 0.0
      %3094 = vmatprep.subr.mxu0 0.0
      %3095 = vmatpush1.msra.mxu0 0.0
      %3096 = vmatprep.subr.mxu0 0.0
      %3097 = vmatpush1.msra.mxu0 0.0
      %3098 = vmatprep.subr.mxu0 0.0
      %3099 = vmatpush1.msra.mxu0 0.0
      %3100 = vmatprep.subr.mxu0 0.0
      %3101 = vmatpush1.msra.mxu0 0.0
      %3102 = vmatprep.subr.mxu0 0.0
      %3103 = vmatpush1.msra.mxu0 0.0
      %3104 = vmatprep.subr.mxu0 0.0
      %3105 = vmatpush1.msra.mxu0 0.0
      %3106 = vmatprep.subr.mxu0 0.0
      %3107 = vmatpush1.msra.mxu0 0.0
      %3108 = vmatprep.subr.mxu0 0.0
      %3109 = vmatpush1.msra.mxu0 0.0
      %3110 = vmatprep.subr.mxu0 0.0
      %3111 = vmatpush1.msra.mxu0 0.0
      %3112 = vmatprep.subr.mxu0 0.0
      %3113 = vmatpush1.msra.mxu0 0.0
      %3114 = vmatprep.subr.mxu0 0.0
      %3115 = vmatpush1.msra.mxu0 0.0
      %3116 = vmatprep.subr.mxu0 0.0
      %3117 = vmatpush1.msra.mxu0 0.0
      %3118 = vmatprep.subr.mxu0 0.0
      %3119 = vmatpush1.msra.mxu0 0.0
      %3120 = vmatprep.subr.mxu0 0.0
      %3121 = vmatpush1.msra.mxu0 0.0
      %3122 = vmatprep.subr.mxu0 0.0
      %3123 = vmatpush1.msra.mxu0 0.0
      %3124 = vmatprep.subr.mxu0 0.0
      %3125 = vmatpush1.msra.mxu0 0.0
      %3126 = vmatprep.subr.mxu0 0.0
      %3127 = vmatpush1.msra.mxu0 0.0
      %3128 = vmatprep.subr.mxu0 0.0
      %3129 = vmatpush1.msra.mxu0 0.0
      %3130 = vmatprep.mubr.f32.mxu0 0.0
      %3131 = vmatmul.mubr.f32.gmra.mrb[0].mxu0 %v3062
      %v3132 = vpop.f32.mrb[0].mxu0
      %v3133 = vadd.f32 0.0, %v3132
      %v3134 = vpop.f32.mrb[0].mxu0
      %3135 = vdwg.mxu0
      %3136 = vrot.lane.b32.xlu0 %v758, 104
      %v3137 = vpop.permute.xlu0 %3136
      %v3139 = vsel %vm1483, %v2821, 0
      %v3141 = vsel %vm353, %v3137, 0
      %3143 = vmatprep.subr.mxu0 0.0
      %3144 = vmatpush1.msra.mxu0 %v3141
      %3145 = vmatprep.subr.mxu0 0.0
      %3146 = vmatpush1.msra.mxu0 0.0
      %3147 = vmatprep.subr.mxu0 0.0
      %3148 = vmatpush1.msra.mxu0 0.0
      %3149 = vmatprep.subr.mxu0 0.0
      %3150 = vmatpush1.msra.mxu0 0.0
      %3151 = vmatprep.subr.mxu0 0.0
      %3152 = vmatpush1.msra.mxu0 0.0
      %3153 = vmatprep.subr.mxu0 0.0
      %3154 = vmatpush1.msra.mxu0 0.0
      %3155 = vmatprep.subr.mxu0 0.0
      %3156 = vmatpush1.msra.mxu0 0.0
      %3157 = vmatprep.subr.mxu0 0.0
      %3158 = vmatpush1.msra.mxu0 0.0
      %3159 = vmatprep.subr.mxu0 0.0
      %3160 = vmatpush1.msra.mxu0 0.0
      %3161 = vmatprep.subr.mxu0 0.0
      %3162 = vmatpush1.msra.mxu0 0.0
      %3163 = vmatprep.subr.mxu0 0.0
      %3164 = vmatpush1.msra.mxu0 0.0
      %3165 = vmatprep.subr.mxu0 0.0
      %3166 = vmatpush1.msra.mxu0 0.0
      %3167 = vmatprep.subr.mxu0 0.0
      %3168 = vmatpush1.msra.mxu0 0.0
      %3169 = vmatprep.subr.mxu0 0.0
      %3170 = vmatpush1.msra.mxu0 0.0
      %3171 = vmatprep.subr.mxu0 0.0
      %3172 = vmatpush1.msra.mxu0 0.0
      %3173 = vmatprep.subr.mxu0 0.0
      %3174 = vmatpush1.msra.mxu0 0.0
      %3175 = vmatprep.subr.mxu0 0.0
      %3176 = vmatpush1.msra.mxu0 0.0
      %3177 = vmatprep.subr.mxu0 0.0
      %3178 = vmatpush1.msra.mxu0 0.0
      %3179 = vmatprep.subr.mxu0 0.0
      %3180 = vmatpush1.msra.mxu0 0.0
      %3181 = vmatprep.subr.mxu0 0.0
      %3182 = vmatpush1.msra.mxu0 0.0
      %3183 = vmatprep.subr.mxu0 0.0
      %3184 = vmatpush1.msra.mxu0 0.0
      %3185 = vmatprep.subr.mxu0 0.0
      %3186 = vmatpush1.msra.mxu0 0.0
      %3187 = vmatprep.subr.mxu0 0.0
      %3188 = vmatpush1.msra.mxu0 0.0
      %3189 = vmatprep.subr.mxu0 0.0
      %3190 = vmatpush1.msra.mxu0 0.0
      %3191 = vmatprep.subr.mxu0 0.0
      %3192 = vmatpush1.msra.mxu0 0.0
      %3193 = vmatprep.subr.mxu0 0.0
      %3194 = vmatpush1.msra.mxu0 0.0
      %3195 = vmatprep.subr.mxu0 0.0
      %3196 = vmatpush1.msra.mxu0 0.0
      %3197 = vmatprep.subr.mxu0 0.0
      %3198 = vmatpush1.msra.mxu0 0.0
      %3199 = vmatprep.subr.mxu0 0.0
      %3200 = vmatpush1.msra.mxu0 0.0
      %3201 = vmatprep.subr.mxu0 0.0
      %3202 = vmatpush1.msra.mxu0 0.0
      %3203 = vmatprep.subr.mxu0 0.0
      %3204 = vmatpush1.msra.mxu0 0.0
      %3205 = vmatprep.subr.mxu0 0.0
      %3206 = vmatpush1.msra.mxu0 0.0
      %3207 = vmatprep.mubr.f32.mxu0 0.0
      %3208 = vmatmul.mubr.f32.gmra.mrb[0].mxu0 %v3139
      %v3209 = vpop.f32.mrb[0].mxu0
      %v3210 = vadd.f32 0.0, %v3209
      %v3211 = vpop.f32.mrb[0].mxu0
      %3212 = vdwg.mxu0
      %3213 = vrot.lane.b32.xlu0 %v780, 104
      %v3214 = vpop.permute.xlu0 %3213
      %v3216 = vsel %vm1483, %v2823, 0
      %v3218 = vsel %vm353, %v3214, 0
      %3220 = vmatprep.subr.mxu0 0.0
      %3221 = vmatpush1.msra.mxu0 %v3218
      %3222 = vmatprep.subr.mxu0 0.0
      %3223 = vmatpush1.msra.mxu0 0.0
      %3224 = vmatprep.subr.mxu0 0.0
      %3225 = vmatpush1.msra.mxu0 0.0
      %3226 = vmatprep.subr.mxu0 0.0
      %3227 = vmatpush1.msra.mxu0 0.0
      %3228 = vmatprep.subr.mxu0 0.0
      %3229 = vmatpush1.msra.mxu0 0.0
      %3230 = vmatprep.subr.mxu0 0.0
      %3231 = vmatpush1.msra.mxu0 0.0
      %3232 = vmatprep.subr.mxu0 0.0
      %3233 = vmatpush1.msra.mxu0 0.0
      %3234 = vmatprep.subr.mxu0 0.0
      %3235 = vmatpush1.msra.mxu0 0.0
      %3236 = vmatprep.subr.mxu0 0.0
      %3237 = vmatpush1.msra.mxu0 0.0
      %3238 = vmatprep.subr.mxu0 0.0
      %3239 = vmatpush1.msra.mxu0 0.0
      %3240 = vmatprep.subr.mxu0 0.0
      %3241 = vmatpush1.msra.mxu0 0.0
      %3242 = vmatprep.subr.mxu0 0.0
      %3243 = vmatpush1.msra.mxu0 0.0
      %3244 = vmatprep.subr.mxu0 0.0
      %3245 = vmatpush1.msra.mxu0 0.0
      %3246 = vmatprep.subr.mxu0 0.0
      %3247 = vmatpush1.msra.mxu0 0.0
      %3248 = vmatprep.subr.mxu0 0.0
      %3249 = vmatpush1.msra.mxu0 0.0
      %3250 = vmatprep.subr.mxu0 0.0
      %3251 = vmatpush1.msra.mxu0 0.0
      %3252 = vmatprep.subr.mxu0 0.0
      %3253 = vmatpush1.msra.mxu0 0.0
      %3254 = vmatprep.subr.mxu0 0.0
      %3255 = vmatpush1.msra.mxu0 0.0
      %3256 = vmatprep.subr.mxu0 0.0
      %3257 = vmatpush1.msra.mxu0 0.0
      %3258 = vmatprep.subr.mxu0 0.0
      %3259 = vmatpush1.msra.mxu0 0.0
      %3260 = vmatprep.subr.mxu0 0.0
      %3261 = vmatpush1.msra.mxu0 0.0
      %3262 = vmatprep.subr.mxu0 0.0
      %3263 = vmatpush1.msra.mxu0 0.0
      %3264 = vmatprep.subr.mxu0 0.0
      %3265 = vmatpush1.msra.mxu0 0.0
      %3266 = vmatprep.subr.mxu0 0.0
      %3267 = vmatpush1.msra.mxu0 0.0
      %3268 = vmatprep.subr.mxu0 0.0
      %3269 = vmatpush1.msra.mxu0 0.0
      %3270 = vmatprep.subr.mxu0 0.0
      %3271 = vmatpush1.msra.mxu0 0.0
      %3272 = vmatprep.subr.mxu0 0.0
      %3273 = vmatpush1.msra.mxu0 0.0
      %3274 = vmatprep.subr.mxu0 0.0
      %3275 = vmatpush1.msra.mxu0 0.0
      %3276 = vmatprep.subr.mxu0 0.0
      %3277 = vmatpush1.msra.mxu0 0.0
      %3278 = vmatprep.subr.mxu0 0.0
      %3279 = vmatpush1.msra.mxu0 0.0
      %3280 = vmatprep.subr.mxu0 0.0
      %3281 = vmatpush1.msra.mxu0 0.0
      %3282 = vmatprep.subr.mxu0 0.0
      %3283 = vmatpush1.msra.mxu0 0.0
      %3284 = vmatprep.mubr.f32.mxu0 0.0
      %3285 = vmatmul.mubr.f32.gmra.mrb[0].mxu0 %v3216
      %v3286 = vpop.f32.mrb[0].mxu0
      %v3287 = vadd.f32 0.0, %v3286
      %v3288 = vpop.f32.mrb[0].mxu0
      %3289 = vdwg.mxu0
      %3290 = vrot.lane.b32.xlu0 %v763, 104
      %v3291 = vpop.permute.xlu0 %3290
      %v3293 = vsel %vm1483, %v2825, 0
      %v3295 = vsel %vm353, %v3291, 0
      %3297 = vmatprep.subr.mxu0 0.0
      %3298 = vmatpush1.msra.mxu0 %v3295
      %3299 = vmatprep.subr.mxu0 0.0
      %3300 = vmatpush1.msra.mxu0 0.0
      %3301 = vmatprep.subr.mxu0 0.0
      %3302 = vmatpush1.msra.mxu0 0.0
      %3303 = vmatprep.subr.mxu0 0.0
      %3304 = vmatpush1.msra.mxu0 0.0
      %3305 = vmatprep.subr.mxu0 0.0
      %3306 = vmatpush1.msra.mxu0 0.0
      %3307 = vmatprep.subr.mxu0 0.0
      %3308 = vmatpush1.msra.mxu0 0.0
      %3309 = vmatprep.subr.mxu0 0.0
      %3310 = vmatpush1.msra.mxu0 0.0
      %3311 = vmatprep.subr.mxu0 0.0
      %3312 = vmatpush1.msra.mxu0 0.0
      %3313 = vmatprep.subr.mxu0 0.0
      %3314 = vmatpush1.msra.mxu0 0.0
      %3315 = vmatprep.subr.mxu0 0.0
      %3316 = vmatpush1.msra.mxu0 0.0
      %3317 = vmatprep.subr.mxu0 0.0
      %3318 = vmatpush1.msra.mxu0 0.0
      %3319 = vmatprep.subr.mxu0 0.0
      %3320 = vmatpush1.msra.mxu0 0.0
      %3321 = vmatprep.subr.mxu0 0.0
      %3322 = vmatpush1.msra.mxu0 0.0
      %3323 = vmatprep.subr.mxu0 0.0
      %3324 = vmatpush1.msra.mxu0 0.0
      %3325 = vmatprep.subr.mxu0 0.0
      %3326 = vmatpush1.msra.mxu0 0.0
      %3327 = vmatprep.subr.mxu0 0.0
      %3328 = vmatpush1.msra.mxu0 0.0
      %3329 = vmatprep.subr.mxu0 0.0
      %3330 = vmatpush1.msra.mxu0 0.0
      %3331 = vmatprep.subr.mxu0 0.0
      %3332 = vmatpush1.msra.mxu0 0.0
      %3333 = vmatprep.subr.mxu0 0.0
      %3334 = vmatpush1.msra.mxu0 0.0
      %3335 = vmatprep.subr.mxu0 0.0
      %3336 = vmatpush1.msra.mxu0 0.0
      %3337 = vmatprep.subr.mxu0 0.0
      %3338 = vmatpush1.msra.mxu0 0.0
      %3339 = vmatprep.subr.mxu0 0.0
      %3340 = vmatpush1.msra.mxu0 0.0
      %3341 = vmatprep.subr.mxu0 0.0
      %3342 = vmatpush1.msra.mxu0 0.0
      %3343 = vmatprep.subr.mxu0 0.0
      %3344 = vmatpush1.msra.mxu0 0.0
      %3345 = vmatprep.subr.mxu0 0.0
      %3346 = vmatpush1.msra.mxu0 0.0
      %3347 = vmatprep.subr.mxu0 0.0
      %3348 = vmatpush1.msra.mxu0 0.0
      %3349 = vmatprep.subr.mxu0 0.0
      %3350 = vmatpush1.msra.mxu0 0.0
      %3351 = vmatprep.subr.mxu0 0.0
      %3352 = vmatpush1.msra.mxu0 0.0
      %3353 = vmatprep.subr.mxu0 0.0
      %3354 = vmatpush1.msra.mxu0 0.0
      %3355 = vmatprep.subr.mxu0 0.0
      %3356 = vmatpush1.msra.mxu0 0.0
      %3357 = vmatprep.subr.mxu0 0.0
      %3358 = vmatpush1.msra.mxu0 0.0
      %3359 = vmatprep.subr.mxu0 0.0
      %3360 = vmatpush1.msra.mxu0 0.0
      %3361 = vmatprep.mubr.f32.mxu0 0.0
      %3362 = vmatmul.mubr.f32.gmra.mrb[0].mxu0 %v3293
      %v3363 = vpop.f32.mrb[0].mxu0
      %v3364 = vadd.f32 0.0, %v3363
      %v3365 = vpop.f32.mrb[0].mxu0
      %3366 = vdwg.mxu0
      %3367 = vrot.lane.b32.xlu0 %v781, 104
      %v3368 = vpop.permute.xlu0 %3367
      %v3370 = vsel %vm1483, %v2827, 0
      %v3372 = vsel %vm353, %v3368, 0
      %3374 = vmatprep.subr.mxu0 0.0
      %3375 = vmatpush1.msra.mxu0 %v3372
      %3376 = vmatprep.subr.mxu0 0.0
      %3377 = vmatpush1.msra.mxu0 0.0
      %3378 = vmatprep.subr.mxu0 0.0
      %3379 = vmatpush1.msra.mxu0 0.0
      %3380 = vmatprep.subr.mxu0 0.0
      %3381 = vmatpush1.msra.mxu0 0.0
      %3382 = vmatprep.subr.mxu0 0.0
      %3383 = vmatpush1.msra.mxu0 0.0
      %3384 = vmatprep.subr.mxu0 0.0
      %3385 = vmatpush1.msra.mxu0 0.0
      %3386 = vmatprep.subr.mxu0 0.0
      %3387 = vmatpush1.msra.mxu0 0.0
      %3388 = vmatprep.subr.mxu0 0.0
      %3389 = vmatpush1.msra.mxu0 0.0
      %3390 = vmatprep.subr.mxu0 0.0
      %3391 = vmatpush1.msra.mxu0 0.0
      %3392 = vmatprep.subr.mxu0 0.0
      %3393 = vmatpush1.msra.mxu0 0.0
      %3394 = vmatprep.subr.mxu0 0.0
      %3395 = vmatpush1.msra.mxu0 0.0
      %3396 = vmatprep.subr.mxu0 0.0
      %3397 = vmatpush1.msra.mxu0 0.0
      %3398 = vmatprep.subr.mxu0 0.0
      %3399 = vmatpush1.msra.mxu0 0.0
      %3400 = vmatprep.subr.mxu0 0.0
      %3401 = vmatpush1.msra.mxu0 0.0
      %3402 = vmatprep.subr.mxu0 0.0
      %3403 = vmatpush1.msra.mxu0 0.0
      %3404 = vmatprep.subr.mxu0 0.0
      %3405 = vmatpush1.msra.mxu0 0.0
      %3406 = vmatprep.subr.mxu0 0.0
      %3407 = vmatpush1.msra.mxu0 0.0
      %3408 = vmatprep.subr.mxu0 0.0
      %3409 = vmatpush1.msra.mxu0 0.0
      %3410 = vmatprep.subr.mxu0 0.0
      %3411 = vmatpush1.msra.mxu0 0.0
      %3412 = vmatprep.subr.mxu0 0.0
      %3413 = vmatpush1.msra.mxu0 0.0
      %3414 = vmatprep.subr.mxu0 0.0
      %3415 = vmatpush1.msra.mxu0 0.0
      %3416 = vmatprep.subr.mxu0 0.0
      %3417 = vmatpush1.msra.mxu0 0.0
      %3418 = vmatprep.subr.mxu0 0.0
      %3419 = vmatpush1.msra.mxu0 0.0
      %3420 = vmatprep.subr.mxu0 0.0
      %3421 = vmatpush1.msra.mxu0 0.0
      %3422 = vmatprep.subr.mxu0 0.0
      %3423 = vmatpush1.msra.mxu0 0.0
      %3424 = vmatprep.subr.mxu0 0.0
      %3425 = vmatpush1.msra.mxu0 0.0
      %3426 = vmatprep.subr.mxu0 0.0
      %3427 = vmatpush1.msra.mxu0 0.0
      %3428 = vmatprep.subr.mxu0 0.0
      %3429 = vmatpush1.msra.mxu0 0.0
      %3430 = vmatprep.subr.mxu0 0.0
      %3431 = vmatpush1.msra.mxu0 0.0
      %3432 = vmatprep.subr.mxu0 0.0
      %3433 = vmatpush1.msra.mxu0 0.0
      %3434 = vmatprep.subr.mxu0 0.0
      %3435 = vmatpush1.msra.mxu0 0.0
      %3436 = vmatprep.subr.mxu0 0.0
      %3437 = vmatpush1.msra.mxu0 0.0
      %3438 = vmatprep.mubr.f32.mxu0 0.0
      %3439 = vmatmul.mubr.f32.gmra.mrb[0].mxu0 %v3370
      %v3440 = vpop.f32.mrb[0].mxu0
      %v3441 = vadd.f32 0.0, %v3440
      %v3442 = vpop.f32.mrb[0].mxu0
      %3443 = vdwg.mxu0
      %3452 = vrot.lane.b32.xlu0 %v2902, 8
      %v3453 = vpop.permute.xlu0 %3452
      %3454 = vrot.lane.b32.xlu0 %v2979, 8
      %v3455 = vpop.permute.xlu0 %3454
      %3456 = vrot.lane.b32.xlu0 %v3056, 8
      %v3457 = vpop.permute.xlu0 %3456
      %3458 = vrot.lane.b32.xlu0 %v3133, 8
      %v3459 = vpop.permute.xlu0 %3458
      %3460 = vrot.lane.b32.xlu0 %v3210, 8
      %v3461 = vpop.permute.xlu0 %3460
      %3462 = vrot.lane.b32.xlu0 %v3287, 8
      %v3463 = vpop.permute.xlu0 %3462
      %3464 = vrot.lane.b32.xlu0 %v3364, 8
      %v3465 = vpop.permute.xlu0 %3464
      %3466 = vrot.lane.b32.xlu0 %v3441, 8
      %v3467 = vpop.permute.xlu0 %3466
      %v3476 = vsel %vm782, %v1556, %v3453
      %v3477 = vsel %vm782, %v1633, %v3455
      %v3478 = vsel %vm782, %v1710, %v3457
      %v3479 = vsel %vm782, %v1787, %v3459
      %v3480 = vsel %vm782, %v1864, %v3461
      %v3481 = vsel %vm782, %v1941, %v3463
      %v3482 = vsel %vm782, %v2018, %v3465
      %v3483 = vsel %vm782, %v2095, %v3467
      %v3484 = vld [vmem:[%s5] sm:$0xff]
      %v3485 = vld [vmem:[%s5 + $0x8] sm:$0xff]
      %v3486 = vld [vmem:[%s6] sm:$0x1]
      %v3488 = vlaneseq
      %v3489 = vshrl.u32 %v3488, 7
      %v3490 = vsub.s32 0, %v3489
      %v3491 = vrot.slane %v3486, %v3490
      %v3501 = vcombine.low %v3476, %v3477
      %v3502 = vcombine.low %v3478, %v3479
      %v3503 = vcombine.low %v3480, %v3481
      %v3504 = vcombine.low %v3482, %v3483
      %v3505 = vsel %vm585, %v3501, 0
      %v3507 = vsel %vm585, %v3502, 0
      %v3509 = vsel %vm585, %v3503, 0
      %v3511 = vsel %vm585, %v3504, 0
      %3513 = vmatprep.subr.mxu0 0.0
      %3514 = vmatpush1.msra.mxu0 %v3484
      %3515 = vmatprep.subr.mxu0 0.0
      %3516 = vmatpush1.msra.mxu0 %v3485
      %3517 = vmatprep.subr.mxu0 0.0
      %3518 = vmatpush1.msra.mxu0 0.0
      %3519 = vmatprep.subr.mxu0 0.0
      %3520 = vmatpush1.msra.mxu0 0.0
      %3521 = vmatprep.subr.mxu0 0.0
      %3522 = vmatpush1.msra.mxu0 0.0
      %3523 = vmatprep.subr.mxu0 0.0
      %3524 = vmatpush1.msra.mxu0 0.0
      %3525 = vmatprep.subr.mxu0 0.0
      %3526 = vmatpush1.msra.mxu0 0.0
      %3527 = vmatprep.subr.mxu0 0.0
      %3528 = vmatpush1.msra.mxu0 0.0
      %3529 = vmatprep.subr.mxu0 0.0
      %3530 = vmatpush1.msra.mxu0 0.0
      %3531 = vmatprep.subr.mxu0 0.0
      %3532 = vmatpush1.msra.mxu0 0.0
      %3533 = vmatprep.subr.mxu0 0.0
      %3534 = vmatpush1.msra.mxu0 0.0
      %3535 = vmatprep.subr.mxu0 0.0
      %3536 = vmatpush1.msra.mxu0 0.0
      %3537 = vmatprep.subr.mxu0 0.0
      %3538 = vmatpush1.msra.mxu0 0.0
      %3539 = vmatprep.subr.mxu0 0.0
      %3540 = vmatpush1.msra.mxu0 0.0
      %3541 = vmatprep.subr.mxu0 0.0
      %3542 = vmatpush1.msra.mxu0 0.0
      %3543 = vmatprep.subr.mxu0 0.0
      %3544 = vmatpush1.msra.mxu0 0.0
      %3545 = vmatprep.subr.mxu0 0.0
      %3546 = vmatpush1.msra.mxu0 0.0
      %3547 = vmatprep.subr.mxu0 0.0
      %3548 = vmatpush1.msra.mxu0 0.0
      %3549 = vmatprep.subr.mxu0 0.0
      %3550 = vmatpush1.msra.mxu0 0.0
      %3551 = vmatprep.subr.mxu0 0.0
      %3552 = vmatpush1.msra.mxu0 0.0
      %3553 = vmatprep.subr.mxu0 0.0
      %3554 = vmatpush1.msra.mxu0 0.0
      %3555 = vmatprep.subr.mxu0 0.0
      %3556 = vmatpush1.msra.mxu0 0.0
      %3557 = vmatprep.subr.mxu0 0.0
      %3558 = vmatpush1.msra.mxu0 0.0
      %3559 = vmatprep.subr.mxu0 0.0
      %3560 = vmatpush1.msra.mxu0 0.0
      %3561 = vmatprep.subr.mxu0 0.0
      %3562 = vmatpush1.msra.mxu0 0.0
      %3563 = vmatprep.subr.mxu0 0.0
      %3564 = vmatpush1.msra.mxu0 0.0
      %3565 = vmatprep.subr.mxu0 0.0
      %3566 = vmatpush1.msra.mxu0 0.0
      %3567 = vmatprep.subr.mxu0 0.0
      %3568 = vmatpush1.msra.mxu0 0.0
      %3569 = vmatprep.subr.mxu0 0.0
      %3570 = vmatpush1.msra.mxu0 0.0
      %3571 = vmatprep.subr.mxu0 0.0
      %3572 = vmatpush1.msra.mxu0 0.0
      %3573 = vmatprep.subr.mxu0 0.0
      %3574 = vmatpush1.msra.mxu0 0.0
      %3575 = vmatprep.subr.mxu0 0.0
      %3576 = vmatpush1.msra.mxu0 0.0
      %3577 = vmatprep.mubr.f32.mxu0 0.0
      %3578 = vmatmul.mubr.f32.gmra.mrb[0].mxu0 %v3505
      %v3579 = vpop.f32.mrb[0].mxu0
      %v3580 = vadd.f32 %v3491, %v3579
      %v3581 = vpop.f32.mrb[0].mxu0
      %3582 = vmatprep.mubr.f32.mxu0 0.0
      %3583 = vmatmul.mubr.f32.gmra.mrb[0].mxu0 %v3507
      %v3584 = vpop.f32.mrb[0].mxu0
      %v3585 = vadd.f32 %v3491, %v3584
      %v3586 = vpop.f32.mrb[0].mxu0
      %3587 = vmatprep.mubr.f32.mxu0 0.0
      %3588 = vmatmul.mubr.f32.gmra.mrb[0].mxu0 %v3509
      %v3589 = vpop.f32.mrb[0].mxu0
      %v3590 = vadd.f32 %v3491, %v3589
      %v3591 = vpop.f32.mrb[0].mxu0
      %3592 = vmatprep.mubr.f32.mxu0 0.0
      %3593 = vmatmul.mubr.f32.gmra.mrb[0].mxu0 %v3511
      %v3594 = vpop.f32.mrb[0].mxu0
      %v3595 = vadd.f32 %v3491, %v3594
      %v3596 = vpop.f32.mrb[0].mxu0
      %3597 = vdwg.mxu0
      %v3602 = vcombine.high %v3580, %v3580
      %v3603 = vcombine.high %v3585, %v3585
      %v3604 = vcombine.high %v3590, %v3590
      %v3605 = vcombine.high %v3595, %v3595
      %v3610 = vadd.f32 %v309, %v3580
      %v3611 = vadd.f32 %v310, %v3602
      %v3612 = vadd.f32 %v311, %v3585
      %v3613 = vadd.f32 %v312, %v3603
      %v3614 = vadd.f32 %v313, %v3590
      %v3615 = vadd.f32 %v314, %v3604
      %v3616 = vadd.f32 %v315, %v3595
      %v3617 = vadd.f32 %v316, %v3605
      %3618 = vst.msk [vmem:[%s307] sm:$0xf] %vm319, %v3610
      %3619 = vst.msk [vmem:[%s307 + $0x4] sm:$0xf] %vm319, %v3611
      %3620 = vst.msk [vmem:[%s307 + $0x8] sm:$0xf] %vm319, %v3612
      %3621 = vst.msk [vmem:[%s307 + $0xc] sm:$0xf] %vm319, %v3613
      %3622 = vst.msk [vmem:[%s307 + $0x10] sm:$0xf] %vm319, %v3614
      %3623 = vst.msk [vmem:[%s307 + $0x14] sm:$0xf] %vm319, %v3615
      %3624 = vst.msk [vmem:[%s307 + $0x18] sm:$0xf] %vm319, %v3616
      %3625 = vst.msk [vmem:[%s307 + $0x1c] sm:$0xf] %vm319, %v3617
      %s3626 = smul.u32 8, %s19
      %p3627 = scmp.lt.s32.totalorder %s3626, 31
      %s3628 = scalar_select %p3627, %s3626, 31
      %s3629 = smul.addr %s3628, 4
      %s3630 = scalar_lea.vmem %s8, %s3629
      // Predicated region
      $region53: #{tpu_custom_call.1} parent=51 // pred_check
        %p3631 = pneg %p210
      $region54: #{tpu_custom_call.1} parent=51 // pred_check_branch
        %3633 = sbr.rel (%p3631) target = $region56
      $region55: #{tpu_custom_call.1} parent=51 // pred_region
        %s3634 = smul.u32 8, %s19
      $region56: #{tpu_custom_call.1} parent=51 // pred_fallthru
        _
    $region52: #{tpu_custom_call.1} parent=5 // pred_fallthru
      _
    %p3635 = scmp.le.s32.totalorder 2, %s14
    // Predicated region
    $region57: #{tpu_custom_call.1} parent=5 // pred_check
      %p3636 = pneg %p3635
    $region58: #{tpu_custom_call.1} parent=5 // pred_check_branch
      %3638 = sbr.rel (%p3636) target = $region60
    $region59: #{tpu_custom_call.1} parent=5 // pred_region
      %s3639 = ssub.s32 %s14, 2
      // Predicated region
      $region61: #{tpu_custom_call.1} parent=59 // pred_check
        %p3640 = pneg %p216
      $region62: #{tpu_custom_call.1} parent=59 // pred_check_branch
        %3642 = sbr.rel (%p3640) target = $region64
      $region63: #{tpu_custom_call.1} parent=59 // pred_region
        %s3643 = smul.u32 8, %s20
        %p3644 = scmp.lt.s32.totalorder %s3643, 31
        %s3645 = scalar_select %p3644, %s3643, 31
        %s3646 = smul.addr %s3645, 4
        %s3647 = scalar_lea.vmem %s8, %s3646
      $region64: #{tpu_custom_call.1} parent=59 // pred_fallthru
        _
    $region60: #{tpu_custom_call.1} parent=5 // pred_fallthru
      _
  $region6: #{tpu_custom_call.1} parent=0 // loop_footer
    %s18 = sadd.s32 1, %s14
  $region7: #{tpu_custom_call.1} parent=0 // loop_footer_branch
    %13 = sbr.rel target = $region3
  $region8: #{tpu_custom_call.1} parent=0 // loop_exit
    _

</llo_original>
